<compile_context>
chip_gen: v6e
topology: v6e:2x2x1
jax: 0.10.0
libtpu: 0.0.40
codegen_flags: <defaults>
</compile_context>

<pallas_src>
import jax
import jax.numpy as jnp
from jax import lax
from jax.experimental import pallas as pl
from jax.experimental.pallas import tpu as pltpu


def gru_agg_kernel(x_ref, wih_ref, whh_ref, bgi_ref, bhn_ref, wout_ref, bout_ref,
                   o_ref, gi_ref):
    """GRU over T for one tile of sequences + output Linear; sequences (N) on lanes.

    x_ref:   (T, F, tile_n)   input sequences for this tile (time, feature, row)
    wih_ref: (3H, F)          torch weight_ih_l0 (gate order r|z|n)
    whh_ref: (3H, H)          torch weight_hh_l0
    bgi_ref: (3H, 1)          b_ih + b_hh for r/z rows, b_in for the n rows
    bhn_ref: (H, 1)           b_hn (stays inside r * (W_hn h + b_hn))
    wout_ref:(O, H)           out_fc.weight
    bout_ref:(O, 1)           out_fc.bias
    o_ref:   (O, tile_n)      projected final hidden state for this tile
    gi_ref:  (T, 3H, tile_n)  VMEM scratch holding the hoisted input projection
    """
    T, F, tile_n = x_ref.shape
    Hd = whh_ref.shape[1]
    O = o_ref.shape[0]

    wih = wih_ref[...]                       # (3H, F)
    whh = whh_ref[...]                       # (3H, H)
    bgi = bgi_ref[...]                       # (3H, 1): broadcast implicitly per add
    bhn_b = jnp.broadcast_to(bhn_ref[...], (Hd, tile_n))   # hoisted, reused each step

    # Hoisted input projection staged to VMEM: T independent MXU dots whose results
    # do NOT stay live in vregs across the serial recurrence below.
    for t in range(T):
        gi_ref[t] = (jnp.dot(wih, x_ref[t], preferred_element_type=jnp.float32)
                     + bgi)                                   # (3H, tile_n)

    h = jnp.zeros((Hd, tile_n), jnp.float32)

    # Serial recurrence (fully unrolled, T is small & static): one (3H,H)x(H,tile_n)
    # dot per dependent step; gate slices along the sublane axis at 0 / Hd / 2Hd.
    for t in range(T):
        gi = gi_ref[t]                                                     # (3H, tile_n)
        gh = jnp.dot(whh, h.astype(whh.dtype),
                     preferred_element_type=jnp.float32)                   # (3H, tile_n)
        rz = jax.nn.sigmoid(gi[:2 * Hd] + gh[:2 * Hd])                     # fused EUP launch
        r = rz[:Hd]
        z = rz[Hd:]
        n = jnp.tanh(gi[2 * Hd:] + r * (gh[2 * Hd:] + bhn_b))              # b_hn on gh side
        h = (1.0 - z) * n + z * h

    proj = (jnp.dot(wout_ref[...], h.astype(wout_ref.dtype),
                    preferred_element_type=jnp.float32)
            + bout_ref[...])
    o_ref[...] = proj.astype(o_ref.dtype)


def spatial_temporal_feature_aggregator(x, params, spatial_size, *, tile_n=512,
                                        use_bf16_matmul=False):
    """x: [S, T, B, F] float32 -> [B, output_dim, H, W] (matches the PyTorch forward).

    tile_n: lane-tile width (sequences per grid step).  Use multiples of 256 on
    v6e/v7x (256-lane MXU); sweep 256-1024 for production N and keep n_tiles even
    on v7x so the 'parallel' grid axis splits across its 2 TensorCores.
    """
    S, T, B, F = x.shape
    H, W = spatial_size
    assert S == H * W

    N = S * B                                   # GRU rows, ordered n = s*B + b
    Hd = params["whh"].shape[1]
    O = params["wout"].shape[0]

    # Clamp tile size for tiny problems; keep lane alignment.
    tile_n = min(tile_n, max(128, pl.cdiv(N, 128) * 128))
    assert tile_n % 128 == 0, "tile_n must be lane-aligned (multiple of 128)"

    # Single relayout pass: [S,T,B,F] -> (T, F, S, B) -> (T, F, N); row n = s*B + b
    # matches torch permute(0,2,1,3).view(B*S,T,F) ordering; N lands on the lane axis.
    # Kept deliberately (see header note); producers should emit (T,F,N) directly.
    x_k = jnp.transpose(x, (1, 3, 0, 2)).reshape(T, F, N)

    n_tiles = pl.cdiv(N, tile_n)
    n_pad = n_tiles * tile_n
    if n_pad != N:
        # Padded lanes run the GRU on zeros (bias-driven junk) and are sliced off below.
        x_k = jnp.pad(x_k, ((0, 0), (0, 0), (0, n_pad - N)))

    # Pre-combined biases: r/z rows take b_ih + b_hh (both sit outside the nonlinearity),
    # the n rows keep b_in folded into gi and b_hn separate on the gh side.
    bih, bhh = params["bih"], params["bhh"]
    bgi = jnp.concatenate([bih[:2 * Hd] + bhh[:2 * Hd], bih[2 * Hd:]], axis=0)  # (3H, 1)
    bhn = bhh[2 * Hd:]                                                          # (H, 1)

    mm_dtype = jnp.bfloat16 if use_bf16_matmul else jnp.float32
    x_k = x_k.astype(mm_dtype)
    wih = params["wih"].astype(mm_dtype)
    whh = params["whh"].astype(mm_dtype)
    wout = params["wout"].astype(mm_dtype)

    proj_on = pl.pallas_call(
        gru_agg_kernel,
        out_shape=jax.ShapeDtypeStruct((O, n_pad), jnp.float32),
        grid_spec=pltpu.PrefetchScalarGridSpec(
            num_scalar_prefetch=0,
            grid=(n_tiles,),
            in_specs=[
                pl.BlockSpec((T, F, tile_n), lambda i: (0, 0, i)),   # sequences tile
                pl.BlockSpec((3 * Hd, F), lambda i: (0, 0)),         # W_ih
                pl.BlockSpec((3 * Hd, Hd), lambda i: (0, 0)),        # W_hh
                pl.BlockSpec((3 * Hd, 1), lambda i: (0, 0)),         # combined gi bias
                pl.BlockSpec((Hd, 1), lambda i: (0, 0)),             # b_hn
                pl.BlockSpec((O, Hd), lambda i: (0, 0)),             # W_out
                pl.BlockSpec((O, 1), lambda i: (0, 0)),              # b_out
            ],
            out_specs=pl.BlockSpec((O, tile_n), lambda i: (0, i)),
            scratch_shapes=[pltpu.VMEM((T, 3 * Hd, tile_n), jnp.float32)],
        ),
        compiler_params=pltpu.CompilerParams(
            dimension_semantics=("parallel",)),
    )(x_k, wih, whh, bgi, bhn, wout, params["bout"])

    proj_on = proj_on[:, :N]                    # (O, N), column n = GRU row n = s*B + b

    # Replicates torch: proj.view(B, S, -1).view(B, H, W, -1).permute(0, 3, 1, 2)
    # i.e. out[b, o, h, w] = proj_row(b*S + h*W + w)[o]
    out = proj_on.reshape(O, B, H, W)
    out = jnp.transpose(out, (1, 0, 2, 3))      # (B, O, H, W)
    return out


def reference_forward(x, params, spatial_size):
    """Pure-JAX reference replicating nn.GRU + nn.Linear semantics + torch view glue."""
    S, T, B, F = x.shape
    H, W = spatial_size
    Hd = params["whh"].shape[1]

    x_seq = jnp.transpose(x, (0, 2, 1, 3)).reshape(S * B, T, F)   # row n = s*B + b
    wih_t = params["wih"].T                   # (F, 3H)
    whh_t = params["whh"].T                   # (H, 3H)
    bih = params["bih"].reshape(1, -1)
    bhh = params["bhh"].reshape(1, -1)

    def step(h, x_t):
        gi = x_t @ wih_t + bih
        gh = h @ whh_t + bhh
        i_r, i_z, i_n = gi[:, :Hd], gi[:, Hd:2 * Hd], gi[:, 2 * Hd:]
        h_r, h_z, h_n = gh[:, :Hd], gh[:, Hd:2 * Hd], gh[:, 2 * Hd:]
        r = jax.nn.sigmoid(i_r + h_r)
        z = jax.nn.sigmoid(i_z + h_z)
        n = jnp.tanh(i_n + r * h_n)
        return (1.0 - z) * n + z * h, None

    h0 = jnp.zeros((S * B, Hd), jnp.float32)
    h_final, _ = lax.scan(step, h0, jnp.transpose(x_seq, (1, 0, 2)))
    proj = h_final @ params["wout"].T + params["bout"].reshape(1, -1)
    O = proj.shape[-1]
    out = proj.reshape(B, S, O).reshape(B, H, W, O)
    return jnp.transpose(out, (0, 3, 1, 2))


def init_params(key, input_dim, hidden_dim, output_dim):
    """Deterministic synthetic parameters in torch layouts (nn.GRU / nn.Linear shapes)."""
    k = jax.random.split(key, 6)
    s = 1.0 / jnp.sqrt(hidden_dim)
    wih = jax.random.uniform(k[0], (3 * hidden_dim, input_dim), jnp.float32, -s, s)
    whh = jax.random.uniform(k[1], (3 * hidden_dim, hidden_dim), jnp.float32, -s, s)
    bih = jax.random.uniform(k[2], (3 * hidden_dim, 1), jnp.float32, -s, s)
    bhh = jax.random.uniform(k[3], (3 * hidden_dim, 1), jnp.float32, -s, s)
    wout = jax.random.uniform(k[4], (output_dim, hidden_dim), jnp.float32, -s, s)
    bout = jax.random.uniform(k[5], (output_dim, 1), jnp.float32, -s, s)
    return {"wih": wih, "whh": whh, "bih": bih, "bhh": bhh, "wout": wout, "bout": bout}


if __name__ == "__main__":
    # Small, module-consistent shapes: S = H*W, input [S, T, B, F]
    input_dim = 16
    hidden_dim = 32
    output_dim = 8
    spatial_size = (16, 32)     # H, W  -> S = 512
    T = 4
    B = 2
    S = spatial_size[0] * spatial_size[1]   # N = S*B = 1024 -> 2 lane-dense tiles of 512

    key = jax.random.PRNGKey(0)
    kx, kp = jax.random.split(key)
    x = jax.random.normal(kx, (S, T, B, input_dim), jnp.float32)
    params = init_params(kp, input_dim, hidden_dim, output_dim)

    out = spatial_temporal_feature_aggregator(x, params, spatial_size, tile_n=512)
    out = jax.block_until_ready(out)

    ref = jax.block_until_ready(reference_forward(x, params, spatial_size))

    assert out.shape == (B, output_dim, spatial_size[0], spatial_size[1]), out.shape
    err = float(jnp.max(jnp.abs(out - ref)))
    assert jnp.allclose(out, ref, atol=2e-5, rtol=2e-5), err

    print("KERNEL_OK")
</pallas_src>

<mosaic_0001>
module attributes {stable_mosaic.version = 11 : i64} {
  func.func @gru_agg_kernel(%arg0: i32, %arg1: memref<4x16x512xf32, #tpu.memory_space<vmem>>, %arg2: memref<96x16xf32, #tpu.memory_space<vmem>>, %arg3: memref<96x32xf32, #tpu.memory_space<vmem>>, %arg4: memref<96x1xf32, #tpu.memory_space<vmem>>, %arg5: memref<32x1xf32, #tpu.memory_space<vmem>>, %arg6: memref<8x32xf32, #tpu.memory_space<vmem>>, %arg7: memref<8x1xf32, #tpu.memory_space<vmem>>, %arg8: memref<8x512xf32, #tpu.memory_space<vmem>>, %arg9: memref<4x96x512xf32, #tpu.memory_space<vmem>>) attributes {dimension_semantics = [#tpu.dimension_semantics<parallel>], iteration_bounds = array<i64: 2>, scalar_prefetch = 0 : i64, scratch_operands = 1 : i64, tpu.core_type = #tpu.core_type<tc>, window_params = [{transform_indices = @transform_0, window_bounds = array<i64: 4, 16, 512>}, {pipeline_mode = #tpu.pipeline_mode<synchronous>, transform_indices = @transform_1, window_bounds = array<i64: 96, 16>}, {pipeline_mode = #tpu.pipeline_mode<synchronous>, transform_indices = @transform_2, window_bounds = array<i64: 96, 32>}, {pipeline_mode = #tpu.pipeline_mode<synchronous>, transform_indices = @transform_3, window_bounds = array<i64: 96, 1>}, {pipeline_mode = #tpu.pipeline_mode<synchronous>, transform_indices = @transform_4, window_bounds = array<i64: 32, 1>}, {pipeline_mode = #tpu.pipeline_mode<synchronous>, transform_indices = @transform_5, window_bounds = array<i64: 8, 32>}, {pipeline_mode = #tpu.pipeline_mode<synchronous>, transform_indices = @transform_6, window_bounds = array<i64: 8, 1>}, {transform_indices = @transform_7, window_bounds = array<i64: 8, 512>}]} {
    %c0 = arith.constant 0 : index
    %c0_0 = arith.constant 0 : index
    %0 = vector.load %arg2[%c0, %c0_0] : memref<96x16xf32, #tpu.memory_space<vmem>>, vector<96x16xf32>
    %c0_1 = arith.constant 0 : index
    %c0_2 = arith.constant 0 : index
    %1 = vector.load %arg3[%c0_1, %c0_2] : memref<96x32xf32, #tpu.memory_space<vmem>>, vector<96x32xf32>
    %c0_3 = arith.constant 0 : index
    %c0_4 = arith.constant 0 : index
    %2 = vector.load %arg4[%c0_3, %c0_4] : memref<96x1xf32, #tpu.memory_space<vmem>>, vector<96x1xf32>
    %c0_5 = arith.constant 0 : index
    %c0_6 = arith.constant 0 : index
    %3 = vector.load %arg5[%c0_5, %c0_6] : memref<32x1xf32, #tpu.memory_space<vmem>>, vector<32x1xf32>
    %4 = vector.shape_cast %3 : vector<32x1xf32> to vector<32x1xf32>
    %5 = vector.broadcast %4 : vector<32x1xf32> to vector<32x512xf32>
    %c0_7 = arith.constant 0 : index
    %c0_8 = arith.constant 0 : index
    %c0_9 = arith.constant 0 : index
    %6 = vector.load %arg1[%c0_7, %c0_8, %c0_9] : memref<4x16x512xf32, #tpu.memory_space<vmem>>, vector<1x16x512xf32>
    %7 = vector.shape_cast %6 : vector<1x16x512xf32> to vector<16x512xf32>
    %cst = arith.constant dense<0.000000e+00> : vector<96x512xf32>
    %8 = tpu.matmul %0, %7, %cst {dimension_numbers = #tpu.dot_dimension_numbers<[1], [0], [0], [1], [0, 0, 1, 1], [], []>} : vector<96x16xf32>, vector<16x512xf32>, vector<96x512xf32> -> vector<96x512xf32>
    %9 = vector.broadcast %2 : vector<96x1xf32> to vector<96x512xf32>
    %10 = arith.addf %8, %9 : vector<96x512xf32>
    %c0_10 = arith.constant 0 : index
    %c0_11 = arith.constant 0 : index
    %c0_12 = arith.constant 0 : index
    %11 = vector.load %arg9[%c0_10, %c0_11, %c0_12] : memref<4x96x512xf32, #tpu.memory_space<vmem>>, vector<1x96x512xf32>
    %12 = vector.shape_cast %11 : vector<1x96x512xf32> to vector<96x512xf32>
    %13 = vector.shape_cast %10 : vector<96x512xf32> to vector<1x96x512xf32>
    tpu.vector_store %arg9[%c0_10, %c0_11, %c0_12], %13 {strides = array<i32>} : memref<4x96x512xf32, #tpu.memory_space<vmem>>, vector<1x96x512xf32>,
    %c1 = arith.constant 1 : index
    %c0_13 = arith.constant 0 : index
    %c0_14 = arith.constant 0 : index
    %14 = vector.load %arg1[%c1, %c0_13, %c0_14] : memref<4x16x512xf32, #tpu.memory_space<vmem>>, vector<1x16x512xf32>
    %15 = vector.shape_cast %14 : vector<1x16x512xf32> to vector<16x512xf32>
    %cst_15 = arith.constant dense<0.000000e+00> : vector<96x512xf32>
    %16 = tpu.matmul %0, %15, %cst_15 {dimension_numbers = #tpu.dot_dimension_numbers<[1], [0], [0], [1], [0, 0, 1, 1], [], []>} : vector<96x16xf32>, vector<16x512xf32>, vector<96x512xf32> -> vector<96x512xf32>
    %17 = vector.broadcast %2 : vector<96x1xf32> to vector<96x512xf32>
    %18 = arith.addf %16, %17 : vector<96x512xf32>
    %c1_16 = arith.constant 1 : index
    %c0_17 = arith.constant 0 : index
    %c0_18 = arith.constant 0 : index
    %19 = vector.load %arg9[%c1_16, %c0_17, %c0_18] : memref<4x96x512xf32, #tpu.memory_space<vmem>>, vector<1x96x512xf32>
    %20 = vector.shape_cast %19 : vector<1x96x512xf32> to vector<96x512xf32>
    %21 = vector.shape_cast %18 : vector<96x512xf32> to vector<1x96x512xf32>
    tpu.vector_store %arg9[%c1_16, %c0_17, %c0_18], %21 {strides = array<i32>} : memref<4x96x512xf32, #tpu.memory_space<vmem>>, vector<1x96x512xf32>,
    %c2 = arith.constant 2 : index
    %c0_19 = arith.constant 0 : index
    %c0_20 = arith.constant 0 : index
    %22 = vector.load %arg1[%c2, %c0_19, %c0_20] : memref<4x16x512xf32, #tpu.memory_space<vmem>>, vector<1x16x512xf32>
    %23 = vector.shape_cast %22 : vector<1x16x512xf32> to vector<16x512xf32>
    %cst_21 = arith.constant dense<0.000000e+00> : vector<96x512xf32>
    %24 = tpu.matmul %0, %23, %cst_21 {dimension_numbers = #tpu.dot_dimension_numbers<[1], [0], [0], [1], [0, 0, 1, 1], [], []>} : vector<96x16xf32>, vector<16x512xf32>, vector<96x512xf32> -> vector<96x512xf32>
    %25 = vector.broadcast %2 : vector<96x1xf32> to vector<96x512xf32>
    %26 = arith.addf %24, %25 : vector<96x512xf32>
    %c2_22 = arith.constant 2 : index
    %c0_23 = arith.constant 0 : index
    %c0_24 = arith.constant 0 : index
    %27 = vector.load %arg9[%c2_22, %c0_23, %c0_24] : memref<4x96x512xf32, #tpu.memory_space<vmem>>, vector<1x96x512xf32>
    %28 = vector.shape_cast %27 : vector<1x96x512xf32> to vector<96x512xf32>
    %29 = vector.shape_cast %26 : vector<96x512xf32> to vector<1x96x512xf32>
    tpu.vector_store %arg9[%c2_22, %c0_23, %c0_24], %29 {strides = array<i32>} : memref<4x96x512xf32, #tpu.memory_space<vmem>>, vector<1x96x512xf32>,
    %c3 = arith.constant 3 : index
    %c0_25 = arith.constant 0 : index
    %c0_26 = arith.constant 0 : index
    %30 = vector.load %arg1[%c3, %c0_25, %c0_26] : memref<4x16x512xf32, #tpu.memory_space<vmem>>, vector<1x16x512xf32>
    %31 = vector.shape_cast %30 : vector<1x16x512xf32> to vector<16x512xf32>
    %cst_27 = arith.constant dense<0.000000e+00> : vector<96x512xf32>
    %32 = tpu.matmul %0, %31, %cst_27 {dimension_numbers = #tpu.dot_dimension_numbers<[1], [0], [0], [1], [0, 0, 1, 1], [], []>} : vector<96x16xf32>, vector<16x512xf32>, vector<96x512xf32> -> vector<96x512xf32>
    %33 = vector.broadcast %2 : vector<96x1xf32> to vector<96x512xf32>
    %34 = arith.addf %32, %33 : vector<96x512xf32>
    %c3_28 = arith.constant 3 : index
    %c0_29 = arith.constant 0 : index
    %c0_30 = arith.constant 0 : index
    %35 = vector.load %arg9[%c3_28, %c0_29, %c0_30] : memref<4x96x512xf32, #tpu.memory_space<vmem>>, vector<1x96x512xf32>
    %36 = vector.shape_cast %35 : vector<1x96x512xf32> to vector<96x512xf32>
    %37 = vector.shape_cast %34 : vector<96x512xf32> to vector<1x96x512xf32>
    tpu.vector_store %arg9[%c3_28, %c0_29, %c0_30], %37 {strides = array<i32>} : memref<4x96x512xf32, #tpu.memory_space<vmem>>, vector<1x96x512xf32>,
    %cst_31 = arith.constant 0.000000e+00 : f32
    %38 = vector.broadcast %cst_31 : f32 to vector<32x512xf32>
    %c0_32 = arith.constant 0 : index
    %c0_33 = arith.constant 0 : index
    %c0_34 = arith.constant 0 : index
    %39 = vector.load %arg9[%c0_32, %c0_33, %c0_34] : memref<4x96x512xf32, #tpu.memory_space<vmem>>, vector<1x96x512xf32>
    %40 = vector.shape_cast %39 : vector<1x96x512xf32> to vector<96x512xf32>
    %cst_35 = arith.constant dense<0.000000e+00> : vector<96x512xf32>
    %41 = tpu.matmul %1, %38, %cst_35 {dimension_numbers = #tpu.dot_dimension_numbers<[1], [0], [0], [1], [0, 0, 1, 1], [], []>} : vector<96x32xf32>, vector<32x512xf32>, vector<96x512xf32> -> vector<96x512xf32>
    %42 = vector.extract_strided_slice %40 {offsets = [0, 0], sizes = [64, 512], strides = [1, 1]} : vector<96x512xf32> to vector<64x512xf32>
    %43 = vector.extract_strided_slice %41 {offsets = [0, 0], sizes = [64, 512], strides = [1, 1]} : vector<96x512xf32> to vector<64x512xf32>
    %44 = arith.addf %42, %43 : vector<64x512xf32>
    %45 = arith.negf %44 : vector<64x512xf32>
    %46 = math.exp %45 : vector<64x512xf32>
    %cst_36 = arith.constant 1.000000e+00 : f32
    %47 = vector.broadcast %cst_36 : f32 to vector<64x512xf32>
    %48 = arith.addf %47, %46 : vector<64x512xf32>
    %49 = arith.divf %47, %48 : vector<64x512xf32>
    %50 = vector.extract_strided_slice %49 {offsets = [0, 0], sizes = [32, 512], strides = [1, 1]} : vector<64x512xf32> to vector<32x512xf32>
    %51 = vector.extract_strided_slice %49 {offsets = [32, 0], sizes = [32, 512], strides = [1, 1]} : vector<64x512xf32> to vector<32x512xf32>
    %52 = vector.extract_strided_slice %40 {offsets = [64, 0], sizes = [32, 512], strides = [1, 1]} : vector<96x512xf32> to vector<32x512xf32>
    %53 = vector.extract_strided_slice %41 {offsets = [64, 0], sizes = [32, 512], strides = [1, 1]} : vector<96x512xf32> to vector<32x512xf32>
    %54 = arith.addf %53, %5 : vector<32x512xf32>
    %55 = arith.mulf %50, %54 : vector<32x512xf32>
    %56 = arith.addf %52, %55 : vector<32x512xf32>
    %57 = math.tanh %56 : vector<32x512xf32>
    %cst_37 = arith.constant 1.000000e+00 : f32
    %58 = vector.broadcast %cst_37 : f32 to vector<32x512xf32>
    %59 = arith.subf %58, %51 : vector<32x512xf32>
    %60 = arith.mulf %59, %57 : vector<32x512xf32>
    %61 = arith.mulf %51, %38 : vector<32x512xf32>
    %62 = arith.addf %60, %61 : vector<32x512xf32>
    %c1_38 = arith.constant 1 : index
    %c0_39 = arith.constant 0 : index
    %c0_40 = arith.constant 0 : index
    %63 = vector.load %arg9[%c1_38, %c0_39, %c0_40] : memref<4x96x512xf32, #tpu.memory_space<vmem>>, vector<1x96x512xf32>
    %64 = vector.shape_cast %63 : vector<1x96x512xf32> to vector<96x512xf32>
    %cst_41 = arith.constant dense<0.000000e+00> : vector<96x512xf32>
    %65 = tpu.matmul %1, %62, %cst_41 {dimension_numbers = #tpu.dot_dimension_numbers<[1], [0], [0], [1], [0, 0, 1, 1], [], []>} : vector<96x32xf32>, vector<32x512xf32>, vector<96x512xf32> -> vector<96x512xf32>
    %66 = vector.extract_strided_slice %64 {offsets = [0, 0], sizes = [64, 512], strides = [1, 1]} : vector<96x512xf32> to vector<64x512xf32>
    %67 = vector.extract_strided_slice %65 {offsets = [0, 0], sizes = [64, 512], strides = [1, 1]} : vector<96x512xf32> to vector<64x512xf32>
    %68 = arith.addf %66, %67 : vector<64x512xf32>
    %69 = arith.negf %68 : vector<64x512xf32>
    %70 = math.exp %69 : vector<64x512xf32>
    %cst_42 = arith.constant 1.000000e+00 : f32
    %71 = vector.broadcast %cst_42 : f32 to vector<64x512xf32>
    %72 = arith.addf %71, %70 : vector<64x512xf32>
    %73 = arith.divf %71, %72 : vector<64x512xf32>
    %74 = vector.extract_strided_slice %73 {offsets = [0, 0], sizes = [32, 512], strides = [1, 1]} : vector<64x512xf32> to vector<32x512xf32>
    %75 = vector.extract_strided_slice %73 {offsets = [32, 0], sizes = [32, 512], strides = [1, 1]} : vector<64x512xf32> to vector<32x512xf32>
    %76 = vector.extract_strided_slice %64 {offsets = [64, 0], sizes = [32, 512], strides = [1, 1]} : vector<96x512xf32> to vector<32x512xf32>
    %77 = vector.extract_strided_slice %65 {offsets = [64, 0], sizes = [32, 512], strides = [1, 1]} : vector<96x512xf32> to vector<32x512xf32>
    %78 = arith.addf %77, %5 : vector<32x512xf32>
    %79 = arith.mulf %74, %78 : vector<32x512xf32>
    %80 = arith.addf %76, %79 : vector<32x512xf32>
    %81 = math.tanh %80 : vector<32x512xf32>
    %cst_43 = arith.constant 1.000000e+00 : f32
    %82 = vector.broadcast %cst_43 : f32 to vector<32x512xf32>
    %83 = arith.subf %82, %75 : vector<32x512xf32>
    %84 = arith.mulf %83, %81 : vector<32x512xf32>
    %85 = arith.mulf %75, %62 : vector<32x512xf32>
    %86 = arith.addf %84, %85 : vector<32x512xf32>
    %c2_44 = arith.constant 2 : index
    %c0_45 = arith.constant 0 : index
    %c0_46 = arith.constant 0 : index
    %87 = vector.load %arg9[%c2_44, %c0_45, %c0_46] : memref<4x96x512xf32, #tpu.memory_space<vmem>>, vector<1x96x512xf32>
    %88 = vector.shape_cast %87 : vector<1x96x512xf32> to vector<96x512xf32>
    %cst_47 = arith.constant dense<0.000000e+00> : vector<96x512xf32>
    %89 = tpu.matmul %1, %86, %cst_47 {dimension_numbers = #tpu.dot_dimension_numbers<[1], [0], [0], [1], [0, 0, 1, 1], [], []>} : vector<96x32xf32>, vector<32x512xf32>, vector<96x512xf32> -> vector<96x512xf32>
    %90 = vector.extract_strided_slice %88 {offsets = [0, 0], sizes = [64, 512], strides = [1, 1]} : vector<96x512xf32> to vector<64x512xf32>
    %91 = vector.extract_strided_slice %89 {offsets = [0, 0], sizes = [64, 512], strides = [1, 1]} : vector<96x512xf32> to vector<64x512xf32>
    %92 = arith.addf %90, %91 : vector<64x512xf32>
    %93 = arith.negf %92 : vector<64x512xf32>
    %94 = math.exp %93 : vector<64x512xf32>
    %cst_48 = arith.constant 1.000000e+00 : f32
    %95 = vector.broadcast %cst_48 : f32 to vector<64x512xf32>
    %96 = arith.addf %95, %94 : vector<64x512xf32>
    %97 = arith.divf %95, %96 : vector<64x512xf32>
    %98 = vector.extract_strided_slice %97 {offsets = [0, 0], sizes = [32, 512], strides = [1, 1]} : vector<64x512xf32> to vector<32x512xf32>
    %99 = vector.extract_strided_slice %97 {offsets = [32, 0], sizes = [32, 512], strides = [1, 1]} : vector<64x512xf32> to vector<32x512xf32>
    %100 = vector.extract_strided_slice %88 {offsets = [64, 0], sizes = [32, 512], strides = [1, 1]} : vector<96x512xf32> to vector<32x512xf32>
    %101 = vector.extract_strided_slice %89 {offsets = [64, 0], sizes = [32, 512], strides = [1, 1]} : vector<96x512xf32> to vector<32x512xf32>
    %102 = arith.addf %101, %5 : vector<32x512xf32>
    %103 = arith.mulf %98, %102 : vector<32x512xf32>
    %104 = arith.addf %100, %103 : vector<32x512xf32>
    %105 = math.tanh %104 : vector<32x512xf32>
    %cst_49 = arith.constant 1.000000e+00 : f32
    %106 = vector.broadcast %cst_49 : f32 to vector<32x512xf32>
    %107 = arith.subf %106, %99 : vector<32x512xf32>
    %108 = arith.mulf %107, %105 : vector<32x512xf32>
    %109 = arith.mulf %99, %86 : vector<32x512xf32>
    %110 = arith.addf %108, %109 : vector<32x512xf32>
    %c3_50 = arith.constant 3 : index
    %c0_51 = arith.constant 0 : index
    %c0_52 = arith.constant 0 : index
    %111 = vector.load %arg9[%c3_50, %c0_51, %c0_52] : memref<4x96x512xf32, #tpu.memory_space<vmem>>, vector<1x96x512xf32>
    %112 = vector.shape_cast %111 : vector<1x96x512xf32> to vector<96x512xf32>
    %cst_53 = arith.constant dense<0.000000e+00> : vector<96x512xf32>
    %113 = tpu.matmul %1, %110, %cst_53 {dimension_numbers = #tpu.dot_dimension_numbers<[1], [0], [0], [1], [0, 0, 1, 1], [], []>} : vector<96x32xf32>, vector<32x512xf32>, vector<96x512xf32> -> vector<96x512xf32>
    %114 = vector.extract_strided_slice %112 {offsets = [0, 0], sizes = [64, 512], strides = [1, 1]} : vector<96x512xf32> to vector<64x512xf32>
    %115 = vector.extract_strided_slice %113 {offsets = [0, 0], sizes = [64, 512], strides = [1, 1]} : vector<96x512xf32> to vector<64x512xf32>
    %116 = arith.addf %114, %115 : vector<64x512xf32>
    %117 = arith.negf %116 : vector<64x512xf32>
    %118 = math.exp %117 : vector<64x512xf32>
    %cst_54 = arith.constant 1.000000e+00 : f32
    %119 = vector.broadcast %cst_54 : f32 to vector<64x512xf32>
    %120 = arith.addf %119, %118 : vector<64x512xf32>
    %121 = arith.divf %119, %120 : vector<64x512xf32>
    %122 = vector.extract_strided_slice %121 {offsets = [0, 0], sizes = [32, 512], strides = [1, 1]} : vector<64x512xf32> to vector<32x512xf32>
    %123 = vector.extract_strided_slice %121 {offsets = [32, 0], sizes = [32, 512], strides = [1, 1]} : vector<64x512xf32> to vector<32x512xf32>
    %124 = vector.extract_strided_slice %112 {offsets = [64, 0], sizes = [32, 512], strides = [1, 1]} : vector<96x512xf32> to vector<32x512xf32>
    %125 = vector.extract_strided_slice %113 {offsets = [64, 0], sizes = [32, 512], strides = [1, 1]} : vector<96x512xf32> to vector<32x512xf32>
    %126 = arith.addf %125, %5 : vector<32x512xf32>
    %127 = arith.mulf %122, %126 : vector<32x512xf32>
    %128 = arith.addf %124, %127 : vector<32x512xf32>
    %129 = math.tanh %128 : vector<32x512xf32>
    %cst_55 = arith.constant 1.000000e+00 : f32
    %130 = vector.broadcast %cst_55 : f32 to vector<32x512xf32>
    %131 = arith.subf %130, %123 : vector<32x512xf32>
    %132 = arith.mulf %131, %129 : vector<32x512xf32>
    %133 = arith.mulf %123, %110 : vector<32x512xf32>
    %134 = arith.addf %132, %133 : vector<32x512xf32>
    %c0_56 = arith.constant 0 : index
    %c0_57 = arith.constant 0 : index
    %135 = vector.load %arg6[%c0_56, %c0_57] : memref<8x32xf32, #tpu.memory_space<vmem>>, vector<8x32xf32>
    %cst_58 = arith.constant dense<0.000000e+00> : vector<8x512xf32>
    %136 = tpu.matmul %135, %134, %cst_58 {dimension_numbers = #tpu.dot_dimension_numbers<[1], [0], [0], [1], [0, 0, 1, 1], [], []>} : vector<8x32xf32>, vector<32x512xf32>, vector<8x512xf32> -> vector<8x512xf32>
    %c0_59 = arith.constant 0 : index
    %c0_60 = arith.constant 0 : index
    %137 = vector.load %arg7[%c0_59, %c0_60] : memref<8x1xf32, #tpu.memory_space<vmem>>, vector<8x1xf32>
    %138 = vector.broadcast %137 : vector<8x1xf32> to vector<8x512xf32>
    %139 = arith.addf %136, %138 : vector<8x512xf32>
    %c0_61 = arith.constant 0 : index
    %c0_62 = arith.constant 0 : index
    %140 = vector.load %arg8[%c0_61, %c0_62] : memref<8x512xf32, #tpu.memory_space<vmem>>, vector<8x512xf32>
    tpu.vector_store %arg8[%c0_61, %c0_62], %139 {strides = array<i32>} : memref<8x512xf32, #tpu.memory_space<vmem>>, vector<8x512xf32>,
    return
  }
  func.func @transform_0(%arg0: i32) -> (i32, i32, i32) {
    %c0_i32 = arith.constant 0 : i32
    %c0_i32_0 = arith.constant 0 : i32
    %c0_i32_1 = arith.constant 0 : i32
    return %c0_i32, %c0_i32_0, %arg0 : i32, i32, i32
  }
  func.func @transform_1(%arg0: i32) -> (i32, i32) {
    %c0_i32 = arith.constant 0 : i32
    %c0_i32_0 = arith.constant 0 : i32
    %c0_i32_1 = arith.constant 0 : i32
    return %c0_i32, %c0_i32_0 : i32, i32
  }
  func.func @transform_2(%arg0: i32) -> (i32, i32) {
    %c0_i32 = arith.constant 0 : i32
    %c0_i32_0 = arith.constant 0 : i32
    %c0_i32_1 = arith.constant 0 : i32
    return %c0_i32, %c0_i32_0 : i32, i32
  }
  func.func @transform_3(%arg0: i32) -> (i32, i32) {
    %c0_i32 = arith.constant 0 : i32
    %c0_i32_0 = arith.constant 0 : i32
    %c0_i32_1 = arith.constant 0 : i32
    return %c0_i32, %c0_i32_0 : i32, i32
  }
  func.func @transform_4(%arg0: i32) -> (i32, i32) {
    %c0_i32 = arith.constant 0 : i32
    %c0_i32_0 = arith.constant 0 : i32
    %c0_i32_1 = arith.constant 0 : i32
    return %c0_i32, %c0_i32_0 : i32, i32
  }
  func.func @transform_5(%arg0: i32) -> (i32, i32) {
    %c0_i32 = arith.constant 0 : i32
    %c0_i32_0 = arith.constant 0 : i32
    %c0_i32_1 = arith.constant 0 : i32
    return %c0_i32, %c0_i32_0 : i32, i32
  }
  func.func @transform_6(%arg0: i32) -> (i32, i32) {
    %c0_i32 = arith.constant 0 : i32
    %c0_i32_0 = arith.constant 0 : i32
    %c0_i32_1 = arith.constant 0 : i32
    return %c0_i32, %c0_i32_0 : i32, i32
  }
  func.func @transform_7(%arg0: i32) -> (i32, i32) {
    %c0_i32 = arith.constant 0 : i32
    %c0_i32_0 = arith.constant 0 : i32
    return %c0_i32, %arg0 : i32, i32
  }
}

</mosaic_0001>

<llo_original>
// kernel: tpu_custom_call.1
$region0: #{tpu_custom_call.1}
  #allocation0 [shape = 'u32[]', space=smem, size = 0x4, offset = 0x4, fixed_abs, tag = 'smem constant byte address 0x4 - core index']
  #allocation1 [shape = 'u32[144,128]{1,0:T(1,128)}', space=vmem, size = 0x12000, scoped, tag = 'internal scratch']
  #allocation2 [shape = 'f32[4,96,512]{2,1,0:T(8,128)}', space=vmem, size = 0xc0000, scoped, tag = 'scratch operand']
  %s0 = inlined_call_operand.hbm [shape: f32[4,16,1024], index: 0, kind: input, shape index: {}]
  %s1 = inlined_call_operand.vmem [shape: f32[96,16], index: 1, kind: input, shape index: {}]
  %s2 = inlined_call_operand.vmem [shape: f32[96,32], index: 2, kind: input, shape index: {}]
  %s3 = inlined_call_operand.vmem [shape: f32[96,1], index: 3, kind: input, shape index: {}]
  %s4 = inlined_call_operand.vmem [shape: f32[32,1], index: 4, kind: input, shape index: {}]
  %s5 = inlined_call_operand.vmem [shape: f32[8,32], index: 5, kind: input, shape index: {}]
  %s6 = inlined_call_operand.vmem [shape: f32[8,1], index: 6, kind: input, shape index: {}]
  %s7 = inlined_call_operand.hbm [shape: f32[8,1024], index: 7, kind: output, shape index: {}]
  %s8 = sld [smem:[#allocation0]]
  $region65: #{tpu_custom_call.1} parent=0
    _
  %s10 = ssub.s32 1, %s8
  %s11 = scalar_select 0, %s10, %s8
  $region1: #{tpu_custom_call.1} parent=0
    #allocation3 [shape = 'u8[262144]{0}', space=vmem, size = 0x40000, scoped, tag = 'input window, operand 0']
    #allocation4 [shape = 's32[2]{0}', space=sflag, size = 0x8, scoped, tag = 'scoped memory for tpu_custom_call.1']
    #allocation5 [shape = 's32[2]{0}', space=sflag, size = 0x8, scoped, tag = 'scoped memory for tpu_custom_call.1']
    #allocation6 [shape = 'u8[32768]{0}', space=vmem, size = 0x8000, scoped, tag = 'output window, operand 0']
    %12 = vsyncpa [#allocation4], 0
    %s13 = scalar_lea.sflag [#allocation4], 1
    %14 = vsyncpa %s13, 0
    %15 = vsyncpa [#allocation5], 0
    %s16 = scalar_lea.sflag [#allocation5], 1
    %17 = vsyncpa %s16, 0
    loop: start=0, step=1, limit=4
    $region2: #{tpu_custom_call.1} parent=1 // loop_pre_header
      _
    $region3: #{tpu_custom_call.1} parent=1 // loop_header
      %s19 = sphi 0, %s23
      %p20 = scmp.ge.s32.totalorder %s19, 4
      %s29 = sphi 0, %s31
      %s32 = sphi 0, %s29
      %s33 = sphi 0, %s32
      %s49 = sphi 0, %s33
      %s53 = sphi 0, %s53
      %s55 = sphi 0, %s53
      %s56 = sphi 0, %s55
      %s70 = sphi 0, %s56
      %s74 = sphi 0, %s74
      %s76 = sphi 0, %s74
      %s77 = sphi 0, %s76
      %s91 = sphi 0, %s77
      %s95 = sphi 0, %s95
      %s97 = sphi 0, %s95
      %s98 = sphi 0, %s97
      %s112 = sphi 0, %s98
      %s116 = sphi 0, %s116
      %s118 = sphi 0, %s116
      %s119 = sphi 0, %s118
      %s133 = sphi 0, %s119
      %s137 = sphi 0, %s137
      %s139 = sphi 0, %s137
      %s140 = sphi 0, %s139
      %s154 = sphi 0, %s140
      %s158 = sphi 0, %s158
      %s160 = sphi 0, %s158
      %s161 = sphi 0, %s160
      %s175 = sphi 0, %s161
      %s181 = sphi 0, %s183
      %s184 = sphi 0, %s181
      %s185 = sphi 0, %s184
      %s201 = sphi 0, %s185
    $region4: #{tpu_custom_call.1} parent=1 // loop_header_branch
      %22 = sbr.rel (%p20) target = $region8
    $region5: #{tpu_custom_call.1} parent=1 // loop_body
      %s24 = ssub.s32 %s19, 1
      %s25 = ssub.s32 %s19, 2
      %s26 = sadd.s32 %s19, 1
      %s27 = ssub.s32 %s19, %s26
      %p28 = scmp.eq.s32.totalorder %s27, 0
      %s30 = sadd.s32 %s29, 1
      %s31 = scalar_select %p28, %s29, %s30
      %p34 = pneg %p28
      %p35 = scmp.eq.s32.totalorder %s19, 1
      %p36 = por %p34, %p35
      %p37 = scmp.ne.s32.totalorder %s29, %s32
      %p38 = scmp.eq.s32.totalorder %s19, 0
      %p39 = por %p37, %p38
      %p40 = scmp.ne.s32.totalorder %s29, %s32
      %p41 = scmp.eq.s32.totalorder %s24, 1
      %p42 = por %p40, %p41
      %p43 = scmp.ne.s32.totalorder %s32, %s33
      %p44 = scmp.eq.s32.totalorder %s24, 0
      %p45 = por %p43, %p44
      %p46 = scmp.ne.s32.totalorder %s32, %s33
      %p47 = scmp.eq.s32.totalorder %s25, 1
      %p48 = por %p46, %p47
      %p50 = scmp.ne.s32.totalorder %s33, %s49
      %p51 = scmp.eq.s32.totalorder %s25, 0
      %p52 = por %p50, %p51
      %s54 = sadd.s32 %s53, 1
      %p57 = scmp.eq.s32.totalorder %s19, 1
      %p58 = scmp.ne.s32.totalorder %s53, %s55
      %p59 = scmp.eq.s32.totalorder %s19, 0
      %p60 = por %p58, %p59
      %p61 = scmp.ne.s32.totalorder %s53, %s55
      %p62 = scmp.eq.s32.totalorder %s24, 1
      %p63 = por %p61, %p62
      %p64 = scmp.ne.s32.totalorder %s55, %s56
      %p65 = scmp.eq.s32.totalorder %s24, 0
      %p66 = por %p64, %p65
      %p67 = scmp.ne.s32.totalorder %s55, %s56
      %p68 = scmp.eq.s32.totalorder %s25, 1
      %p69 = por %p67, %p68
      %p71 = scmp.ne.s32.totalorder %s56, %s70
      %p72 = scmp.eq.s32.totalorder %s25, 0
      %p73 = por %p71, %p72
      %s75 = sadd.s32 %s74, 1
      %p78 = scmp.eq.s32.totalorder %s19, 1
      %p79 = scmp.ne.s32.totalorder %s74, %s76
      %p80 = scmp.eq.s32.totalorder %s19, 0
      %p81 = por %p79, %p80
      %p82 = scmp.ne.s32.totalorder %s74, %s76
      %p83 = scmp.eq.s32.totalorder %s24, 1
      %p84 = por %p82, %p83
      %p85 = scmp.ne.s32.totalorder %s76, %s77
      %p86 = scmp.eq.s32.totalorder %s24, 0
      %p87 = por %p85, %p86
      %p88 = scmp.ne.s32.totalorder %s76, %s77
      %p89 = scmp.eq.s32.totalorder %s25, 1
      %p90 = por %p88, %p89
      %p92 = scmp.ne.s32.totalorder %s77, %s91
      %p93 = scmp.eq.s32.totalorder %s25, 0
      %p94 = por %p92, %p93
      %s96 = sadd.s32 %s95, 1
      %p99 = scmp.eq.s32.totalorder %s19, 1
      %p100 = scmp.ne.s32.totalorder %s95, %s97
      %p101 = scmp.eq.s32.totalorder %s19, 0
      %p102 = por %p100, %p101
      %p103 = scmp.ne.s32.totalorder %s95, %s97
      %p104 = scmp.eq.s32.totalorder %s24, 1
      %p105 = por %p103, %p104
      %p106 = scmp.ne.s32.totalorder %s97, %s98
      %p107 = scmp.eq.s32.totalorder %s24, 0
      %p108 = por %p106, %p107
      %p109 = scmp.ne.s32.totalorder %s97, %s98
      %p110 = scmp.eq.s32.totalorder %s25, 1
      %p111 = por %p109, %p110
      %p113 = scmp.ne.s32.totalorder %s98, %s112
      %p114 = scmp.eq.s32.totalorder %s25, 0
      %p115 = por %p113, %p114
      %s117 = sadd.s32 %s116, 1
      %p120 = scmp.eq.s32.totalorder %s19, 1
      %p121 = scmp.ne.s32.totalorder %s116, %s118
      %p122 = scmp.eq.s32.totalorder %s19, 0
      %p123 = por %p121, %p122
      %p124 = scmp.ne.s32.totalorder %s116, %s118
      %p125 = scmp.eq.s32.totalorder %s24, 1
      %p126 = por %p124, %p125
      %p127 = scmp.ne.s32.totalorder %s118, %s119
      %p128 = scmp.eq.s32.totalorder %s24, 0
      %p129 = por %p127, %p128
      %p130 = scmp.ne.s32.totalorder %s118, %s119
      %p131 = scmp.eq.s32.totalorder %s25, 1
      %p132 = por %p130, %p131
      %p134 = scmp.ne.s32.totalorder %s119, %s133
      %p135 = scmp.eq.s32.totalorder %s25, 0
      %p136 = por %p134, %p135
      %s138 = sadd.s32 %s137, 1
      %p141 = scmp.eq.s32.totalorder %s19, 1
      %p142 = scmp.ne.s32.totalorder %s137, %s139
      %p143 = scmp.eq.s32.totalorder %s19, 0
      %p144 = por %p142, %p143
      %p145 = scmp.ne.s32.totalorder %s137, %s139
      %p146 = scmp.eq.s32.totalorder %s24, 1
      %p147 = por %p145, %p146
      %p148 = scmp.ne.s32.totalorder %s139, %s140
      %p149 = scmp.eq.s32.totalorder %s24, 0
      %p150 = por %p148, %p149
      %p151 = scmp.ne.s32.totalorder %s139, %s140
      %p152 = scmp.eq.s32.totalorder %s25, 1
      %p153 = por %p151, %p152
      %p155 = scmp.ne.s32.totalorder %s140, %s154
      %p156 = scmp.eq.s32.totalorder %s25, 0
      %p157 = por %p155, %p156
      %s159 = sadd.s32 %s158, 1
      %p162 = scmp.eq.s32.totalorder %s19, 1
      %p163 = scmp.ne.s32.totalorder %s158, %s160
      %p164 = scmp.eq.s32.totalorder %s19, 0
      %p165 = por %p163, %p164
      %p166 = scmp.ne.s32.totalorder %s158, %s160
      %p167 = scmp.eq.s32.totalorder %s24, 1
      %p168 = por %p166, %p167
      %p169 = scmp.ne.s32.totalorder %s160, %s161
      %p170 = scmp.eq.s32.totalorder %s24, 0
      %p171 = por %p169, %p170
      %p172 = scmp.ne.s32.totalorder %s160, %s161
      %p173 = scmp.eq.s32.totalorder %s25, 1
      %p174 = por %p172, %p173
      %p176 = scmp.ne.s32.totalorder %s161, %s175
      %p177 = scmp.eq.s32.totalorder %s25, 0
      %p178 = por %p176, %p177
      %s179 = ssub.s32 %s19, %s26
      %p180 = scmp.eq.s32.totalorder %s179, 0
      %s182 = sadd.s32 %s181, 1
      %s183 = scalar_select %p180, %s181, %s182
      %p186 = pneg %p180
      %p187 = scmp.eq.s32.totalorder %s19, 1
      %p188 = por %p186, %p187
      %p189 = scmp.ne.s32.totalorder %s181, %s184
      %p190 = scmp.eq.s32.totalorder %s19, 0
      %p191 = por %p189, %p190
      %p192 = scmp.ne.s32.totalorder %s181, %s184
      %p193 = scmp.eq.s32.totalorder %s24, 1
      %p194 = por %p192, %p193
      %p195 = scmp.ne.s32.totalorder %s184, %s185
      %p196 = scmp.eq.s32.totalorder %s24, 0
      %p197 = por %p195, %p196
      %p198 = scmp.ne.s32.totalorder %s184, %s185
      %p199 = scmp.eq.s32.totalorder %s25, 1
      %p200 = por %p198, %p199
      %p202 = scmp.ne.s32.totalorder %s185, %s201
      %p203 = scmp.eq.s32.totalorder %s25, 0
      %p204 = por %p202, %p203
      %p205 = scmp.le.s32.totalorder 1, %s19
      %p206 = scmp.lt.s32.totalorder %s19, 3
      %p207 = pnand %p205, %p206
      %p208 = pneg %p207
      // Predicated region
      $region9: #{tpu_custom_call.1} parent=5 // pred_check
        _
      $region10: #{tpu_custom_call.1} parent=5 // pred_check_branch
        %210 = sbr.rel (%p207) target = $region12
      $region11: #{tpu_custom_call.1} parent=5 // pred_region
        %s211 = ssub.s32 %s19, 1
        // Predicated region
        $region13: #{tpu_custom_call.1} parent=11 // pred_check
          %p212 = pneg %p66
        $region14: #{tpu_custom_call.1} parent=11 // pred_check_branch
          %214 = sbr.rel (%p212) target = $region16
        $region15: #{tpu_custom_call.1} parent=11 // pred_region
          _
        $region16: #{tpu_custom_call.1} parent=11 // pred_fallthru
          _
        // Predicated region
        $region17: #{tpu_custom_call.1} parent=11 // pred_check
          %p215 = pneg %p87
        $region18: #{tpu_custom_call.1} parent=11 // pred_check_branch
          %217 = sbr.rel (%p215) target = $region20
        $region19: #{tpu_custom_call.1} parent=11 // pred_region
          _
        $region20: #{tpu_custom_call.1} parent=11 // pred_fallthru
          _
        // Predicated region
        $region21: #{tpu_custom_call.1} parent=11 // pred_check
          %p218 = pneg %p108
        $region22: #{tpu_custom_call.1} parent=11 // pred_check_branch
          %220 = sbr.rel (%p218) target = $region24
        $region23: #{tpu_custom_call.1} parent=11 // pred_region
          _
        $region24: #{tpu_custom_call.1} parent=11 // pred_fallthru
          _
        // Predicated region
        $region25: #{tpu_custom_call.1} parent=11 // pred_check
          %p221 = pneg %p129
        $region26: #{tpu_custom_call.1} parent=11 // pred_check_branch
          %223 = sbr.rel (%p221) target = $region28
        $region27: #{tpu_custom_call.1} parent=11 // pred_region
          _
        $region28: #{tpu_custom_call.1} parent=11 // pred_fallthru
          _
        // Predicated region
        $region29: #{tpu_custom_call.1} parent=11 // pred_check
          %p224 = pneg %p150
        $region30: #{tpu_custom_call.1} parent=11 // pred_check_branch
          %226 = sbr.rel (%p224) target = $region32
        $region31: #{tpu_custom_call.1} parent=11 // pred_region
          _
        $region32: #{tpu_custom_call.1} parent=11 // pred_fallthru
          _
        // Predicated region
        $region33: #{tpu_custom_call.1} parent=11 // pred_check
          %p227 = pneg %p171
        $region34: #{tpu_custom_call.1} parent=11 // pred_check_branch
          %229 = sbr.rel (%p227) target = $region36
        $region35: #{tpu_custom_call.1} parent=11 // pred_region
          _
        $region36: #{tpu_custom_call.1} parent=11 // pred_fallthru
          _
      $region12: #{tpu_custom_call.1} parent=5 // pred_fallthru
        _
      %p230 = scmp.lt.s32.totalorder %s19, 2
      // Predicated region
      $region37: #{tpu_custom_call.1} parent=5 // pred_check
        %p231 = pneg %p230
      $region38: #{tpu_custom_call.1} parent=5 // pred_check_branch
        %233 = sbr.rel (%p231) target = $region40
      $region39: #{tpu_custom_call.1} parent=5 // pred_region
        // Predicated region
        $region41: #{tpu_custom_call.1} parent=39 // pred_check
          %p234 = pneg %p39
        $region42: #{tpu_custom_call.1} parent=39 // pred_check_branch
          %236 = sbr.rel (%p234) target = $region44
        $region43: #{tpu_custom_call.1} parent=39 // pred_region
          %s237 = sand.u32 %s29, 1
          %s238 = scalar_lea.sflag [#allocation4], %s237
          %s239 = sand.u32 %s29, 1
          %s240 = smul.addr %s239, 256
          %s241 = scalar_lea.vmem [#allocation3], %s240
          %s242 = smul.u32 4, %s19
          %s244 = ssub.s32 4096, 4096
          %245 = vsyncadd %s238, %s244
          %s246 = smul.addr %s242, 128
          %s247 = scalar_lea.hbm %s0, %s246
          %s248 = sshll.u32 %s241, 4
          %s249 = int_to_ptr.vmem [resolvable:$true] %s248
          %254 = dma.hbm_to_vmem [thread:$0]  %s247, 4096, %s249, %s238, 1024, 512, 32
        $region44: #{tpu_custom_call.1} parent=39 // pred_fallthru
          _
      $region40: #{tpu_custom_call.1} parent=5 // pred_fallthru
        _
      %p255 = scmp.le.s32.totalorder 1, %s19
      %p256 = scmp.lt.s32.totalorder %s19, 3
      %p257 = pnand %p255, %p256
      %p258 = pneg %p257
      // Predicated region
      $region45: #{tpu_custom_call.1} parent=5 // pred_check
        _
      $region46: #{tpu_custom_call.1} parent=5 // pred_check_branch
        %260 = sbr.rel (%p257) target = $region48
      $region47: #{tpu_custom_call.1} parent=5 // pred_region
        %s261 = ssub.s32 %s19, 1
        %s262 = sand.u32 %s32, 1
        %s263 = scalar_lea.sflag [#allocation4], %s262
        %s264 = sand.u32 %s32, 1
        %s265 = smul.addr %s264, 256
        %s266 = scalar_lea.vmem [#allocation3], %s265
        // Predicated region
        $region49: #{tpu_custom_call.1} parent=47 // pred_check
          %p267 = pneg %p45
        $region50: #{tpu_custom_call.1} parent=47 // pred_check_branch
          %269 = sbr.rel (%p267) target = $region52
        $region51: #{tpu_custom_call.1} parent=47 // pred_region
          %270 = dma.done %s263, 4096
        $region52: #{tpu_custom_call.1} parent=47 // pred_fallthru
          _
        %s271 = sand.u32 %s32, 1
        %s272 = scalar_lea.sflag [#allocation4], %s271
        %s273 = sand.u32 %s32, 1
        %s274 = smul.addr %s273, 256
        %s275 = scalar_lea.vmem [#allocation3], %s274
        %p276 = pneg %p45
        %p277 = pneg %p42
        %p278 = pneg %p66
        %p279 = pneg %p63
        %p280 = pneg %p87
        %p281 = pneg %p84
        %p282 = pneg %p108
        %p283 = pneg %p105
        %p284 = pneg %p129
        %p285 = pneg %p126
        %p286 = pneg %p150
        %p287 = pneg %p147
        %p288 = pneg %p171
        %p289 = pneg %p168
        %p290 = pneg %p197
        %p291 = pneg %p194
        %s292 = sand.u32 %s184, 1
        %s293 = scalar_lea.sflag [#allocation5], %s292
        %s294 = sand.u32 %s184, 1
        %s295 = smul.addr %s294, 32
        %s296 = scalar_lea.vmem [#allocation6], %s295
        %s297 = smul.u32 4, %s24
        %s298 = smul.u32 4, %s24
        %v299 = vld [vmem:[%s1] sm:$0xff]
        %v300 = vld [vmem:[%s1 + $0x8] sm:$0xff]
        %v301 = vld [vmem:[%s1 + $0x10] sm:$0xff]
        %v302 = vld [vmem:[%s1 + $0x18] sm:$0xff]
        %v303 = vld [vmem:[%s1 + $0x20] sm:$0xff]
        %v304 = vld [vmem:[%s1 + $0x28] sm:$0xff]
        %v305 = vld [vmem:[%s1 + $0x30] sm:$0xff]
        %v306 = vld [vmem:[%s1 + $0x38] sm:$0xff]
        %v307 = vld [vmem:[%s1 + $0x40] sm:$0xff]
        %v308 = vld [vmem:[%s1 + $0x48] sm:$0xff]
        %v309 = vld [vmem:[%s1 + $0x50] sm:$0xff]
        %v310 = vld [vmem:[%s1 + $0x58] sm:$0xff]
        %v311 = vld [vmem:[%s2] sm:$0xff]
        %v312 = vld [vmem:[%s2 + $0x8] sm:$0xff]
        %v313 = vld [vmem:[%s2 + $0x10] sm:$0xff]
        %v314 = vld [vmem:[%s2 + $0x18] sm:$0xff]
        %v315 = vld [vmem:[%s2 + $0x20] sm:$0xff]
        %v316 = vld [vmem:[%s2 + $0x28] sm:$0xff]
        %v317 = vld [vmem:[%s2 + $0x30] sm:$0xff]
        %v318 = vld [vmem:[%s2 + $0x38] sm:$0xff]
        %v319 = vld [vmem:[%s2 + $0x40] sm:$0xff]
        %v320 = vld [vmem:[%s2 + $0x48] sm:$0xff]
        %v321 = vld [vmem:[%s2 + $0x50] sm:$0xff]
        %v322 = vld [vmem:[%s2 + $0x58] sm:$0xff]
        %v323 = vld [vmem:[%s3] sm:$0xff]
        %v324 = vld [vmem:[%s3 + $0x8] sm:$0xff]
        %v325 = vld [vmem:[%s3 + $0x10] sm:$0xff]
        %v326 = vld [vmem:[%s3 + $0x18] sm:$0xff]
        %v327 = vld [vmem:[%s3 + $0x20] sm:$0xff]
        %v328 = vld [vmem:[%s3 + $0x28] sm:$0xff]
        %v329 = vld [vmem:[%s3 + $0x30] sm:$0xff]
        %v330 = vld [vmem:[%s3 + $0x38] sm:$0xff]
        %v331 = vld [vmem:[%s3 + $0x40] sm:$0xff]
        %v332 = vld [vmem:[%s3 + $0x48] sm:$0xff]
        %v333 = vld [vmem:[%s3 + $0x50] sm:$0xff]
        %v334 = vld [vmem:[%s3 + $0x58] sm:$0xff]
        %v335 = vld [vmem:[%s4] sm:$0xff]
        %v336 = vld [vmem:[%s4 + $0x8] sm:$0xff]
        %v337 = vld [vmem:[%s4 + $0x10] sm:$0xff]
        %v338 = vld [vmem:[%s4 + $0x18] sm:$0xff]
        %340 = vset.pattern.permute.xlu0 0
        %341 = vperm.xlu0 %340, %v335
        %v342 = vpop.permute.xlu0 %341
        %345 = vset.pattern.permute.xlu0 0
        %346 = vperm.xlu0 %345, %v336
        %v347 = vpop.permute.xlu0 %346
        %350 = vset.pattern.permute.xlu0 0
        %351 = vperm.xlu0 %350, %v337
        %v352 = vpop.permute.xlu0 %351
        %355 = vset.pattern.permute.xlu0 0
        %356 = vperm.xlu0 %355, %v338
        %v357 = vpop.permute.xlu0 %356
        %v359 = vld [vmem:[%s266] sm:$0xff]
        %v360 = vld [vmem:[%s266 + $0x8] sm:$0xff]
        %v361 = vld [vmem:[%s266 + $0x10] sm:$0xff]
        %v362 = vld [vmem:[%s266 + $0x18] sm:$0xff]
        %v363 = vld [vmem:[%s266 + $0x20] sm:$0xff]
        %v364 = vld [vmem:[%s266 + $0x28] sm:$0xff]
        %v365 = vld [vmem:[%s266 + $0x30] sm:$0xff]
        %v366 = vld [vmem:[%s266 + $0x38] sm:$0xff]
        %368 = vset.pattern.permute.xlu0 0
        %369 = vperm.xlu0 %368, %v323
        %v370 = vpop.permute.xlu0 %369
        %373 = vset.pattern.permute.xlu0 0
        %374 = vperm.xlu0 %373, %v324
        %v375 = vpop.permute.xlu0 %374
        %378 = vset.pattern.permute.xlu0 0
        %379 = vperm.xlu0 %378, %v325
        %v380 = vpop.permute.xlu0 %379
        %383 = vset.pattern.permute.xlu0 0
        %384 = vperm.xlu0 %383, %v326
        %v385 = vpop.permute.xlu0 %384
        %388 = vset.pattern.permute.xlu0 0
        %389 = vperm.xlu0 %388, %v327
        %v390 = vpop.permute.xlu0 %389
        %393 = vset.pattern.permute.xlu0 0
        %394 = vperm.xlu0 %393, %v328
        %v395 = vpop.permute.xlu0 %394
        %398 = vset.pattern.permute.xlu0 0
        %399 = vperm.xlu0 %398, %v329
        %v400 = vpop.permute.xlu0 %399
        %403 = vset.pattern.permute.xlu0 0
        %404 = vperm.xlu0 %403, %v330
        %v405 = vpop.permute.xlu0 %404
        %408 = vset.pattern.permute.xlu0 0
        %409 = vperm.xlu0 %408, %v331
        %v410 = vpop.permute.xlu0 %409
        %413 = vset.pattern.permute.xlu0 0
        %414 = vperm.xlu0 %413, %v332
        %v415 = vpop.permute.xlu0 %414
        %418 = vset.pattern.permute.xlu0 0
        %419 = vperm.xlu0 %418, %v333
        %v420 = vpop.permute.xlu0 %419
        %423 = vset.pattern.permute.xlu0 0
        %424 = vperm.xlu0 %423, %v334
        %v425 = vpop.permute.xlu0 %424
        %vm427 = vcmask 130048
        %v429 = vsel %vm427, %v299, 0
        %v432 = vsel %vm427, %v300, 0
        %v435 = vsel %vm427, %v301, 0
        %v438 = vsel %vm427, %v302, 0
        %v441 = vsel %vm427, %v303, 0
        %v444 = vsel %vm427, %v304, 0
        %v447 = vsel %vm427, %v305, 0
        %v450 = vsel %vm427, %v306, 0
        %v453 = vsel %vm427, %v307, 0
        %v456 = vsel %vm427, %v308, 0
        %v459 = vsel %vm427, %v309, 0
        %v462 = vsel %vm427, %v310, 0
        %464 = vmatprep.subr.mxu0 0.0
        %465 = vmatpush1.msra.mxu0 0.0
        %466 = vmatprep.subr.mxu0 0.0
        %467 = vmatpush1.msra.mxu0 0.0
        %468 = vmatprep.subr.mxu0 0.0
        %469 = vmatpush1.msra.mxu0 0.0
        %470 = vmatprep.subr.mxu0 0.0
        %471 = vmatpush1.msra.mxu0 0.0
        %472 = vmatprep.subr.mxu0 0.0
        %473 = vmatpush1.msra.mxu0 0.0
        %474 = vmatprep.subr.mxu0 0.0
        %475 = vmatpush1.msra.mxu0 0.0
        %476 = vmatprep.subr.mxu0 0.0
        %477 = vmatpush1.msra.mxu0 0.0
        %478 = vmatprep.subr.mxu0 0.0
        %479 = vmatpush1.msra.mxu0 0.0
        %480 = vmatprep.subr.mxu0 0.0
        %481 = vmatpush1.msra.mxu0 0.0
        %482 = vmatprep.subr.mxu0 0.0
        %483 = vmatpush1.msra.mxu0 0.0
        %484 = vmatprep.subr.mxu0 0.0
        %485 = vmatpush1.msra.mxu0 0.0
        %486 = vmatprep.subr.mxu0 0.0
        %487 = vmatpush1.msra.mxu0 0.0
        %488 = vmatprep.subr.mxu0 0.0
        %489 = vmatpush1.msra.mxu0 0.0
        %490 = vmatprep.subr.mxu0 0.0
        %491 = vmatpush1.msra.mxu0 0.0
        %492 = vmatprep.subr.mxu0 %v364
        %493 = vmatpush1.msra.mxu0 %v363
        %494 = vmatprep.subr.mxu0 %v360
        %495 = vmatpush1.msra.mxu0 %v359
        %496 = vmatprep.subr.mxu0 0.0
        %497 = vmatpush2.msra.mxu0 0.0
        %498 = vmatprep.subr.mxu0 0.0
        %499 = vmatpush2.msra.mxu0 0.0
        %500 = vmatprep.subr.mxu0 0.0
        %501 = vmatpush2.msra.mxu0 0.0
        %502 = vmatprep.subr.mxu0 0.0
        %503 = vmatpush2.msra.mxu0 0.0
        %504 = vmatprep.subr.mxu0 0.0
        %505 = vmatpush2.msra.mxu0 0.0
        %506 = vmatprep.subr.mxu0 0.0
        %507 = vmatpush2.msra.mxu0 0.0
        %508 = vmatprep.subr.mxu0 0.0
        %509 = vmatpush2.msra.mxu0 0.0
        %510 = vmatprep.subr.mxu0 0.0
        %511 = vmatpush2.msra.mxu0 0.0
        %512 = vmatprep.subr.mxu0 0.0
        %513 = vmatpush2.msra.mxu0 0.0
        %514 = vmatprep.subr.mxu0 0.0
        %515 = vmatpush2.msra.mxu0 0.0
        %516 = vmatprep.subr.mxu0 0.0
        %517 = vmatpush2.msra.mxu0 0.0
        %518 = vmatprep.subr.mxu0 0.0
        %519 = vmatpush2.msra.mxu0 0.0
        %520 = vmatprep.subr.mxu0 0.0
        %521 = vmatpush2.msra.mxu0 0.0
        %522 = vmatprep.subr.mxu0 0.0
        %523 = vmatpush2.msra.mxu0 0.0
        %524 = vmatprep.subr.mxu0 0.0
        %525 = vmatpush2.msra.mxu0 0.0
        %526 = vmatprep.subr.mxu0 0.0
        %527 = vmatpush2.msra.mxu0 0.0
        %528 = vmatprep.mubr.f32.mxu0 0.0
        %529 = vmatmul.mubr.f32.gmra.mxu0 %v429
        %v530 = vpop.f32.mrf.mxu0
        %v531 = vadd.f32 %v370, %v530
        %v532 = vpop.f32.mrf.mxu0
        %v533 = vadd.f32 %v370, %v532
        %534 = vmatprep.mubr.f32.mxu0 0.0
        %535 = vmatmul.mubr.f32.gmra.mxu0 %v432
        %v536 = vpop.f32.mrf.mxu0
        %v537 = vadd.f32 %v375, %v536
        %v538 = vpop.f32.mrf.mxu0
        %v539 = vadd.f32 %v375, %v538
        %540 = vmatprep.mubr.f32.mxu0 0.0
        %541 = vmatmul.mubr.f32.gmra.mxu0 %v435
        %v542 = vpop.f32.mrf.mxu0
        %v543 = vadd.f32 %v380, %v542
        %v544 = vpop.f32.mrf.mxu0
        %v545 = vadd.f32 %v380, %v544
        %546 = vmatprep.mubr.f32.mxu0 0.0
        %547 = vmatmul.mubr.f32.gmra.mxu0 %v438
        %v548 = vpop.f32.mrf.mxu0
        %v549 = vadd.f32 %v385, %v548
        %v550 = vpop.f32.mrf.mxu0
        %v551 = vadd.f32 %v385, %v550
        %552 = vmatprep.mubr.f32.mxu0 0.0
        %553 = vmatmul.mubr.f32.gmra.mxu0 %v441
        %v554 = vpop.f32.mrf.mxu0
        %v555 = vadd.f32 %v390, %v554
        %v556 = vpop.f32.mrf.mxu0
        %v557 = vadd.f32 %v390, %v556
        %558 = vmatprep.mubr.f32.mxu0 0.0
        %559 = vmatmul.mubr.f32.gmra.mxu0 %v444
        %v560 = vpop.f32.mrf.mxu0
        %v561 = vadd.f32 %v395, %v560
        %v562 = vpop.f32.mrf.mxu0
        %v563 = vadd.f32 %v395, %v562
        %564 = vmatprep.mubr.f32.mxu0 0.0
        %565 = vmatmul.mubr.f32.gmra.mxu0 %v447
        %v566 = vpop.f32.mrf.mxu0
        %v567 = vadd.f32 %v400, %v566
        %v568 = vpop.f32.mrf.mxu0
        %v569 = vadd.f32 %v400, %v568
        %570 = vmatprep.mubr.f32.mxu0 0.0
        %571 = vmatmul.mubr.f32.gmra.mxu0 %v450
        %v572 = vpop.f32.mrf.mxu0
        %v573 = vadd.f32 %v405, %v572
        %v574 = vpop.f32.mrf.mxu0
        %v575 = vadd.f32 %v405, %v574
        %576 = vmatprep.mubr.f32.mxu0 0.0
        %577 = vmatmul.mubr.f32.gmra.mxu0 %v453
        %v578 = vpop.f32.mrf.mxu0
        %v579 = vadd.f32 %v410, %v578
        %v580 = vpop.f32.mrf.mxu0
        %v581 = vadd.f32 %v410, %v580
        %582 = vmatprep.mubr.f32.mxu0 0.0
        %583 = vmatmul.mubr.f32.gmra.mxu0 %v456
        %v584 = vpop.f32.mrf.mxu0
        %v585 = vadd.f32 %v415, %v584
        %v586 = vpop.f32.mrf.mxu0
        %v587 = vadd.f32 %v415, %v586
        %588 = vmatprep.mubr.f32.mxu0 0.0
        %589 = vmatmul.mubr.f32.gmra.mxu0 %v459
        %v590 = vpop.f32.mrf.mxu0
        %v591 = vadd.f32 %v420, %v590
        %v592 = vpop.f32.mrf.mxu0
        %v593 = vadd.f32 %v420, %v592
        %594 = vmatprep.mubr.f32.mxu0 0.0
        %595 = vmatmul.mubr.f32.gmra.mxu0 %v462
        %v596 = vpop.f32.mrf.mxu0
        %v597 = vadd.f32 %v425, %v596
        %v598 = vpop.f32.mrf.mxu0
        %v599 = vadd.f32 %v425, %v598
        %600 = vdwg.mxu0
        %601 = vmatprep.subr.mxu0 0.0
        %602 = vmatpush1.msra.mxu0 0.0
        %603 = vmatprep.subr.mxu0 0.0
        %604 = vmatpush1.msra.mxu0 0.0
        %605 = vmatprep.subr.mxu0 0.0
        %606 = vmatpush1.msra.mxu0 0.0
        %607 = vmatprep.subr.mxu0 0.0
        %608 = vmatpush1.msra.mxu0 0.0
        %609 = vmatprep.subr.mxu0 0.0
        %610 = vmatpush1.msra.mxu0 0.0
        %611 = vmatprep.subr.mxu0 0.0
        %612 = vmatpush1.msra.mxu0 0.0
        %613 = vmatprep.subr.mxu0 0.0
        %614 = vmatpush1.msra.mxu0 0.0
        %615 = vmatprep.subr.mxu0 0.0
        %616 = vmatpush1.msra.mxu0 0.0
        %617 = vmatprep.subr.mxu0 0.0
        %618 = vmatpush1.msra.mxu0 0.0
        %619 = vmatprep.subr.mxu0 0.0
        %620 = vmatpush1.msra.mxu0 0.0
        %621 = vmatprep.subr.mxu0 0.0
        %622 = vmatpush1.msra.mxu0 0.0
        %623 = vmatprep.subr.mxu0 0.0
        %624 = vmatpush1.msra.mxu0 0.0
        %625 = vmatprep.subr.mxu0 0.0
        %626 = vmatpush1.msra.mxu0 0.0
        %627 = vmatprep.subr.mxu0 0.0
        %628 = vmatpush1.msra.mxu0 0.0
        %629 = vmatprep.subr.mxu0 %v366
        %630 = vmatpush1.msra.mxu0 %v365
        %631 = vmatprep.subr.mxu0 %v362
        %632 = vmatpush1.msra.mxu0 %v361
        %633 = vmatprep.subr.mxu0 0.0
        %634 = vmatpush2.msra.mxu0 0.0
        %635 = vmatprep.subr.mxu0 0.0
        %636 = vmatpush2.msra.mxu0 0.0
        %637 = vmatprep.subr.mxu0 0.0
        %638 = vmatpush2.msra.mxu0 0.0
        %639 = vmatprep.subr.mxu0 0.0
        %640 = vmatpush2.msra.mxu0 0.0
        %641 = vmatprep.subr.mxu0 0.0
        %642 = vmatpush2.msra.mxu0 0.0
        %643 = vmatprep.subr.mxu0 0.0
        %644 = vmatpush2.msra.mxu0 0.0
        %645 = vmatprep.subr.mxu0 0.0
        %646 = vmatpush2.msra.mxu0 0.0
        %647 = vmatprep.subr.mxu0 0.0
        %648 = vmatpush2.msra.mxu0 0.0
        %649 = vmatprep.subr.mxu0 0.0
        %650 = vmatpush2.msra.mxu0 0.0
        %651 = vmatprep.subr.mxu0 0.0
        %652 = vmatpush2.msra.mxu0 0.0
        %653 = vmatprep.subr.mxu0 0.0
        %654 = vmatpush2.msra.mxu0 0.0
        %655 = vmatprep.subr.mxu0 0.0
        %656 = vmatpush2.msra.mxu0 0.0
        %657 = vmatprep.subr.mxu0 0.0
        %658 = vmatpush2.msra.mxu0 0.0
        %659 = vmatprep.subr.mxu0 0.0
        %660 = vmatpush2.msra.mxu0 0.0
        %661 = vmatprep.subr.mxu0 0.0
        %662 = vmatpush2.msra.mxu0 0.0
        %663 = vmatprep.subr.mxu0 0.0
        %664 = vmatpush2.msra.mxu0 0.0
        %665 = vmatprep.mubr.f32.mxu0 0.0
        %666 = vmatmul.mubr.f32.gmra.mxu0 %v429
        %v667 = vpop.f32.mrf.mxu0
        %v668 = vadd.f32 %v370, %v667
        %v669 = vpop.f32.mrf.mxu0
        %v670 = vadd.f32 %v370, %v669
        %671 = vmatprep.mubr.f32.mxu0 0.0
        %672 = vmatmul.mubr.f32.gmra.mxu0 %v432
        %v673 = vpop.f32.mrf.mxu0
        %v674 = vadd.f32 %v375, %v673
        %v675 = vpop.f32.mrf.mxu0
        %v676 = vadd.f32 %v375, %v675
        %677 = vmatprep.mubr.f32.mxu0 0.0
        %678 = vmatmul.mubr.f32.gmra.mxu0 %v435
        %v679 = vpop.f32.mrf.mxu0
        %v680 = vadd.f32 %v380, %v679
        %v681 = vpop.f32.mrf.mxu0
        %v682 = vadd.f32 %v380, %v681
        %683 = vmatprep.mubr.f32.mxu0 0.0
        %684 = vmatmul.mubr.f32.gmra.mxu0 %v438
        %v685 = vpop.f32.mrf.mxu0
        %v686 = vadd.f32 %v385, %v685
        %v687 = vpop.f32.mrf.mxu0
        %v688 = vadd.f32 %v385, %v687
        %689 = vmatprep.mubr.f32.mxu0 0.0
        %690 = vmatmul.mubr.f32.gmra.mxu0 %v441
        %v691 = vpop.f32.mrf.mxu0
        %v692 = vadd.f32 %v390, %v691
        %v693 = vpop.f32.mrf.mxu0
        %v694 = vadd.f32 %v390, %v693
        %695 = vmatprep.mubr.f32.mxu0 0.0
        %696 = vmatmul.mubr.f32.gmra.mxu0 %v444
        %v697 = vpop.f32.mrf.mxu0
        %v698 = vadd.f32 %v395, %v697
        %v699 = vpop.f32.mrf.mxu0
        %v700 = vadd.f32 %v395, %v699
        %701 = vmatprep.mubr.f32.mxu0 0.0
        %702 = vmatmul.mubr.f32.gmra.mxu0 %v447
        %v703 = vpop.f32.mrf.mxu0
        %v704 = vadd.f32 %v400, %v703
        %v705 = vpop.f32.mrf.mxu0
        %v706 = vadd.f32 %v400, %v705
        %707 = vmatprep.mubr.f32.mxu0 0.0
        %708 = vmatmul.mubr.f32.gmra.mxu0 %v450
        %v709 = vpop.f32.mrf.mxu0
        %v710 = vadd.f32 %v405, %v709
        %v711 = vpop.f32.mrf.mxu0
        %v712 = vadd.f32 %v405, %v711
        %713 = vmatprep.mubr.f32.mxu0 0.0
        %714 = vmatmul.mubr.f32.gmra.mxu0 %v453
        %v715 = vpop.f32.mrf.mxu0
        %v716 = vadd.f32 %v410, %v715
        %v717 = vpop.f32.mrf.mxu0
        %v718 = vadd.f32 %v410, %v717
        %719 = vmatprep.mubr.f32.mxu0 0.0
        %720 = vmatmul.mubr.f32.gmra.mxu0 %v456
        %v721 = vpop.f32.mrf.mxu0
        %v722 = vadd.f32 %v415, %v721
        %v723 = vpop.f32.mrf.mxu0
        %v724 = vadd.f32 %v415, %v723
        %725 = vmatprep.mubr.f32.mxu0 0.0
        %726 = vmatmul.mubr.f32.gmra.mxu0 %v459
        %v727 = vpop.f32.mrf.mxu0
        %v728 = vadd.f32 %v420, %v727
        %v729 = vpop.f32.mrf.mxu0
        %v730 = vadd.f32 %v420, %v729
        %731 = vmatprep.mubr.f32.mxu0 0.0
        %732 = vmatmul.mubr.f32.gmra.mxu0 %v462
        %v733 = vpop.f32.mrf.mxu0
        %v734 = vadd.f32 %v425, %v733
        %v735 = vpop.f32.mrf.mxu0
        %v736 = vadd.f32 %v425, %v735
        %737 = vdwg.mxu0
        %738 = vst [vmem:[#allocation2] sm:$0xff] %v531
        %739 = vst [vmem:[#allocation2 + $0x8] sm:$0xff] %v533
        %740 = vst [vmem:[#allocation2 + $0x10] sm:$0xff] %v668
        %741 = vst [vmem:[#allocation2 + $0x18] sm:$0xff] %v670
        %742 = vst [vmem:[#allocation2 + $0x20] sm:$0xff] %v537
        %743 = vst [vmem:[#allocation2 + $0x28] sm:$0xff] %v539
        %744 = vst [vmem:[#allocation2 + $0x30] sm:$0xff] %v674
        %745 = vst [vmem:[#allocation2 + $0x38] sm:$0xff] %v676
        %746 = vst [vmem:[#allocation2 + $0x40] sm:$0xff] %v543
        %747 = vst [vmem:[#allocation2 + $0x48] sm:$0xff] %v545
        %748 = vst [vmem:[#allocation2 + $0x50] sm:$0xff] %v680
        %749 = vst [vmem:[#allocation2 + $0x58] sm:$0xff] %v682
        %750 = vst [vmem:[#allocation2 + $0x60] sm:$0xff] %v549
        %751 = vst [vmem:[#allocation2 + $0x68] sm:$0xff] %v551
        %752 = vst [vmem:[#allocation2 + $0x70] sm:$0xff] %v686
        %753 = vst [vmem:[#allocation2 + $0x78] sm:$0xff] %v688
        %754 = vst [vmem:[#allocation2 + $0x80] sm:$0xff] %v555
        %755 = vst [vmem:[#allocation2 + $0x88] sm:$0xff] %v557
        %756 = vst [vmem:[#allocation2 + $0x90] sm:$0xff] %v692
        %757 = vst [vmem:[#allocation2 + $0x98] sm:$0xff] %v694
        %758 = vst [vmem:[#allocation2 + $0xa0] sm:$0xff] %v561
        %759 = vst [vmem:[#allocation2 + $0xa8] sm:$0xff] %v563
        %760 = vst [vmem:[#allocation2 + $0xb0] sm:$0xff] %v698
        %761 = vst [vmem:[#allocation2 + $0xb8] sm:$0xff] %v700
        %762 = vst [vmem:[#allocation2 + $0xc0] sm:$0xff] %v567
        %763 = vst [vmem:[#allocation2 + $0xc8] sm:$0xff] %v569
        %764 = vst [vmem:[#allocation2 + $0xd0] sm:$0xff] %v704
        %765 = vst [vmem:[#allocation2 + $0xd8] sm:$0xff] %v706
        %766 = vst [vmem:[#allocation2 + $0xe0] sm:$0xff] %v573
        %767 = vst [vmem:[#allocation2 + $0xe8] sm:$0xff] %v575
        %768 = vst [vmem:[#allocation2 + $0xf0] sm:$0xff] %v710
        %769 = vst [vmem:[#allocation2 + $0xf8] sm:$0xff] %v712
        %770 = vst [vmem:[#allocation2 + $0x100] sm:$0xff] %v579
        %771 = vst [vmem:[#allocation2 + $0x108] sm:$0xff] %v581
        %772 = vst [vmem:[#allocation2 + $0x110] sm:$0xff] %v716
        %773 = vst [vmem:[#allocation2 + $0x118] sm:$0xff] %v718
        %774 = vst [vmem:[#allocation2 + $0x120] sm:$0xff] %v585
        %775 = vst [vmem:[#allocation2 + $0x128] sm:$0xff] %v587
        %776 = vst [vmem:[#allocation2 + $0x130] sm:$0xff] %v722
        %777 = vst [vmem:[#allocation2 + $0x138] sm:$0xff] %v724
        %778 = vst [vmem:[#allocation2 + $0x140] sm:$0xff] %v591
        %779 = vst [vmem:[#allocation2 + $0x148] sm:$0xff] %v593
        %780 = vst [vmem:[#allocation2 + $0x150] sm:$0xff] %v728
        %781 = vst [vmem:[#allocation2 + $0x158] sm:$0xff] %v730
        %782 = vst [vmem:[#allocation2 + $0x160] sm:$0xff] %v597
        %783 = vst [vmem:[#allocation2 + $0x168] sm:$0xff] %v599
        %784 = vst [vmem:[#allocation2 + $0x170] sm:$0xff] %v734
        %785 = vst [vmem:[#allocation2 + $0x178] sm:$0xff] %v736
        %s786 = scalar_lea.vmem %s266, 64 [#allocation3]
        %v787 = vld [vmem:[%s786] sm:$0xff]
        %v788 = vld [vmem:[%s786 + $0x8] sm:$0xff]
        %v789 = vld [vmem:[%s786 + $0x10] sm:$0xff]
        %v790 = vld [vmem:[%s786 + $0x18] sm:$0xff]
        %v791 = vld [vmem:[%s786 + $0x20] sm:$0xff]
        %v792 = vld [vmem:[%s786 + $0x28] sm:$0xff]
        %v793 = vld [vmem:[%s786 + $0x30] sm:$0xff]
        %v794 = vld [vmem:[%s786 + $0x38] sm:$0xff]
        %795 = vmatprep.subr.mxu0 0.0
        %796 = vmatpush1.msra.mxu0 0.0
        %797 = vmatprep.subr.mxu0 0.0
        %798 = vmatpush1.msra.mxu0 0.0
        %799 = vmatprep.subr.mxu0 0.0
        %800 = vmatpush1.msra.mxu0 0.0
        %801 = vmatprep.subr.mxu0 0.0
        %802 = vmatpush1.msra.mxu0 0.0
        %803 = vmatprep.subr.mxu0 0.0
        %804 = vmatpush1.msra.mxu0 0.0
        %805 = vmatprep.subr.mxu0 0.0
        %806 = vmatpush1.msra.mxu0 0.0
        %807 = vmatprep.subr.mxu0 0.0
        %808 = vmatpush1.msra.mxu0 0.0
        %809 = vmatprep.subr.mxu0 0.0
        %810 = vmatpush1.msra.mxu0 0.0
        %811 = vmatprep.subr.mxu0 0.0
        %812 = vmatpush1.msra.mxu0 0.0
        %813 = vmatprep.subr.mxu0 0.0
        %814 = vmatpush1.msra.mxu0 0.0
        %815 = vmatprep.subr.mxu0 0.0
        %816 = vmatpush1.msra.mxu0 0.0
        %817 = vmatprep.subr.mxu0 0.0
        %818 = vmatpush1.msra.mxu0 0.0
        %819 = vmatprep.subr.mxu0 0.0
        %820 = vmatpush1.msra.mxu0 0.0
        %821 = vmatprep.subr.mxu0 0.0
        %822 = vmatpush1.msra.mxu0 0.0
        %823 = vmatprep.subr.mxu0 %v792
        %824 = vmatpush1.msra.mxu0 %v791
        %825 = vmatprep.subr.mxu0 %v788
        %826 = vmatpush1.msra.mxu0 %v787
        %827 = vmatprep.subr.mxu0 0.0
        %828 = vmatpush2.msra.mxu0 0.0
        %829 = vmatprep.subr.mxu0 0.0
        %830 = vmatpush2.msra.mxu0 0.0
        %831 = vmatprep.subr.mxu0 0.0
        %832 = vmatpush2.msra.mxu0 0.0
        %833 = vmatprep.subr.mxu0 0.0
        %834 = vmatpush2.msra.mxu0 0.0
        %835 = vmatprep.subr.mxu0 0.0
        %836 = vmatpush2.msra.mxu0 0.0
        %837 = vmatprep.subr.mxu0 0.0
        %838 = vmatpush2.msra.mxu0 0.0
        %839 = vmatprep.subr.mxu0 0.0
        %840 = vmatpush2.msra.mxu0 0.0
        %841 = vmatprep.subr.mxu0 0.0
        %842 = vmatpush2.msra.mxu0 0.0
        %843 = vmatprep.subr.mxu0 0.0
        %844 = vmatpush2.msra.mxu0 0.0
        %845 = vmatprep.subr.mxu0 0.0
        %846 = vmatpush2.msra.mxu0 0.0
        %847 = vmatprep.subr.mxu0 0.0
        %848 = vmatpush2.msra.mxu0 0.0
        %849 = vmatprep.subr.mxu0 0.0
        %850 = vmatpush2.msra.mxu0 0.0
        %851 = vmatprep.subr.mxu0 0.0
        %852 = vmatpush2.msra.mxu0 0.0
        %853 = vmatprep.subr.mxu0 0.0
        %854 = vmatpush2.msra.mxu0 0.0
        %855 = vmatprep.subr.mxu0 0.0
        %856 = vmatpush2.msra.mxu0 0.0
        %857 = vmatprep.subr.mxu0 0.0
        %858 = vmatpush2.msra.mxu0 0.0
        %859 = vmatprep.mubr.f32.mxu0 0.0
        %860 = vmatmul.mubr.f32.gmra.mxu0 %v429
        %v861 = vpop.f32.mrf.mxu0
        %v862 = vadd.f32 %v370, %v861
        %v863 = vpop.f32.mrf.mxu0
        %v864 = vadd.f32 %v370, %v863
        %865 = vmatprep.mubr.f32.mxu0 0.0
        %866 = vmatmul.mubr.f32.gmra.mxu0 %v432
        %v867 = vpop.f32.mrf.mxu0
        %v868 = vadd.f32 %v375, %v867
        %v869 = vpop.f32.mrf.mxu0
        %v870 = vadd.f32 %v375, %v869
        %871 = vmatprep.mubr.f32.mxu0 0.0
        %872 = vmatmul.mubr.f32.gmra.mxu0 %v435
        %v873 = vpop.f32.mrf.mxu0
        %v874 = vadd.f32 %v380, %v873
        %v875 = vpop.f32.mrf.mxu0
        %v876 = vadd.f32 %v380, %v875
        %877 = vmatprep.mubr.f32.mxu0 0.0
        %878 = vmatmul.mubr.f32.gmra.mxu0 %v438
        %v879 = vpop.f32.mrf.mxu0
        %v880 = vadd.f32 %v385, %v879
        %v881 = vpop.f32.mrf.mxu0
        %v882 = vadd.f32 %v385, %v881
        %883 = vmatprep.mubr.f32.mxu0 0.0
        %884 = vmatmul.mubr.f32.gmra.mxu0 %v441
        %v885 = vpop.f32.mrf.mxu0
        %v886 = vadd.f32 %v390, %v885
        %v887 = vpop.f32.mrf.mxu0
        %v888 = vadd.f32 %v390, %v887
        %889 = vmatprep.mubr.f32.mxu0 0.0
        %890 = vmatmul.mubr.f32.gmra.mxu0 %v444
        %v891 = vpop.f32.mrf.mxu0
        %v892 = vadd.f32 %v395, %v891
        %v893 = vpop.f32.mrf.mxu0
        %v894 = vadd.f32 %v395, %v893
        %895 = vmatprep.mubr.f32.mxu0 0.0
        %896 = vmatmul.mubr.f32.gmra.mxu0 %v447
        %v897 = vpop.f32.mrf.mxu0
        %v898 = vadd.f32 %v400, %v897
        %v899 = vpop.f32.mrf.mxu0
        %v900 = vadd.f32 %v400, %v899
        %901 = vmatprep.mubr.f32.mxu0 0.0
        %902 = vmatmul.mubr.f32.gmra.mxu0 %v450
        %v903 = vpop.f32.mrf.mxu0
        %v904 = vadd.f32 %v405, %v903
        %v905 = vpop.f32.mrf.mxu0
        %v906 = vadd.f32 %v405, %v905
        %907 = vmatprep.mubr.f32.mxu0 0.0
        %908 = vmatmul.mubr.f32.gmra.mxu0 %v453
        %v909 = vpop.f32.mrf.mxu0
        %v910 = vadd.f32 %v410, %v909
        %v911 = vpop.f32.mrf.mxu0
        %v912 = vadd.f32 %v410, %v911
        %913 = vmatprep.mubr.f32.mxu0 0.0
        %914 = vmatmul.mubr.f32.gmra.mxu0 %v456
        %v915 = vpop.f32.mrf.mxu0
        %v916 = vadd.f32 %v415, %v915
        %v917 = vpop.f32.mrf.mxu0
        %v918 = vadd.f32 %v415, %v917
        %919 = vmatprep.mubr.f32.mxu0 0.0
        %920 = vmatmul.mubr.f32.gmra.mxu0 %v459
        %v921 = vpop.f32.mrf.mxu0
        %v922 = vadd.f32 %v420, %v921
        %v923 = vpop.f32.mrf.mxu0
        %v924 = vadd.f32 %v420, %v923
        %925 = vmatprep.mubr.f32.mxu0 0.0
        %926 = vmatmul.mubr.f32.gmra.mxu0 %v462
        %v927 = vpop.f32.mrf.mxu0
        %v928 = vadd.f32 %v425, %v927
        %v929 = vpop.f32.mrf.mxu0
        %v930 = vadd.f32 %v425, %v929
        %931 = vdwg.mxu0
        %932 = vmatprep.subr.mxu0 0.0
        %933 = vmatpush1.msra.mxu0 0.0
        %934 = vmatprep.subr.mxu0 0.0
        %935 = vmatpush1.msra.mxu0 0.0
        %936 = vmatprep.subr.mxu0 0.0
        %937 = vmatpush1.msra.mxu0 0.0
        %938 = vmatprep.subr.mxu0 0.0
        %939 = vmatpush1.msra.mxu0 0.0
        %940 = vmatprep.subr.mxu0 0.0
        %941 = vmatpush1.msra.mxu0 0.0
        %942 = vmatprep.subr.mxu0 0.0
        %943 = vmatpush1.msra.mxu0 0.0
        %944 = vmatprep.subr.mxu0 0.0
        %945 = vmatpush1.msra.mxu0 0.0
        %946 = vmatprep.subr.mxu0 0.0
        %947 = vmatpush1.msra.mxu0 0.0
        %948 = vmatprep.subr.mxu0 0.0
        %949 = vmatpush1.msra.mxu0 0.0
        %950 = vmatprep.subr.mxu0 0.0
        %951 = vmatpush1.msra.mxu0 0.0
        %952 = vmatprep.subr.mxu0 0.0
        %953 = vmatpush1.msra.mxu0 0.0
        %954 = vmatprep.subr.mxu0 0.0
        %955 = vmatpush1.msra.mxu0 0.0
        %956 = vmatprep.subr.mxu0 0.0
        %957 = vmatpush1.msra.mxu0 0.0
        %958 = vmatprep.subr.mxu0 0.0
        %959 = vmatpush1.msra.mxu0 0.0
        %960 = vmatprep.subr.mxu0 %v794
        %961 = vmatpush1.msra.mxu0 %v793
        %962 = vmatprep.subr.mxu0 %v790
        %963 = vmatpush1.msra.mxu0 %v789
        %964 = vmatprep.subr.mxu0 0.0
        %965 = vmatpush2.msra.mxu0 0.0
        %966 = vmatprep.subr.mxu0 0.0
        %967 = vmatpush2.msra.mxu0 0.0
        %968 = vmatprep.subr.mxu0 0.0
        %969 = vmatpush2.msra.mxu0 0.0
        %970 = vmatprep.subr.mxu0 0.0
        %971 = vmatpush2.msra.mxu0 0.0
        %972 = vmatprep.subr.mxu0 0.0
        %973 = vmatpush2.msra.mxu0 0.0
        %974 = vmatprep.subr.mxu0 0.0
        %975 = vmatpush2.msra.mxu0 0.0
        %976 = vmatprep.subr.mxu0 0.0
        %977 = vmatpush2.msra.mxu0 0.0
        %978 = vmatprep.subr.mxu0 0.0
        %979 = vmatpush2.msra.mxu0 0.0
        %980 = vmatprep.subr.mxu0 0.0
        %981 = vmatpush2.msra.mxu0 0.0
        %982 = vmatprep.subr.mxu0 0.0
        %983 = vmatpush2.msra.mxu0 0.0
        %984 = vmatprep.subr.mxu0 0.0
        %985 = vmatpush2.msra.mxu0 0.0
        %986 = vmatprep.subr.mxu0 0.0
        %987 = vmatpush2.msra.mxu0 0.0
        %988 = vmatprep.subr.mxu0 0.0
        %989 = vmatpush2.msra.mxu0 0.0
        %990 = vmatprep.subr.mxu0 0.0
        %991 = vmatpush2.msra.mxu0 0.0
        %992 = vmatprep.subr.mxu0 0.0
        %993 = vmatpush2.msra.mxu0 0.0
        %994 = vmatprep.subr.mxu0 0.0
        %995 = vmatpush2.msra.mxu0 0.0
        %996 = vmatprep.mubr.f32.mxu0 0.0
        %997 = vmatmul.mubr.f32.gmra.mxu0 %v429
        %v998 = vpop.f32.mrf.mxu0
        %v999 = vadd.f32 %v370, %v998
        %v1000 = vpop.f32.mrf.mxu0
        %v1001 = vadd.f32 %v370, %v1000
        %1002 = vmatprep.mubr.f32.mxu0 0.0
        %1003 = vmatmul.mubr.f32.gmra.mxu0 %v432
        %v1004 = vpop.f32.mrf.mxu0
        %v1005 = vadd.f32 %v375, %v1004
        %v1006 = vpop.f32.mrf.mxu0
        %v1007 = vadd.f32 %v375, %v1006
        %1008 = vmatprep.mubr.f32.mxu0 0.0
        %1009 = vmatmul.mubr.f32.gmra.mxu0 %v435
        %v1010 = vpop.f32.mrf.mxu0
        %v1011 = vadd.f32 %v380, %v1010
        %v1012 = vpop.f32.mrf.mxu0
        %v1013 = vadd.f32 %v380, %v1012
        %1014 = vmatprep.mubr.f32.mxu0 0.0
        %1015 = vmatmul.mubr.f32.gmra.mxu0 %v438
        %v1016 = vpop.f32.mrf.mxu0
        %v1017 = vadd.f32 %v385, %v1016
        %v1018 = vpop.f32.mrf.mxu0
        %v1019 = vadd.f32 %v385, %v1018
        %1020 = vmatprep.mubr.f32.mxu0 0.0
        %1021 = vmatmul.mubr.f32.gmra.mxu0 %v441
        %v1022 = vpop.f32.mrf.mxu0
        %v1023 = vadd.f32 %v390, %v1022
        %v1024 = vpop.f32.mrf.mxu0
        %v1025 = vadd.f32 %v390, %v1024
        %1026 = vmatprep.mubr.f32.mxu0 0.0
        %1027 = vmatmul.mubr.f32.gmra.mxu0 %v444
        %v1028 = vpop.f32.mrf.mxu0
        %v1029 = vadd.f32 %v395, %v1028
        %v1030 = vpop.f32.mrf.mxu0
        %v1031 = vadd.f32 %v395, %v1030
        %1032 = vmatprep.mubr.f32.mxu0 0.0
        %1033 = vmatmul.mubr.f32.gmra.mxu0 %v447
        %v1034 = vpop.f32.mrf.mxu0
        %v1035 = vadd.f32 %v400, %v1034
        %v1036 = vpop.f32.mrf.mxu0
        %v1037 = vadd.f32 %v400, %v1036
        %1038 = vmatprep.mubr.f32.mxu0 0.0
        %1039 = vmatmul.mubr.f32.gmra.mxu0 %v450
        %v1040 = vpop.f32.mrf.mxu0
        %v1041 = vadd.f32 %v405, %v1040
        %v1042 = vpop.f32.mrf.mxu0
        %v1043 = vadd.f32 %v405, %v1042
        %1044 = vmatprep.mubr.f32.mxu0 0.0
        %1045 = vmatmul.mubr.f32.gmra.mxu0 %v453
        %v1046 = vpop.f32.mrf.mxu0
        %v1047 = vadd.f32 %v410, %v1046
        %v1048 = vpop.f32.mrf.mxu0
        %v1049 = vadd.f32 %v410, %v1048
        %1050 = vmatprep.mubr.f32.mxu0 0.0
        %1051 = vmatmul.mubr.f32.gmra.mxu0 %v456
        %v1052 = vpop.f32.mrf.mxu0
        %v1053 = vadd.f32 %v415, %v1052
        %v1054 = vpop.f32.mrf.mxu0
        %v1055 = vadd.f32 %v415, %v1054
        %1056 = vmatprep.mubr.f32.mxu0 0.0
        %1057 = vmatmul.mubr.f32.gmra.mxu0 %v459
        %v1058 = vpop.f32.mrf.mxu0
        %v1059 = vadd.f32 %v420, %v1058
        %v1060 = vpop.f32.mrf.mxu0
        %v1061 = vadd.f32 %v420, %v1060
        %1062 = vmatprep.mubr.f32.mxu0 0.0
        %1063 = vmatmul.mubr.f32.gmra.mxu0 %v462
        %v1064 = vpop.f32.mrf.mxu0
        %v1065 = vadd.f32 %v425, %v1064
        %v1066 = vpop.f32.mrf.mxu0
        %v1067 = vadd.f32 %v425, %v1066
        %1068 = vdwg.mxu0
        %s1069 = scalar_lea.vmem [#allocation2], 384
        %1070 = vst [vmem:[%s1069] sm:$0xff] %v862
        %1071 = vst [vmem:[%s1069 + $0x8] sm:$0xff] %v864
        %1072 = vst [vmem:[%s1069 + $0x10] sm:$0xff] %v999
        %1073 = vst [vmem:[%s1069 + $0x18] sm:$0xff] %v1001
        %1074 = vst [vmem:[%s1069 + $0x20] sm:$0xff] %v868
        %1075 = vst [vmem:[%s1069 + $0x28] sm:$0xff] %v870
        %1076 = vst [vmem:[%s1069 + $0x30] sm:$0xff] %v1005
        %1077 = vst [vmem:[%s1069 + $0x38] sm:$0xff] %v1007
        %1078 = vst [vmem:[%s1069 + $0x40] sm:$0xff] %v874
        %1079 = vst [vmem:[%s1069 + $0x48] sm:$0xff] %v876
        %1080 = vst [vmem:[%s1069 + $0x50] sm:$0xff] %v1011
        %1081 = vst [vmem:[%s1069 + $0x58] sm:$0xff] %v1013
        %1082 = vst [vmem:[%s1069 + $0x60] sm:$0xff] %v880
        %1083 = vst [vmem:[%s1069 + $0x68] sm:$0xff] %v882
        %1084 = vst [vmem:[%s1069 + $0x70] sm:$0xff] %v1017
        %1085 = vst [vmem:[%s1069 + $0x78] sm:$0xff] %v1019
        %1086 = vst [vmem:[%s1069 + $0x80] sm:$0xff] %v886
        %1087 = vst [vmem:[%s1069 + $0x88] sm:$0xff] %v888
        %1088 = vst [vmem:[%s1069 + $0x90] sm:$0xff] %v1023
        %1089 = vst [vmem:[%s1069 + $0x98] sm:$0xff] %v1025
        %1090 = vst [vmem:[%s1069 + $0xa0] sm:$0xff] %v892
        %1091 = vst [vmem:[%s1069 + $0xa8] sm:$0xff] %v894
        %1092 = vst [vmem:[%s1069 + $0xb0] sm:$0xff] %v1029
        %1093 = vst [vmem:[%s1069 + $0xb8] sm:$0xff] %v1031
        %1094 = vst [vmem:[%s1069 + $0xc0] sm:$0xff] %v898
        %1095 = vst [vmem:[%s1069 + $0xc8] sm:$0xff] %v900
        %1096 = vst [vmem:[%s1069 + $0xd0] sm:$0xff] %v1035
        %1097 = vst [vmem:[%s1069 + $0xd8] sm:$0xff] %v1037
        %1098 = vst [vmem:[%s1069 + $0xe0] sm:$0xff] %v904
        %1099 = vst [vmem:[%s1069 + $0xe8] sm:$0xff] %v906
        %1100 = vst [vmem:[%s1069 + $0xf0] sm:$0xff] %v1041
        %1101 = vst [vmem:[%s1069 + $0xf8] sm:$0xff] %v1043
        %1102 = vst [vmem:[%s1069 + $0x100] sm:$0xff] %v910
        %1103 = vst [vmem:[%s1069 + $0x108] sm:$0xff] %v912
        %1104 = vst [vmem:[%s1069 + $0x110] sm:$0xff] %v1047
        %1105 = vst [vmem:[%s1069 + $0x118] sm:$0xff] %v1049
        %1106 = vst [vmem:[%s1069 + $0x120] sm:$0xff] %v916
        %1107 = vst [vmem:[%s1069 + $0x128] sm:$0xff] %v918
        %1108 = vst [vmem:[%s1069 + $0x130] sm:$0xff] %v1053
        %1109 = vst [vmem:[%s1069 + $0x138] sm:$0xff] %v1055
        %1110 = vst [vmem:[%s1069 + $0x140] sm:$0xff] %v922
        %1111 = vst [vmem:[%s1069 + $0x148] sm:$0xff] %v924
        %1112 = vst [vmem:[%s1069 + $0x150] sm:$0xff] %v1059
        %1113 = vst [vmem:[%s1069 + $0x158] sm:$0xff] %v1061
        %1114 = vst [vmem:[%s1069 + $0x160] sm:$0xff] %v928
        %1115 = vst [vmem:[%s1069 + $0x168] sm:$0xff] %v930
        %1116 = vst [vmem:[%s1069 + $0x170] sm:$0xff] %v1065
        %1117 = vst [vmem:[%s1069 + $0x178] sm:$0xff] %v1067
        %s1118 = scalar_lea.vmem %s266, 128 [#allocation3]
        %v1119 = vld [vmem:[%s1118] sm:$0xff]
        %v1120 = vld [vmem:[%s1118 + $0x8] sm:$0xff]
        %v1121 = vld [vmem:[%s1118 + $0x10] sm:$0xff]
        %v1122 = vld [vmem:[%s1118 + $0x18] sm:$0xff]
        %v1123 = vld [vmem:[%s1118 + $0x20] sm:$0xff]
        %v1124 = vld [vmem:[%s1118 + $0x28] sm:$0xff]
        %v1125 = vld [vmem:[%s1118 + $0x30] sm:$0xff]
        %v1126 = vld [vmem:[%s1118 + $0x38] sm:$0xff]
        %1127 = vmatprep.subr.mxu0 0.0
        %1128 = vmatpush1.msra.mxu0 0.0
        %1129 = vmatprep.subr.mxu0 0.0
        %1130 = vmatpush1.msra.mxu0 0.0
        %1131 = vmatprep.subr.mxu0 0.0
        %1132 = vmatpush1.msra.mxu0 0.0
        %1133 = vmatprep.subr.mxu0 0.0
        %1134 = vmatpush1.msra.mxu0 0.0
        %1135 = vmatprep.subr.mxu0 0.0
        %1136 = vmatpush1.msra.mxu0 0.0
        %1137 = vmatprep.subr.mxu0 0.0
        %1138 = vmatpush1.msra.mxu0 0.0
        %1139 = vmatprep.subr.mxu0 0.0
        %1140 = vmatpush1.msra.mxu0 0.0
        %1141 = vmatprep.subr.mxu0 0.0
        %1142 = vmatpush1.msra.mxu0 0.0
        %1143 = vmatprep.subr.mxu0 0.0
        %1144 = vmatpush1.msra.mxu0 0.0
        %1145 = vmatprep.subr.mxu0 0.0
        %1146 = vmatpush1.msra.mxu0 0.0
        %1147 = vmatprep.subr.mxu0 0.0
        %1148 = vmatpush1.msra.mxu0 0.0
        %1149 = vmatprep.subr.mxu0 0.0
        %1150 = vmatpush1.msra.mxu0 0.0
        %1151 = vmatprep.subr.mxu0 0.0
        %1152 = vmatpush1.msra.mxu0 0.0
        %1153 = vmatprep.subr.mxu0 0.0
        %1154 = vmatpush1.msra.mxu0 0.0
        %1155 = vmatprep.subr.mxu0 %v1124
        %1156 = vmatpush1.msra.mxu0 %v1123
        %1157 = vmatprep.subr.mxu0 %v1120
        %1158 = vmatpush1.msra.mxu0 %v1119
        %1159 = vmatprep.subr.mxu0 0.0
        %1160 = vmatpush2.msra.mxu0 0.0
        %1161 = vmatprep.subr.mxu0 0.0
        %1162 = vmatpush2.msra.mxu0 0.0
        %1163 = vmatprep.subr.mxu0 0.0
        %1164 = vmatpush2.msra.mxu0 0.0
        %1165 = vmatprep.subr.mxu0 0.0
        %1166 = vmatpush2.msra.mxu0 0.0
        %1167 = vmatprep.subr.mxu0 0.0
        %1168 = vmatpush2.msra.mxu0 0.0
        %1169 = vmatprep.subr.mxu0 0.0
        %1170 = vmatpush2.msra.mxu0 0.0
        %1171 = vmatprep.subr.mxu0 0.0
        %1172 = vmatpush2.msra.mxu0 0.0
        %1173 = vmatprep.subr.mxu0 0.0
        %1174 = vmatpush2.msra.mxu0 0.0
        %1175 = vmatprep.subr.mxu0 0.0
        %1176 = vmatpush2.msra.mxu0 0.0
        %1177 = vmatprep.subr.mxu0 0.0
        %1178 = vmatpush2.msra.mxu0 0.0
        %1179 = vmatprep.subr.mxu0 0.0
        %1180 = vmatpush2.msra.mxu0 0.0
        %1181 = vmatprep.subr.mxu0 0.0
        %1182 = vmatpush2.msra.mxu0 0.0
        %1183 = vmatprep.subr.mxu0 0.0
        %1184 = vmatpush2.msra.mxu0 0.0
        %1185 = vmatprep.subr.mxu0 0.0
        %1186 = vmatpush2.msra.mxu0 0.0
        %1187 = vmatprep.subr.mxu0 0.0
        %1188 = vmatpush2.msra.mxu0 0.0
        %1189 = vmatprep.subr.mxu0 0.0
        %1190 = vmatpush2.msra.mxu0 0.0
        %1191 = vmatprep.mubr.f32.mxu0 0.0
        %1192 = vmatmul.mubr.f32.gmra.mxu0 %v429
        %v1193 = vpop.f32.mrf.mxu0
        %v1194 = vadd.f32 %v370, %v1193
        %v1195 = vpop.f32.mrf.mxu0
        %v1196 = vadd.f32 %v370, %v1195
        %1197 = vmatprep.mubr.f32.mxu0 0.0
        %1198 = vmatmul.mubr.f32.gmra.mxu0 %v432
        %v1199 = vpop.f32.mrf.mxu0
        %v1200 = vadd.f32 %v375, %v1199
        %v1201 = vpop.f32.mrf.mxu0
        %v1202 = vadd.f32 %v375, %v1201
        %1203 = vmatprep.mubr.f32.mxu0 0.0
        %1204 = vmatmul.mubr.f32.gmra.mxu0 %v435
        %v1205 = vpop.f32.mrf.mxu0
        %v1206 = vadd.f32 %v380, %v1205
        %v1207 = vpop.f32.mrf.mxu0
        %v1208 = vadd.f32 %v380, %v1207
        %1209 = vmatprep.mubr.f32.mxu0 0.0
        %1210 = vmatmul.mubr.f32.gmra.mxu0 %v438
        %v1211 = vpop.f32.mrf.mxu0
        %v1212 = vadd.f32 %v385, %v1211
        %v1213 = vpop.f32.mrf.mxu0
        %v1214 = vadd.f32 %v385, %v1213
        %1215 = vmatprep.mubr.f32.mxu0 0.0
        %1216 = vmatmul.mubr.f32.gmra.mxu0 %v441
        %v1217 = vpop.f32.mrf.mxu0
        %v1218 = vadd.f32 %v390, %v1217
        %v1219 = vpop.f32.mrf.mxu0
        %v1220 = vadd.f32 %v390, %v1219
        %1221 = vmatprep.mubr.f32.mxu0 0.0
        %1222 = vmatmul.mubr.f32.gmra.mxu0 %v444
        %v1223 = vpop.f32.mrf.mxu0
        %v1224 = vadd.f32 %v395, %v1223
        %v1225 = vpop.f32.mrf.mxu0
        %v1226 = vadd.f32 %v395, %v1225
        %1227 = vmatprep.mubr.f32.mxu0 0.0
        %1228 = vmatmul.mubr.f32.gmra.mxu0 %v447
        %v1229 = vpop.f32.mrf.mxu0
        %v1230 = vadd.f32 %v400, %v1229
        %v1231 = vpop.f32.mrf.mxu0
        %v1232 = vadd.f32 %v400, %v1231
        %1233 = vmatprep.mubr.f32.mxu0 0.0
        %1234 = vmatmul.mubr.f32.gmra.mxu0 %v450
        %v1235 = vpop.f32.mrf.mxu0
        %v1236 = vadd.f32 %v405, %v1235
        %v1237 = vpop.f32.mrf.mxu0
        %v1238 = vadd.f32 %v405, %v1237
        %1239 = vmatprep.mubr.f32.mxu0 0.0
        %1240 = vmatmul.mubr.f32.gmra.mxu0 %v453
        %v1241 = vpop.f32.mrf.mxu0
        %v1242 = vadd.f32 %v410, %v1241
        %v1243 = vpop.f32.mrf.mxu0
        %v1244 = vadd.f32 %v410, %v1243
        %1245 = vmatprep.mubr.f32.mxu0 0.0
        %1246 = vmatmul.mubr.f32.gmra.mxu0 %v456
        %v1247 = vpop.f32.mrf.mxu0
        %v1248 = vadd.f32 %v415, %v1247
        %v1249 = vpop.f32.mrf.mxu0
        %v1250 = vadd.f32 %v415, %v1249
        %1251 = vmatprep.mubr.f32.mxu0 0.0
        %1252 = vmatmul.mubr.f32.gmra.mxu0 %v459
        %v1253 = vpop.f32.mrf.mxu0
        %v1254 = vadd.f32 %v420, %v1253
        %v1255 = vpop.f32.mrf.mxu0
        %v1256 = vadd.f32 %v420, %v1255
        %1257 = vmatprep.mubr.f32.mxu0 0.0
        %1258 = vmatmul.mubr.f32.gmra.mxu0 %v462
        %v1259 = vpop.f32.mrf.mxu0
        %v1260 = vadd.f32 %v425, %v1259
        %v1261 = vpop.f32.mrf.mxu0
        %v1262 = vadd.f32 %v425, %v1261
        %1263 = vdwg.mxu0
        %1264 = vmatprep.subr.mxu0 0.0
        %1265 = vmatpush1.msra.mxu0 0.0
        %1266 = vmatprep.subr.mxu0 0.0
        %1267 = vmatpush1.msra.mxu0 0.0
        %1268 = vmatprep.subr.mxu0 0.0
        %1269 = vmatpush1.msra.mxu0 0.0
        %1270 = vmatprep.subr.mxu0 0.0
        %1271 = vmatpush1.msra.mxu0 0.0
        %1272 = vmatprep.subr.mxu0 0.0
        %1273 = vmatpush1.msra.mxu0 0.0
        %1274 = vmatprep.subr.mxu0 0.0
        %1275 = vmatpush1.msra.mxu0 0.0
        %1276 = vmatprep.subr.mxu0 0.0
        %1277 = vmatpush1.msra.mxu0 0.0
        %1278 = vmatprep.subr.mxu0 0.0
        %1279 = vmatpush1.msra.mxu0 0.0
        %1280 = vmatprep.subr.mxu0 0.0
        %1281 = vmatpush1.msra.mxu0 0.0
        %1282 = vmatprep.subr.mxu0 0.0
        %1283 = vmatpush1.msra.mxu0 0.0
        %1284 = vmatprep.subr.mxu0 0.0
        %1285 = vmatpush1.msra.mxu0 0.0
        %1286 = vmatprep.subr.mxu0 0.0
        %1287 = vmatpush1.msra.mxu0 0.0
        %1288 = vmatprep.subr.mxu0 0.0
        %1289 = vmatpush1.msra.mxu0 0.0
        %1290 = vmatprep.subr.mxu0 0.0
        %1291 = vmatpush1.msra.mxu0 0.0
        %1292 = vmatprep.subr.mxu0 %v1126
        %1293 = vmatpush1.msra.mxu0 %v1125
        %1294 = vmatprep.subr.mxu0 %v1122
        %1295 = vmatpush1.msra.mxu0 %v1121
        %1296 = vmatprep.subr.mxu0 0.0
        %1297 = vmatpush2.msra.mxu0 0.0
        %1298 = vmatprep.subr.mxu0 0.0
        %1299 = vmatpush2.msra.mxu0 0.0
        %1300 = vmatprep.subr.mxu0 0.0
        %1301 = vmatpush2.msra.mxu0 0.0
        %1302 = vmatprep.subr.mxu0 0.0
        %1303 = vmatpush2.msra.mxu0 0.0
        %1304 = vmatprep.subr.mxu0 0.0
        %1305 = vmatpush2.msra.mxu0 0.0
        %1306 = vmatprep.subr.mxu0 0.0
        %1307 = vmatpush2.msra.mxu0 0.0
        %1308 = vmatprep.subr.mxu0 0.0
        %1309 = vmatpush2.msra.mxu0 0.0
        %1310 = vmatprep.subr.mxu0 0.0
        %1311 = vmatpush2.msra.mxu0 0.0
        %1312 = vmatprep.subr.mxu0 0.0
        %1313 = vmatpush2.msra.mxu0 0.0
        %1314 = vmatprep.subr.mxu0 0.0
        %1315 = vmatpush2.msra.mxu0 0.0
        %1316 = vmatprep.subr.mxu0 0.0
        %1317 = vmatpush2.msra.mxu0 0.0
        %1318 = vmatprep.subr.mxu0 0.0
        %1319 = vmatpush2.msra.mxu0 0.0
        %1320 = vmatprep.subr.mxu0 0.0
        %1321 = vmatpush2.msra.mxu0 0.0
        %1322 = vmatprep.subr.mxu0 0.0
        %1323 = vmatpush2.msra.mxu0 0.0
        %1324 = vmatprep.subr.mxu0 0.0
        %1325 = vmatpush2.msra.mxu0 0.0
        %1326 = vmatprep.subr.mxu0 0.0
        %1327 = vmatpush2.msra.mxu0 0.0
        %1328 = vmatprep.mubr.f32.mxu0 0.0
        %1329 = vmatmul.mubr.f32.gmra.mxu0 %v429
        %v1330 = vpop.f32.mrf.mxu0
        %v1331 = vadd.f32 %v370, %v1330
        %v1332 = vpop.f32.mrf.mxu0
        %v1333 = vadd.f32 %v370, %v1332
        %1334 = vmatprep.mubr.f32.mxu0 0.0
        %1335 = vmatmul.mubr.f32.gmra.mxu0 %v432
        %v1336 = vpop.f32.mrf.mxu0
        %v1337 = vadd.f32 %v375, %v1336
        %v1338 = vpop.f32.mrf.mxu0
        %v1339 = vadd.f32 %v375, %v1338
        %1340 = vmatprep.mubr.f32.mxu0 0.0
        %1341 = vmatmul.mubr.f32.gmra.mxu0 %v435
        %v1342 = vpop.f32.mrf.mxu0
        %v1343 = vadd.f32 %v380, %v1342
        %v1344 = vpop.f32.mrf.mxu0
        %v1345 = vadd.f32 %v380, %v1344
        %1346 = vmatprep.mubr.f32.mxu0 0.0
        %1347 = vmatmul.mubr.f32.gmra.mxu0 %v438
        %v1348 = vpop.f32.mrf.mxu0
        %v1349 = vadd.f32 %v385, %v1348
        %v1350 = vpop.f32.mrf.mxu0
        %v1351 = vadd.f32 %v385, %v1350
        %1352 = vmatprep.mubr.f32.mxu0 0.0
        %1353 = vmatmul.mubr.f32.gmra.mxu0 %v441
        %v1354 = vpop.f32.mrf.mxu0
        %v1355 = vadd.f32 %v390, %v1354
        %v1356 = vpop.f32.mrf.mxu0
        %v1357 = vadd.f32 %v390, %v1356
        %1358 = vmatprep.mubr.f32.mxu0 0.0
        %1359 = vmatmul.mubr.f32.gmra.mxu0 %v444
        %v1360 = vpop.f32.mrf.mxu0
        %v1361 = vadd.f32 %v395, %v1360
        %v1362 = vpop.f32.mrf.mxu0
        %v1363 = vadd.f32 %v395, %v1362
        %1364 = vmatprep.mubr.f32.mxu0 0.0
        %1365 = vmatmul.mubr.f32.gmra.mxu0 %v447
        %v1366 = vpop.f32.mrf.mxu0
        %v1367 = vadd.f32 %v400, %v1366
        %v1368 = vpop.f32.mrf.mxu0
        %v1369 = vadd.f32 %v400, %v1368
        %1370 = vmatprep.mubr.f32.mxu0 0.0
        %1371 = vmatmul.mubr.f32.gmra.mxu0 %v450
        %v1372 = vpop.f32.mrf.mxu0
        %v1373 = vadd.f32 %v405, %v1372
        %v1374 = vpop.f32.mrf.mxu0
        %v1375 = vadd.f32 %v405, %v1374
        %1376 = vmatprep.mubr.f32.mxu0 0.0
        %1377 = vmatmul.mubr.f32.gmra.mxu0 %v453
        %v1378 = vpop.f32.mrf.mxu0
        %v1379 = vadd.f32 %v410, %v1378
        %v1380 = vpop.f32.mrf.mxu0
        %v1381 = vadd.f32 %v410, %v1380
        %1382 = vmatprep.mubr.f32.mxu0 0.0
        %1383 = vmatmul.mubr.f32.gmra.mxu0 %v456
        %v1384 = vpop.f32.mrf.mxu0
        %v1385 = vadd.f32 %v415, %v1384
        %v1386 = vpop.f32.mrf.mxu0
        %v1387 = vadd.f32 %v415, %v1386
        %1388 = vmatprep.mubr.f32.mxu0 0.0
        %1389 = vmatmul.mubr.f32.gmra.mxu0 %v459
        %v1390 = vpop.f32.mrf.mxu0
        %v1391 = vadd.f32 %v420, %v1390
        %v1392 = vpop.f32.mrf.mxu0
        %v1393 = vadd.f32 %v420, %v1392
        %1394 = vmatprep.mubr.f32.mxu0 0.0
        %1395 = vmatmul.mubr.f32.gmra.mxu0 %v462
        %v1396 = vpop.f32.mrf.mxu0
        %v1397 = vadd.f32 %v425, %v1396
        %v1398 = vpop.f32.mrf.mxu0
        %v1399 = vadd.f32 %v425, %v1398
        %1400 = vdwg.mxu0
        %s1401 = scalar_lea.vmem [#allocation2], 768
        %1402 = vst [vmem:[%s1401] sm:$0xff] %v1194
        %1403 = vst [vmem:[%s1401 + $0x8] sm:$0xff] %v1196
        %1404 = vst [vmem:[%s1401 + $0x10] sm:$0xff] %v1331
        %1405 = vst [vmem:[%s1401 + $0x18] sm:$0xff] %v1333
        %1406 = vst [vmem:[%s1401 + $0x20] sm:$0xff] %v1200
        %1407 = vst [vmem:[%s1401 + $0x28] sm:$0xff] %v1202
        %1408 = vst [vmem:[%s1401 + $0x30] sm:$0xff] %v1337
        %1409 = vst [vmem:[%s1401 + $0x38] sm:$0xff] %v1339
        %1410 = vst [vmem:[%s1401 + $0x40] sm:$0xff] %v1206
        %1411 = vst [vmem:[%s1401 + $0x48] sm:$0xff] %v1208
        %1412 = vst [vmem:[%s1401 + $0x50] sm:$0xff] %v1343
        %1413 = vst [vmem:[%s1401 + $0x58] sm:$0xff] %v1345
        %1414 = vst [vmem:[%s1401 + $0x60] sm:$0xff] %v1212
        %1415 = vst [vmem:[%s1401 + $0x68] sm:$0xff] %v1214
        %1416 = vst [vmem:[%s1401 + $0x70] sm:$0xff] %v1349
        %1417 = vst [vmem:[%s1401 + $0x78] sm:$0xff] %v1351
        %1418 = vst [vmem:[%s1401 + $0x80] sm:$0xff] %v1218
        %1419 = vst [vmem:[%s1401 + $0x88] sm:$0xff] %v1220
        %1420 = vst [vmem:[%s1401 + $0x90] sm:$0xff] %v1355
        %1421 = vst [vmem:[%s1401 + $0x98] sm:$0xff] %v1357
        %1422 = vst [vmem:[%s1401 + $0xa0] sm:$0xff] %v1224
        %1423 = vst [vmem:[%s1401 + $0xa8] sm:$0xff] %v1226
        %1424 = vst [vmem:[%s1401 + $0xb0] sm:$0xff] %v1361
        %1425 = vst [vmem:[%s1401 + $0xb8] sm:$0xff] %v1363
        %1426 = vst [vmem:[%s1401 + $0xc0] sm:$0xff] %v1230
        %1427 = vst [vmem:[%s1401 + $0xc8] sm:$0xff] %v1232
        %1428 = vst [vmem:[%s1401 + $0xd0] sm:$0xff] %v1367
        %1429 = vst [vmem:[%s1401 + $0xd8] sm:$0xff] %v1369
        %1430 = vst [vmem:[%s1401 + $0xe0] sm:$0xff] %v1236
        %1431 = vst [vmem:[%s1401 + $0xe8] sm:$0xff] %v1238
        %1432 = vst [vmem:[%s1401 + $0xf0] sm:$0xff] %v1373
        %1433 = vst [vmem:[%s1401 + $0xf8] sm:$0xff] %v1375
        %1434 = vst [vmem:[%s1401 + $0x100] sm:$0xff] %v1242
        %1435 = vst [vmem:[%s1401 + $0x108] sm:$0xff] %v1244
        %1436 = vst [vmem:[%s1401 + $0x110] sm:$0xff] %v1379
        %1437 = vst [vmem:[%s1401 + $0x118] sm:$0xff] %v1381
        %1438 = vst [vmem:[%s1401 + $0x120] sm:$0xff] %v1248
        %1439 = vst [vmem:[%s1401 + $0x128] sm:$0xff] %v1250
        %1440 = vst [vmem:[%s1401 + $0x130] sm:$0xff] %v1385
        %1441 = vst [vmem:[%s1401 + $0x138] sm:$0xff] %v1387
        %1442 = vst [vmem:[%s1401 + $0x140] sm:$0xff] %v1254
        %1443 = vst [vmem:[%s1401 + $0x148] sm:$0xff] %v1256
        %1444 = vst [vmem:[%s1401 + $0x150] sm:$0xff] %v1391
        %1445 = vst [vmem:[%s1401 + $0x158] sm:$0xff] %v1393
        %1446 = vst [vmem:[%s1401 + $0x160] sm:$0xff] %v1260
        %1447 = vst [vmem:[%s1401 + $0x168] sm:$0xff] %v1262
        %1448 = vst [vmem:[%s1401 + $0x170] sm:$0xff] %v1397
        %1449 = vst [vmem:[%s1401 + $0x178] sm:$0xff] %v1399
        %s1450 = scalar_lea.vmem %s266, 192 [#allocation3]
        %v1451 = vld [vmem:[%s1450] sm:$0xff]
        %v1452 = vld [vmem:[%s1450 + $0x8] sm:$0xff]
        %v1453 = vld [vmem:[%s1450 + $0x10] sm:$0xff]
        %v1454 = vld [vmem:[%s1450 + $0x18] sm:$0xff]
        %v1455 = vld [vmem:[%s1450 + $0x20] sm:$0xff]
        %v1456 = vld [vmem:[%s1450 + $0x28] sm:$0xff]
        %v1457 = vld [vmem:[%s1450 + $0x30] sm:$0xff]
        %v1458 = vld [vmem:[%s1450 + $0x38] sm:$0xff]
        %1459 = vmatprep.subr.mxu0 0.0
        %1460 = vmatpush1.msra.mxu0 0.0
        %1461 = vmatprep.subr.mxu0 0.0
        %1462 = vmatpush1.msra.mxu0 0.0
        %1463 = vmatprep.subr.mxu0 0.0
        %1464 = vmatpush1.msra.mxu0 0.0
        %1465 = vmatprep.subr.mxu0 0.0
        %1466 = vmatpush1.msra.mxu0 0.0
        %1467 = vmatprep.subr.mxu0 0.0
        %1468 = vmatpush1.msra.mxu0 0.0
        %1469 = vmatprep.subr.mxu0 0.0
        %1470 = vmatpush1.msra.mxu0 0.0
        %1471 = vmatprep.subr.mxu0 0.0
        %1472 = vmatpush1.msra.mxu0 0.0
        %1473 = vmatprep.subr.mxu0 0.0
        %1474 = vmatpush1.msra.mxu0 0.0
        %1475 = vmatprep.subr.mxu0 0.0
        %1476 = vmatpush1.msra.mxu0 0.0
        %1477 = vmatprep.subr.mxu0 0.0
        %1478 = vmatpush1.msra.mxu0 0.0
        %1479 = vmatprep.subr.mxu0 0.0
        %1480 = vmatpush1.msra.mxu0 0.0
        %1481 = vmatprep.subr.mxu0 0.0
        %1482 = vmatpush1.msra.mxu0 0.0
        %1483 = vmatprep.subr.mxu0 0.0
        %1484 = vmatpush1.msra.mxu0 0.0
        %1485 = vmatprep.subr.mxu0 0.0
        %1486 = vmatpush1.msra.mxu0 0.0
        %1487 = vmatprep.subr.mxu0 %v1456
        %1488 = vmatpush1.msra.mxu0 %v1455
        %1489 = vmatprep.subr.mxu0 %v1452
        %1490 = vmatpush1.msra.mxu0 %v1451
        %1491 = vmatprep.subr.mxu0 0.0
        %1492 = vmatpush2.msra.mxu0 0.0
        %1493 = vmatprep.subr.mxu0 0.0
        %1494 = vmatpush2.msra.mxu0 0.0
        %1495 = vmatprep.subr.mxu0 0.0
        %1496 = vmatpush2.msra.mxu0 0.0
        %1497 = vmatprep.subr.mxu0 0.0
        %1498 = vmatpush2.msra.mxu0 0.0
        %1499 = vmatprep.subr.mxu0 0.0
        %1500 = vmatpush2.msra.mxu0 0.0
        %1501 = vmatprep.subr.mxu0 0.0
        %1502 = vmatpush2.msra.mxu0 0.0
        %1503 = vmatprep.subr.mxu0 0.0
        %1504 = vmatpush2.msra.mxu0 0.0
        %1505 = vmatprep.subr.mxu0 0.0
        %1506 = vmatpush2.msra.mxu0 0.0
        %1507 = vmatprep.subr.mxu0 0.0
        %1508 = vmatpush2.msra.mxu0 0.0
        %1509 = vmatprep.subr.mxu0 0.0
        %1510 = vmatpush2.msra.mxu0 0.0
        %1511 = vmatprep.subr.mxu0 0.0
        %1512 = vmatpush2.msra.mxu0 0.0
        %1513 = vmatprep.subr.mxu0 0.0
        %1514 = vmatpush2.msra.mxu0 0.0
        %1515 = vmatprep.subr.mxu0 0.0
        %1516 = vmatpush2.msra.mxu0 0.0
        %1517 = vmatprep.subr.mxu0 0.0
        %1518 = vmatpush2.msra.mxu0 0.0
        %1519 = vmatprep.subr.mxu0 0.0
        %1520 = vmatpush2.msra.mxu0 0.0
        %1521 = vmatprep.subr.mxu0 0.0
        %1522 = vmatpush2.msra.mxu0 0.0
        %1523 = vmatprep.mubr.f32.mxu0 0.0
        %1524 = vmatmul.mubr.f32.gmra.mxu0 %v429
        %v1525 = vpop.f32.mrf.mxu0
        %v1526 = vadd.f32 %v370, %v1525
        %v1527 = vpop.f32.mrf.mxu0
        %v1528 = vadd.f32 %v370, %v1527
        %1529 = vmatprep.mubr.f32.mxu0 0.0
        %1530 = vmatmul.mubr.f32.gmra.mxu0 %v432
        %v1531 = vpop.f32.mrf.mxu0
        %v1532 = vadd.f32 %v375, %v1531
        %v1533 = vpop.f32.mrf.mxu0
        %v1534 = vadd.f32 %v375, %v1533
        %1535 = vmatprep.mubr.f32.mxu0 0.0
        %1536 = vmatmul.mubr.f32.gmra.mxu0 %v435
        %v1537 = vpop.f32.mrf.mxu0
        %v1538 = vadd.f32 %v380, %v1537
        %v1539 = vpop.f32.mrf.mxu0
        %v1540 = vadd.f32 %v380, %v1539
        %1541 = vmatprep.mubr.f32.mxu0 0.0
        %1542 = vmatmul.mubr.f32.gmra.mxu0 %v438
        %v1543 = vpop.f32.mrf.mxu0
        %v1544 = vadd.f32 %v385, %v1543
        %v1545 = vpop.f32.mrf.mxu0
        %v1546 = vadd.f32 %v385, %v1545
        %1547 = vmatprep.mubr.f32.mxu0 0.0
        %1548 = vmatmul.mubr.f32.gmra.mxu0 %v441
        %v1549 = vpop.f32.mrf.mxu0
        %v1550 = vadd.f32 %v390, %v1549
        %v1551 = vpop.f32.mrf.mxu0
        %v1552 = vadd.f32 %v390, %v1551
        %1553 = vmatprep.mubr.f32.mxu0 0.0
        %1554 = vmatmul.mubr.f32.gmra.mxu0 %v444
        %v1555 = vpop.f32.mrf.mxu0
        %v1556 = vadd.f32 %v395, %v1555
        %v1557 = vpop.f32.mrf.mxu0
        %v1558 = vadd.f32 %v395, %v1557
        %1559 = vmatprep.mubr.f32.mxu0 0.0
        %1560 = vmatmul.mubr.f32.gmra.mxu0 %v447
        %v1561 = vpop.f32.mrf.mxu0
        %v1562 = vadd.f32 %v400, %v1561
        %v1563 = vpop.f32.mrf.mxu0
        %v1564 = vadd.f32 %v400, %v1563
        %1565 = vmatprep.mubr.f32.mxu0 0.0
        %1566 = vmatmul.mubr.f32.gmra.mxu0 %v450
        %v1567 = vpop.f32.mrf.mxu0
        %v1568 = vadd.f32 %v405, %v1567
        %v1569 = vpop.f32.mrf.mxu0
        %v1570 = vadd.f32 %v405, %v1569
        %1571 = vmatprep.mubr.f32.mxu0 0.0
        %1572 = vmatmul.mubr.f32.gmra.mxu0 %v453
        %v1573 = vpop.f32.mrf.mxu0
        %v1574 = vadd.f32 %v410, %v1573
        %v1575 = vpop.f32.mrf.mxu0
        %v1576 = vadd.f32 %v410, %v1575
        %1577 = vmatprep.mubr.f32.mxu0 0.0
        %1578 = vmatmul.mubr.f32.gmra.mxu0 %v456
        %v1579 = vpop.f32.mrf.mxu0
        %v1580 = vadd.f32 %v415, %v1579
        %v1581 = vpop.f32.mrf.mxu0
        %v1582 = vadd.f32 %v415, %v1581
        %1583 = vmatprep.mubr.f32.mxu0 0.0
        %1584 = vmatmul.mubr.f32.gmra.mxu0 %v459
        %v1585 = vpop.f32.mrf.mxu0
        %v1586 = vadd.f32 %v420, %v1585
        %v1587 = vpop.f32.mrf.mxu0
        %v1588 = vadd.f32 %v420, %v1587
        %1589 = vmatprep.mubr.f32.mxu0 0.0
        %1590 = vmatmul.mubr.f32.gmra.mxu0 %v462
        %v1591 = vpop.f32.mrf.mxu0
        %v1592 = vadd.f32 %v425, %v1591
        %v1593 = vpop.f32.mrf.mxu0
        %v1594 = vadd.f32 %v425, %v1593
        %1595 = vdwg.mxu0
        %1596 = vmatprep.subr.mxu0 0.0
        %1597 = vmatpush1.msra.mxu0 0.0
        %1598 = vmatprep.subr.mxu0 0.0
        %1599 = vmatpush1.msra.mxu0 0.0
        %1600 = vmatprep.subr.mxu0 0.0
        %1601 = vmatpush1.msra.mxu0 0.0
        %1602 = vmatprep.subr.mxu0 0.0
        %1603 = vmatpush1.msra.mxu0 0.0
        %1604 = vmatprep.subr.mxu0 0.0
        %1605 = vmatpush1.msra.mxu0 0.0
        %1606 = vmatprep.subr.mxu0 0.0
        %1607 = vmatpush1.msra.mxu0 0.0
        %1608 = vmatprep.subr.mxu0 0.0
        %1609 = vmatpush1.msra.mxu0 0.0
        %1610 = vmatprep.subr.mxu0 0.0
        %1611 = vmatpush1.msra.mxu0 0.0
        %1612 = vmatprep.subr.mxu0 0.0
        %1613 = vmatpush1.msra.mxu0 0.0
        %1614 = vmatprep.subr.mxu0 0.0
        %1615 = vmatpush1.msra.mxu0 0.0
        %1616 = vmatprep.subr.mxu0 0.0
        %1617 = vmatpush1.msra.mxu0 0.0
        %1618 = vmatprep.subr.mxu0 0.0
        %1619 = vmatpush1.msra.mxu0 0.0
        %1620 = vmatprep.subr.mxu0 0.0
        %1621 = vmatpush1.msra.mxu0 0.0
        %1622 = vmatprep.subr.mxu0 0.0
        %1623 = vmatpush1.msra.mxu0 0.0
        %1624 = vmatprep.subr.mxu0 %v1458
        %1625 = vmatpush1.msra.mxu0 %v1457
        %1626 = vmatprep.subr.mxu0 %v1454
        %1627 = vmatpush1.msra.mxu0 %v1453
        %1628 = vmatprep.subr.mxu0 0.0
        %1629 = vmatpush2.msra.mxu0 0.0
        %1630 = vmatprep.subr.mxu0 0.0
        %1631 = vmatpush2.msra.mxu0 0.0
        %1632 = vmatprep.subr.mxu0 0.0
        %1633 = vmatpush2.msra.mxu0 0.0
        %1634 = vmatprep.subr.mxu0 0.0
        %1635 = vmatpush2.msra.mxu0 0.0
        %1636 = vmatprep.subr.mxu0 0.0
        %1637 = vmatpush2.msra.mxu0 0.0
        %1638 = vmatprep.subr.mxu0 0.0
        %1639 = vmatpush2.msra.mxu0 0.0
        %1640 = vmatprep.subr.mxu0 0.0
        %1641 = vmatpush2.msra.mxu0 0.0
        %1642 = vmatprep.subr.mxu0 0.0
        %1643 = vmatpush2.msra.mxu0 0.0
        %1644 = vmatprep.subr.mxu0 0.0
        %1645 = vmatpush2.msra.mxu0 0.0
        %1646 = vmatprep.subr.mxu0 0.0
        %1647 = vmatpush2.msra.mxu0 0.0
        %1648 = vmatprep.subr.mxu0 0.0
        %1649 = vmatpush2.msra.mxu0 0.0
        %1650 = vmatprep.subr.mxu0 0.0
        %1651 = vmatpush2.msra.mxu0 0.0
        %1652 = vmatprep.subr.mxu0 0.0
        %1653 = vmatpush2.msra.mxu0 0.0
        %1654 = vmatprep.subr.mxu0 0.0
        %1655 = vmatpush2.msra.mxu0 0.0
        %1656 = vmatprep.subr.mxu0 0.0
        %1657 = vmatpush2.msra.mxu0 0.0
        %1658 = vmatprep.subr.mxu0 0.0
        %1659 = vmatpush2.msra.mxu0 0.0
        %1660 = vmatprep.mubr.f32.mxu0 0.0
        %1661 = vmatmul.mubr.f32.gmra.mxu0 %v429
        %v1662 = vpop.f32.mrf.mxu0
        %v1663 = vadd.f32 %v370, %v1662
        %v1664 = vpop.f32.mrf.mxu0
        %v1665 = vadd.f32 %v370, %v1664
        %1666 = vmatprep.mubr.f32.mxu0 0.0
        %1667 = vmatmul.mubr.f32.gmra.mxu0 %v432
        %v1668 = vpop.f32.mrf.mxu0
        %v1669 = vadd.f32 %v375, %v1668
        %v1670 = vpop.f32.mrf.mxu0
        %v1671 = vadd.f32 %v375, %v1670
        %1672 = vmatprep.mubr.f32.mxu0 0.0
        %1673 = vmatmul.mubr.f32.gmra.mxu0 %v435
        %v1674 = vpop.f32.mrf.mxu0
        %v1675 = vadd.f32 %v380, %v1674
        %v1676 = vpop.f32.mrf.mxu0
        %v1677 = vadd.f32 %v380, %v1676
        %1678 = vmatprep.mubr.f32.mxu0 0.0
        %1679 = vmatmul.mubr.f32.gmra.mxu0 %v438
        %v1680 = vpop.f32.mrf.mxu0
        %v1681 = vadd.f32 %v385, %v1680
        %v1682 = vpop.f32.mrf.mxu0
        %v1683 = vadd.f32 %v385, %v1682
        %1684 = vmatprep.mubr.f32.mxu0 0.0
        %1685 = vmatmul.mubr.f32.gmra.mxu0 %v441
        %v1686 = vpop.f32.mrf.mxu0
        %v1687 = vadd.f32 %v390, %v1686
        %v1688 = vpop.f32.mrf.mxu0
        %v1689 = vadd.f32 %v390, %v1688
        %1690 = vmatprep.mubr.f32.mxu0 0.0
        %1691 = vmatmul.mubr.f32.gmra.mxu0 %v444
        %v1692 = vpop.f32.mrf.mxu0
        %v1693 = vadd.f32 %v395, %v1692
        %v1694 = vpop.f32.mrf.mxu0
        %v1695 = vadd.f32 %v395, %v1694
        %1696 = vmatprep.mubr.f32.mxu0 0.0
        %1697 = vmatmul.mubr.f32.gmra.mxu0 %v447
        %v1698 = vpop.f32.mrf.mxu0
        %v1699 = vadd.f32 %v400, %v1698
        %v1700 = vpop.f32.mrf.mxu0
        %v1701 = vadd.f32 %v400, %v1700
        %1702 = vmatprep.mubr.f32.mxu0 0.0
        %1703 = vmatmul.mubr.f32.gmra.mxu0 %v450
        %v1704 = vpop.f32.mrf.mxu0
        %v1705 = vadd.f32 %v405, %v1704
        %v1706 = vpop.f32.mrf.mxu0
        %v1707 = vadd.f32 %v405, %v1706
        %1708 = vmatprep.mubr.f32.mxu0 0.0
        %1709 = vmatmul.mubr.f32.gmra.mxu0 %v453
        %v1710 = vpop.f32.mrf.mxu0
        %v1711 = vadd.f32 %v410, %v1710
        %v1712 = vpop.f32.mrf.mxu0
        %v1713 = vadd.f32 %v410, %v1712
        %1714 = vmatprep.mubr.f32.mxu0 0.0
        %1715 = vmatmul.mubr.f32.gmra.mxu0 %v456
        %v1716 = vpop.f32.mrf.mxu0
        %v1717 = vadd.f32 %v415, %v1716
        %v1718 = vpop.f32.mrf.mxu0
        %v1719 = vadd.f32 %v415, %v1718
        %1720 = vmatprep.mubr.f32.mxu0 0.0
        %1721 = vmatmul.mubr.f32.gmra.mxu0 %v459
        %v1722 = vpop.f32.mrf.mxu0
        %v1723 = vadd.f32 %v420, %v1722
        %v1724 = vpop.f32.mrf.mxu0
        %v1725 = vadd.f32 %v420, %v1724
        %1726 = vmatprep.mubr.f32.mxu0 0.0
        %1727 = vmatmul.mubr.f32.gmra.mxu0 %v462
        %v1728 = vpop.f32.mrf.mxu0
        %v1729 = vadd.f32 %v425, %v1728
        %v1730 = vpop.f32.mrf.mxu0
        %v1731 = vadd.f32 %v425, %v1730
        %1732 = vdwg.mxu0
        %s1733 = scalar_lea.vmem [#allocation2], 1152
        %1734 = vst [vmem:[%s1733] sm:$0xff] %v1526
        %1735 = vst [vmem:[%s1733 + $0x8] sm:$0xff] %v1528
        %1736 = vst [vmem:[%s1733 + $0x10] sm:$0xff] %v1663
        %1737 = vst [vmem:[%s1733 + $0x18] sm:$0xff] %v1665
        %1738 = vst [vmem:[%s1733 + $0x20] sm:$0xff] %v1532
        %1739 = vst [vmem:[%s1733 + $0x28] sm:$0xff] %v1534
        %1740 = vst [vmem:[%s1733 + $0x30] sm:$0xff] %v1669
        %1741 = vst [vmem:[%s1733 + $0x38] sm:$0xff] %v1671
        %1742 = vst [vmem:[%s1733 + $0x40] sm:$0xff] %v1538
        %1743 = vst [vmem:[%s1733 + $0x48] sm:$0xff] %v1540
        %1744 = vst [vmem:[%s1733 + $0x50] sm:$0xff] %v1675
        %1745 = vst [vmem:[%s1733 + $0x58] sm:$0xff] %v1677
        %1746 = vst [vmem:[%s1733 + $0x60] sm:$0xff] %v1544
        %1747 = vst [vmem:[%s1733 + $0x68] sm:$0xff] %v1546
        %1748 = vst [vmem:[%s1733 + $0x70] sm:$0xff] %v1681
        %1749 = vst [vmem:[%s1733 + $0x78] sm:$0xff] %v1683
        %1750 = vst [vmem:[%s1733 + $0x80] sm:$0xff] %v1550
        %1751 = vst [vmem:[%s1733 + $0x88] sm:$0xff] %v1552
        %1752 = vst [vmem:[%s1733 + $0x90] sm:$0xff] %v1687
        %1753 = vst [vmem:[%s1733 + $0x98] sm:$0xff] %v1689
        %1754 = vst [vmem:[%s1733 + $0xa0] sm:$0xff] %v1556
        %1755 = vst [vmem:[%s1733 + $0xa8] sm:$0xff] %v1558
        %1756 = vst [vmem:[%s1733 + $0xb0] sm:$0xff] %v1693
        %1757 = vst [vmem:[%s1733 + $0xb8] sm:$0xff] %v1695
        %1758 = vst [vmem:[%s1733 + $0xc0] sm:$0xff] %v1562
        %1759 = vst [vmem:[%s1733 + $0xc8] sm:$0xff] %v1564
        %1760 = vst [vmem:[%s1733 + $0xd0] sm:$0xff] %v1699
        %1761 = vst [vmem:[%s1733 + $0xd8] sm:$0xff] %v1701
        %1762 = vst [vmem:[%s1733 + $0xe0] sm:$0xff] %v1568
        %1763 = vst [vmem:[%s1733 + $0xe8] sm:$0xff] %v1570
        %1764 = vst [vmem:[%s1733 + $0xf0] sm:$0xff] %v1705
        %1765 = vst [vmem:[%s1733 + $0xf8] sm:$0xff] %v1707
        %1766 = vst [vmem:[%s1733 + $0x100] sm:$0xff] %v1574
        %1767 = vst [vmem:[%s1733 + $0x108] sm:$0xff] %v1576
        %1768 = vst [vmem:[%s1733 + $0x110] sm:$0xff] %v1711
        %1769 = vst [vmem:[%s1733 + $0x118] sm:$0xff] %v1713
        %1770 = vst [vmem:[%s1733 + $0x120] sm:$0xff] %v1580
        %1771 = vst [vmem:[%s1733 + $0x128] sm:$0xff] %v1582
        %1772 = vst [vmem:[%s1733 + $0x130] sm:$0xff] %v1717
        %1773 = vst [vmem:[%s1733 + $0x138] sm:$0xff] %v1719
        %1774 = vst [vmem:[%s1733 + $0x140] sm:$0xff] %v1586
        %1775 = vst [vmem:[%s1733 + $0x148] sm:$0xff] %v1588
        %1776 = vst [vmem:[%s1733 + $0x150] sm:$0xff] %v1723
        %1777 = vst [vmem:[%s1733 + $0x158] sm:$0xff] %v1725
        %1778 = vst [vmem:[%s1733 + $0x160] sm:$0xff] %v1592
        %1779 = vst [vmem:[%s1733 + $0x168] sm:$0xff] %v1594
        %1780 = vst [vmem:[%s1733 + $0x170] sm:$0xff] %v1729
        %1781 = vst [vmem:[%s1733 + $0x178] sm:$0xff] %v1731
        %v1782 = vld [vmem:[#allocation2] sm:$0xff]
        %v1783 = vld [vmem:[#allocation2 + $0x8] sm:$0xff]
        %v1784 = vld [vmem:[#allocation2 + $0x10] sm:$0xff]
        %v1785 = vld [vmem:[#allocation2 + $0x18] sm:$0xff]
        %v1786 = vld [vmem:[#allocation2 + $0x20] sm:$0xff]
        %v1787 = vld [vmem:[#allocation2 + $0x28] sm:$0xff]
        %v1788 = vld [vmem:[#allocation2 + $0x30] sm:$0xff]
        %v1789 = vld [vmem:[#allocation2 + $0x38] sm:$0xff]
        %v1790 = vld [vmem:[#allocation2 + $0x40] sm:$0xff]
        %v1791 = vld [vmem:[#allocation2 + $0x48] sm:$0xff]
        %v1792 = vld [vmem:[#allocation2 + $0x50] sm:$0xff]
        %v1793 = vld [vmem:[#allocation2 + $0x58] sm:$0xff]
        %v1794 = vld [vmem:[#allocation2 + $0x60] sm:$0xff]
        %v1795 = vld [vmem:[#allocation2 + $0x68] sm:$0xff]
        %v1796 = vld [vmem:[#allocation2 + $0x70] sm:$0xff]
        %v1797 = vld [vmem:[#allocation2 + $0x78] sm:$0xff]
        %v1798 = vld [vmem:[#allocation2 + $0x80] sm:$0xff]
        %v1799 = vld [vmem:[#allocation2 + $0x88] sm:$0xff]
        %v1800 = vld [vmem:[#allocation2 + $0x90] sm:$0xff]
        %v1801 = vld [vmem:[#allocation2 + $0x98] sm:$0xff]
        %v1802 = vld [vmem:[#allocation2 + $0xa0] sm:$0xff]
        %v1803 = vld [vmem:[#allocation2 + $0xa8] sm:$0xff]
        %v1804 = vld [vmem:[#allocation2 + $0xb0] sm:$0xff]
        %v1805 = vld [vmem:[#allocation2 + $0xb8] sm:$0xff]
        %v1806 = vld [vmem:[#allocation2 + $0xc0] sm:$0xff]
        %v1807 = vld [vmem:[#allocation2 + $0xc8] sm:$0xff]
        %v1808 = vld [vmem:[#allocation2 + $0xd0] sm:$0xff]
        %v1809 = vld [vmem:[#allocation2 + $0xd8] sm:$0xff]
        %v1810 = vld [vmem:[#allocation2 + $0xe0] sm:$0xff]
        %v1811 = vld [vmem:[#allocation2 + $0xe8] sm:$0xff]
        %v1812 = vld [vmem:[#allocation2 + $0xf0] sm:$0xff]
        %v1813 = vld [vmem:[#allocation2 + $0xf8] sm:$0xff]
        %v1814 = vld [vmem:[#allocation2 + $0x100] sm:$0xff]
        %v1815 = vld [vmem:[#allocation2 + $0x108] sm:$0xff]
        %v1816 = vld [vmem:[#allocation2 + $0x110] sm:$0xff]
        %v1817 = vld [vmem:[#allocation2 + $0x118] sm:$0xff]
        %v1818 = vld [vmem:[#allocation2 + $0x120] sm:$0xff]
        %v1819 = vld [vmem:[#allocation2 + $0x128] sm:$0xff]
        %v1820 = vld [vmem:[#allocation2 + $0x130] sm:$0xff]
        %v1821 = vld [vmem:[#allocation2 + $0x138] sm:$0xff]
        %v1822 = vld [vmem:[#allocation2 + $0x140] sm:$0xff]
        %v1823 = vld [vmem:[#allocation2 + $0x148] sm:$0xff]
        %v1824 = vld [vmem:[#allocation2 + $0x150] sm:$0xff]
        %v1825 = vld [vmem:[#allocation2 + $0x158] sm:$0xff]
        %v1826 = vld [vmem:[#allocation2 + $0x160] sm:$0xff]
        %v1827 = vld [vmem:[#allocation2 + $0x168] sm:$0xff]
        %v1828 = vld [vmem:[#allocation2 + $0x170] sm:$0xff]
        %v1829 = vld [vmem:[#allocation2 + $0x178] sm:$0xff]
        %vm1830 = vcmask 261120
        %v1832 = vsel %vm1830, %v311, 0
        %v1835 = vsel %vm1830, %v312, 0
        %v1838 = vsel %vm1830, %v313, 0
        %v1841 = vsel %vm1830, %v314, 0
        %v1844 = vsel %vm1830, %v315, 0
        %v1847 = vsel %vm1830, %v316, 0
        %v1850 = vsel %vm1830, %v317, 0
        %v1853 = vsel %vm1830, %v318, 0
        %v1856 = vsel %vm1830, %v319, 0
        %v1859 = vsel %vm1830, %v320, 0
        %v1862 = vsel %vm1830, %v321, 0
        %v1865 = vsel %vm1830, %v322, 0
        %1867 = vmatprep.subr.mxu0 0.0
        %1868 = vmatpush1.msra.mxu0 0.0
        %1869 = vmatprep.subr.mxu0 0.0
        %1870 = vmatpush1.msra.mxu0 0.0
        %1871 = vmatprep.subr.mxu0 0.0
        %1872 = vmatpush1.msra.mxu0 0.0
        %1873 = vmatprep.subr.mxu0 0.0
        %1874 = vmatpush1.msra.mxu0 0.0
        %1875 = vmatprep.subr.mxu0 0.0
        %1876 = vmatpush1.msra.mxu0 0.0
        %1877 = vmatprep.subr.mxu0 0.0
        %1878 = vmatpush1.msra.mxu0 0.0
        %1879 = vmatprep.subr.mxu0 0.0
        %1880 = vmatpush1.msra.mxu0 0.0
        %1881 = vmatprep.subr.mxu0 0.0
        %1882 = vmatpush1.msra.mxu0 0.0
        %1883 = vmatprep.subr.mxu0 0.0
        %1884 = vmatpush1.msra.mxu0 0.0
        %1885 = vmatprep.subr.mxu0 0.0
        %1886 = vmatpush1.msra.mxu0 0.0
        %1887 = vmatprep.subr.mxu0 0.0
        %1888 = vmatpush1.msra.mxu0 0.0
        %1889 = vmatprep.subr.mxu0 0.0
        %1890 = vmatpush1.msra.mxu0 0.0
        %1891 = vmatprep.subr.mxu0 0.0
        %1892 = vmatpush1.msra.mxu0 0.0
        %1893 = vmatprep.subr.mxu0 0.0
        %1894 = vmatpush1.msra.mxu0 0.0
        %1895 = vmatprep.subr.mxu0 0.0
        %1896 = vmatpush1.msra.mxu0 0.0
        %1897 = vmatprep.subr.mxu0 0.0
        %1898 = vmatpush1.msra.mxu0 0.0
        %1899 = vmatprep.subr.mxu0 0.0
        %1900 = vmatpush2.msra.mxu0 0.0
        %1901 = vmatprep.subr.mxu0 0.0
        %1902 = vmatpush2.msra.mxu0 0.0
        %1903 = vmatprep.subr.mxu0 0.0
        %1904 = vmatpush2.msra.mxu0 0.0
        %1905 = vmatprep.subr.mxu0 0.0
        %1906 = vmatpush2.msra.mxu0 0.0
        %1907 = vmatprep.subr.mxu0 0.0
        %1908 = vmatpush2.msra.mxu0 0.0
        %1909 = vmatprep.subr.mxu0 0.0
        %1910 = vmatpush2.msra.mxu0 0.0
        %1911 = vmatprep.subr.mxu0 0.0
        %1912 = vmatpush2.msra.mxu0 0.0
        %1913 = vmatprep.subr.mxu0 0.0
        %1914 = vmatpush2.msra.mxu0 0.0
        %1915 = vmatprep.subr.mxu0 0.0
        %1916 = vmatpush2.msra.mxu0 0.0
        %1917 = vmatprep.subr.mxu0 0.0
        %1918 = vmatpush2.msra.mxu0 0.0
        %1919 = vmatprep.subr.mxu0 0.0
        %1920 = vmatpush2.msra.mxu0 0.0
        %1921 = vmatprep.subr.mxu0 0.0
        %1922 = vmatpush2.msra.mxu0 0.0
        %1923 = vmatprep.subr.mxu0 0.0
        %1924 = vmatpush2.msra.mxu0 0.0
        %1925 = vmatprep.subr.mxu0 0.0
        %1926 = vmatpush2.msra.mxu0 0.0
        %1927 = vmatprep.subr.mxu0 0.0
        %1928 = vmatpush2.msra.mxu0 0.0
        %1929 = vmatprep.subr.mxu0 0.0
        %1930 = vmatpush2.msra.mxu0 0.0
        %1931 = vmatprep.mubr.f32.mxu0 0.0
        %1932 = vmatmul.mubr.f32.gmra.mxu0 %v1832
        %v1933 = vpop.f32.mrf.mxu0
        %v1934 = vadd.f32 0.0, %v1933
        %v1935 = vpop.f32.mrf.mxu0
        %v1936 = vadd.f32 0.0, %v1935
        %1937 = vmatprep.mubr.f32.mxu0 0.0
        %1938 = vmatmul.mubr.f32.gmra.mxu0 %v1835
        %v1939 = vpop.f32.mrf.mxu0
        %v1940 = vadd.f32 0.0, %v1939
        %v1941 = vpop.f32.mrf.mxu0
        %v1942 = vadd.f32 0.0, %v1941
        %1943 = vmatprep.mubr.f32.mxu0 0.0
        %1944 = vmatmul.mubr.f32.gmra.mxu0 %v1838
        %v1945 = vpop.f32.mrf.mxu0
        %v1946 = vadd.f32 0.0, %v1945
        %v1947 = vpop.f32.mrf.mxu0
        %v1948 = vadd.f32 0.0, %v1947
        %1949 = vmatprep.mubr.f32.mxu0 0.0
        %1950 = vmatmul.mubr.f32.gmra.mxu0 %v1841
        %v1951 = vpop.f32.mrf.mxu0
        %v1952 = vadd.f32 0.0, %v1951
        %v1953 = vpop.f32.mrf.mxu0
        %v1954 = vadd.f32 0.0, %v1953
        %1955 = vmatprep.mubr.f32.mxu0 0.0
        %1956 = vmatmul.mubr.f32.gmra.mxu0 %v1844
        %v1957 = vpop.f32.mrf.mxu0
        %v1958 = vadd.f32 0.0, %v1957
        %v1959 = vpop.f32.mrf.mxu0
        %v1960 = vadd.f32 0.0, %v1959
        %1961 = vmatprep.mubr.f32.mxu0 0.0
        %1962 = vmatmul.mubr.f32.gmra.mxu0 %v1847
        %v1963 = vpop.f32.mrf.mxu0
        %v1964 = vadd.f32 0.0, %v1963
        %v1965 = vpop.f32.mrf.mxu0
        %v1966 = vadd.f32 0.0, %v1965
        %1967 = vmatprep.mubr.f32.mxu0 0.0
        %1968 = vmatmul.mubr.f32.gmra.mxu0 %v1850
        %v1969 = vpop.f32.mrf.mxu0
        %v1970 = vadd.f32 0.0, %v1969
        %v1971 = vpop.f32.mrf.mxu0
        %v1972 = vadd.f32 0.0, %v1971
        %1973 = vmatprep.mubr.f32.mxu0 0.0
        %1974 = vmatmul.mubr.f32.gmra.mxu0 %v1853
        %v1975 = vpop.f32.mrf.mxu0
        %v1976 = vadd.f32 0.0, %v1975
        %v1977 = vpop.f32.mrf.mxu0
        %v1978 = vadd.f32 0.0, %v1977
        %1979 = vmatprep.mubr.f32.mxu0 0.0
        %1980 = vmatmul.mubr.f32.gmra.mxu0 %v1856
        %v1981 = vpop.f32.mrf.mxu0
        %v1982 = vadd.f32 0.0, %v1981
        %v1983 = vpop.f32.mrf.mxu0
        %v1984 = vadd.f32 0.0, %v1983
        %1985 = vmatprep.mubr.f32.mxu0 0.0
        %1986 = vmatmul.mubr.f32.gmra.mxu0 %v1859
        %v1987 = vpop.f32.mrf.mxu0
        %v1988 = vadd.f32 0.0, %v1987
        %v1989 = vpop.f32.mrf.mxu0
        %v1990 = vadd.f32 0.0, %v1989
        %1991 = vmatprep.mubr.f32.mxu0 0.0
        %1992 = vmatmul.mubr.f32.gmra.mxu0 %v1862
        %v1993 = vpop.f32.mrf.mxu0
        %v1994 = vadd.f32 0.0, %v1993
        %v1995 = vpop.f32.mrf.mxu0
        %v1996 = vadd.f32 0.0, %v1995
        %1997 = vmatprep.mubr.f32.mxu0 0.0
        %1998 = vmatmul.mubr.f32.gmra.mxu0 %v1865
        %v1999 = vpop.f32.mrf.mxu0
        %v2000 = vadd.f32 0.0, %v1999
        %v2001 = vpop.f32.mrf.mxu0
        %v2002 = vadd.f32 0.0, %v2001
        %2003 = vdwg.mxu0
        %v2004 = vadd.f32 %v1782, %v1934
        %v2005 = vadd.f32 %v1783, %v1936
        %v2006 = vadd.f32 %v1784, %v1934
        %v2007 = vadd.f32 %v1785, %v1936
        %v2008 = vadd.f32 %v1786, %v1940
        %v2009 = vadd.f32 %v1787, %v1942
        %v2010 = vadd.f32 %v1788, %v1940
        %v2011 = vadd.f32 %v1789, %v1942
        %v2012 = vadd.f32 %v1790, %v1946
        %v2013 = vadd.f32 %v1791, %v1948
        %v2014 = vadd.f32 %v1792, %v1946
        %v2015 = vadd.f32 %v1793, %v1948
        %v2016 = vadd.f32 %v1794, %v1952
        %v2017 = vadd.f32 %v1795, %v1954
        %v2018 = vadd.f32 %v1796, %v1952
        %v2019 = vadd.f32 %v1797, %v1954
        %v2020 = vadd.f32 %v1798, %v1958
        %v2021 = vadd.f32 %v1799, %v1960
        %v2022 = vadd.f32 %v1800, %v1958
        %v2023 = vadd.f32 %v1801, %v1960
        %v2024 = vadd.f32 %v1802, %v1964
        %v2025 = vadd.f32 %v1803, %v1966
        %v2026 = vadd.f32 %v1804, %v1964
        %v2027 = vadd.f32 %v1805, %v1966
        %v2028 = vadd.f32 %v1806, %v1970
        %v2029 = vadd.f32 %v1807, %v1972
        %v2030 = vadd.f32 %v1808, %v1970
        %v2031 = vadd.f32 %v1809, %v1972
        %v2032 = vadd.f32 %v1810, %v1976
        %v2033 = vadd.f32 %v1811, %v1978
        %v2034 = vadd.f32 %v1812, %v1976
        %v2035 = vadd.f32 %v1813, %v1978
        %v2036 = vxor.u32 %v2004, 2147483648
        %v2037 = vxor.u32 %v2005, 2147483648
        %v2038 = vxor.u32 %v2006, 2147483648
        %v2039 = vxor.u32 %v2007, 2147483648
        %v2040 = vxor.u32 %v2008, 2147483648
        %v2041 = vxor.u32 %v2009, 2147483648
        %v2042 = vxor.u32 %v2010, 2147483648
        %v2043 = vxor.u32 %v2011, 2147483648
        %v2044 = vxor.u32 %v2012, 2147483648
        %v2045 = vxor.u32 %v2013, 2147483648
        %v2046 = vxor.u32 %v2014, 2147483648
        %v2047 = vxor.u32 %v2015, 2147483648
        %v2048 = vxor.u32 %v2016, 2147483648
        %v2049 = vxor.u32 %v2017, 2147483648
        %v2050 = vxor.u32 %v2018, 2147483648
        %v2051 = vxor.u32 %v2019, 2147483648
        %v2052 = vxor.u32 %v2020, 2147483648
        %v2053 = vxor.u32 %v2021, 2147483648
        %v2054 = vxor.u32 %v2022, 2147483648
        %v2055 = vxor.u32 %v2023, 2147483648
        %v2056 = vxor.u32 %v2024, 2147483648
        %v2057 = vxor.u32 %v2025, 2147483648
        %v2058 = vxor.u32 %v2026, 2147483648
        %v2059 = vxor.u32 %v2027, 2147483648
        %v2060 = vxor.u32 %v2028, 2147483648
        %v2061 = vxor.u32 %v2029, 2147483648
        %v2062 = vxor.u32 %v2030, 2147483648
        %v2063 = vxor.u32 %v2031, 2147483648
        %v2064 = vxor.u32 %v2032, 2147483648
        %v2065 = vxor.u32 %v2033, 2147483648
        %v2066 = vxor.u32 %v2034, 2147483648
        %v2067 = vxor.u32 %v2035, 2147483648
        %v2068 = vmul.f32 %v2036, 1.442695
        %v2069 = vpow.pop %v2068
        %v2070 = vmul.f32 %v2037, 1.442695
        %v2071 = vpow.pop %v2070
        %v2072 = vmul.f32 %v2038, 1.442695
        %v2073 = vpow.pop %v2072
        %v2074 = vmul.f32 %v2039, 1.442695
        %v2075 = vpow.pop %v2074
        %v2076 = vmul.f32 %v2040, 1.442695
        %v2077 = vpow.pop %v2076
        %v2078 = vmul.f32 %v2041, 1.442695
        %v2079 = vpow.pop %v2078
        %v2080 = vmul.f32 %v2042, 1.442695
        %v2081 = vpow.pop %v2080
        %v2082 = vmul.f32 %v2043, 1.442695
        %v2083 = vpow.pop %v2082
        %v2084 = vmul.f32 %v2044, 1.442695
        %v2085 = vpow.pop %v2084
        %v2086 = vmul.f32 %v2045, 1.442695
        %v2087 = vpow.pop %v2086
        %v2088 = vmul.f32 %v2046, 1.442695
        %v2089 = vpow.pop %v2088
        %v2090 = vmul.f32 %v2047, 1.442695
        %v2091 = vpow.pop %v2090
        %v2092 = vmul.f32 %v2048, 1.442695
        %v2093 = vpow.pop %v2092
        %v2094 = vmul.f32 %v2049, 1.442695
        %v2095 = vpow.pop %v2094
        %v2096 = vmul.f32 %v2050, 1.442695
        %v2097 = vpow.pop %v2096
        %v2098 = vmul.f32 %v2051, 1.442695
        %v2099 = vpow.pop %v2098
        %v2100 = vmul.f32 %v2052, 1.442695
        %v2101 = vpow.pop %v2100
        %v2102 = vmul.f32 %v2053, 1.442695
        %v2103 = vpow.pop %v2102
        %v2104 = vmul.f32 %v2054, 1.442695
        %v2105 = vpow.pop %v2104
        %v2106 = vmul.f32 %v2055, 1.442695
        %v2107 = vpow.pop %v2106
        %v2108 = vmul.f32 %v2056, 1.442695
        %v2109 = vpow.pop %v2108
        %v2110 = vmul.f32 %v2057, 1.442695
        %v2111 = vpow.pop %v2110
        %v2112 = vmul.f32 %v2058, 1.442695
        %v2113 = vpow.pop %v2112
        %v2114 = vmul.f32 %v2059, 1.442695
        %v2115 = vpow.pop %v2114
        %v2116 = vmul.f32 %v2060, 1.442695
        %v2117 = vpow.pop %v2116
        %v2118 = vmul.f32 %v2061, 1.442695
        %v2119 = vpow.pop %v2118
        %v2120 = vmul.f32 %v2062, 1.442695
        %v2121 = vpow.pop %v2120
        %v2122 = vmul.f32 %v2063, 1.442695
        %v2123 = vpow.pop %v2122
        %v2124 = vmul.f32 %v2064, 1.442695
        %v2125 = vpow.pop %v2124
        %v2126 = vmul.f32 %v2065, 1.442695
        %v2127 = vpow.pop %v2126
        %v2128 = vmul.f32 %v2066, 1.442695
        %v2129 = vpow.pop %v2128
        %v2130 = vmul.f32 %v2067, 1.442695
        %v2131 = vpow.pop %v2130
        %v2132 = vadd.f32 %v2069, 1.0
        %v2133 = vadd.f32 %v2071, 1.0
        %v2134 = vadd.f32 %v2073, 1.0
        %v2135 = vadd.f32 %v2075, 1.0
        %v2136 = vadd.f32 %v2077, 1.0
        %v2137 = vadd.f32 %v2079, 1.0
        %v2138 = vadd.f32 %v2081, 1.0
        %v2139 = vadd.f32 %v2083, 1.0
        %v2140 = vadd.f32 %v2085, 1.0
        %v2141 = vadd.f32 %v2087, 1.0
        %v2142 = vadd.f32 %v2089, 1.0
        %v2143 = vadd.f32 %v2091, 1.0
        %v2144 = vadd.f32 %v2093, 1.0
        %v2145 = vadd.f32 %v2095, 1.0
        %v2146 = vadd.f32 %v2097, 1.0
        %v2147 = vadd.f32 %v2099, 1.0
        %v2148 = vadd.f32 %v2101, 1.0
        %v2149 = vadd.f32 %v2103, 1.0
        %v2150 = vadd.f32 %v2105, 1.0
        %v2151 = vadd.f32 %v2107, 1.0
        %v2152 = vadd.f32 %v2109, 1.0
        %v2153 = vadd.f32 %v2111, 1.0
        %v2154 = vadd.f32 %v2113, 1.0
        %v2155 = vadd.f32 %v2115, 1.0
        %v2156 = vadd.f32 %v2117, 1.0
        %v2157 = vadd.f32 %v2119, 1.0
        %v2158 = vadd.f32 %v2121, 1.0
        %v2159 = vadd.f32 %v2123, 1.0
        %v2160 = vadd.f32 %v2125, 1.0
        %v2161 = vadd.f32 %v2127, 1.0
        %v2162 = vadd.f32 %v2129, 1.0
        %v2163 = vadd.f32 %v2131, 1.0
        %v2164 = vrcp.pop %v2132
        %v2165 = vmul.f32 1.0, %v2164
        %v2166 = vrcp.pop %v2133
        %v2167 = vmul.f32 1.0, %v2166
        %v2168 = vrcp.pop %v2134
        %v2169 = vmul.f32 1.0, %v2168
        %v2170 = vrcp.pop %v2135
        %v2171 = vmul.f32 1.0, %v2170
        %v2172 = vrcp.pop %v2136
        %v2173 = vmul.f32 1.0, %v2172
        %v2174 = vrcp.pop %v2137
        %v2175 = vmul.f32 1.0, %v2174
        %v2176 = vrcp.pop %v2138
        %v2177 = vmul.f32 1.0, %v2176
        %v2178 = vrcp.pop %v2139
        %v2179 = vmul.f32 1.0, %v2178
        %v2180 = vrcp.pop %v2140
        %v2181 = vmul.f32 1.0, %v2180
        %v2182 = vrcp.pop %v2141
        %v2183 = vmul.f32 1.0, %v2182
        %v2184 = vrcp.pop %v2142
        %v2185 = vmul.f32 1.0, %v2184
        %v2186 = vrcp.pop %v2143
        %v2187 = vmul.f32 1.0, %v2186
        %v2188 = vrcp.pop %v2144
        %v2189 = vmul.f32 1.0, %v2188
        %v2190 = vrcp.pop %v2145
        %v2191 = vmul.f32 1.0, %v2190
        %v2192 = vrcp.pop %v2146
        %v2193 = vmul.f32 1.0, %v2192
        %v2194 = vrcp.pop %v2147
        %v2195 = vmul.f32 1.0, %v2194
        %v2196 = vrcp.pop %v2148
        %v2197 = vmul.f32 1.0, %v2196
        %v2198 = vrcp.pop %v2149
        %v2199 = vmul.f32 1.0, %v2198
        %v2200 = vrcp.pop %v2150
        %v2201 = vmul.f32 1.0, %v2200
        %v2202 = vrcp.pop %v2151
        %v2203 = vmul.f32 1.0, %v2202
        %v2204 = vrcp.pop %v2152
        %v2205 = vmul.f32 1.0, %v2204
        %v2206 = vrcp.pop %v2153
        %v2207 = vmul.f32 1.0, %v2206
        %v2208 = vrcp.pop %v2154
        %v2209 = vmul.f32 1.0, %v2208
        %v2210 = vrcp.pop %v2155
        %v2211 = vmul.f32 1.0, %v2210
        %v2212 = vrcp.pop %v2156
        %v2213 = vmul.f32 1.0, %v2212
        %v2214 = vrcp.pop %v2157
        %v2215 = vmul.f32 1.0, %v2214
        %v2216 = vrcp.pop %v2158
        %v2217 = vmul.f32 1.0, %v2216
        %v2218 = vrcp.pop %v2159
        %v2219 = vmul.f32 1.0, %v2218
        %v2220 = vrcp.pop %v2160
        %v2221 = vmul.f32 1.0, %v2220
        %v2222 = vrcp.pop %v2161
        %v2223 = vmul.f32 1.0, %v2222
        %v2224 = vrcp.pop %v2162
        %v2225 = vmul.f32 1.0, %v2224
        %v2226 = vrcp.pop %v2163
        %v2227 = vmul.f32 1.0, %v2226
        %v2228 = vadd.f32 %v1982, %v342
        %v2229 = vadd.f32 %v1984, %v342
        %v2230 = vadd.f32 %v1988, %v347
        %v2231 = vadd.f32 %v1990, %v347
        %v2232 = vadd.f32 %v1994, %v352
        %v2233 = vadd.f32 %v1996, %v352
        %v2234 = vadd.f32 %v2000, %v357
        %v2235 = vadd.f32 %v2002, %v357
        %v2236 = vmul.f32 %v2165, %v2228
        %v2237 = vmul.f32 %v2167, %v2229
        %v2238 = vmul.f32 %v2169, %v2228
        %v2239 = vmul.f32 %v2171, %v2229
        %v2240 = vmul.f32 %v2173, %v2230
        %v2241 = vmul.f32 %v2175, %v2231
        %v2242 = vmul.f32 %v2177, %v2230
        %v2243 = vmul.f32 %v2179, %v2231
        %v2244 = vmul.f32 %v2181, %v2232
        %v2245 = vmul.f32 %v2183, %v2233
        %v2246 = vmul.f32 %v2185, %v2232
        %v2247 = vmul.f32 %v2187, %v2233
        %v2248 = vmul.f32 %v2189, %v2234
        %v2249 = vmul.f32 %v2191, %v2235
        %v2250 = vmul.f32 %v2193, %v2234
        %v2251 = vmul.f32 %v2195, %v2235
        %v2252 = vadd.f32 %v1814, %v2236
        %v2253 = vadd.f32 %v1815, %v2237
        %v2254 = vadd.f32 %v1816, %v2238
        %v2255 = vadd.f32 %v1817, %v2239
        %v2256 = vadd.f32 %v1818, %v2240
        %v2257 = vadd.f32 %v1819, %v2241
        %v2258 = vadd.f32 %v1820, %v2242
        %v2259 = vadd.f32 %v1821, %v2243
        %v2260 = vadd.f32 %v1822, %v2244
        %v2261 = vadd.f32 %v1823, %v2245
        %v2262 = vadd.f32 %v1824, %v2246
        %v2263 = vadd.f32 %v1825, %v2247
        %v2264 = vadd.f32 %v1826, %v2248
        %v2265 = vadd.f32 %v1827, %v2249
        %v2266 = vadd.f32 %v1828, %v2250
        %v2267 = vadd.f32 %v1829, %v2251
        %v2268 = vtanh.pop %v2252
        %v2269 = vtanh.pop %v2253
        %v2270 = vtanh.pop %v2254
        %v2271 = vtanh.pop %v2255
        %v2272 = vtanh.pop %v2256
        %v2273 = vtanh.pop %v2257
        %v2274 = vtanh.pop %v2258
        %v2275 = vtanh.pop %v2259
        %v2276 = vtanh.pop %v2260
        %v2277 = vtanh.pop %v2261
        %v2278 = vtanh.pop %v2262
        %v2279 = vtanh.pop %v2263
        %v2280 = vtanh.pop %v2264
        %v2281 = vtanh.pop %v2265
        %v2282 = vtanh.pop %v2266
        %v2283 = vtanh.pop %v2267
        %v2284 = vsub.f32 1.0, %v2197
        %v2285 = vsub.f32 1.0, %v2199
        %v2286 = vsub.f32 1.0, %v2201
        %v2287 = vsub.f32 1.0, %v2203
        %v2288 = vsub.f32 1.0, %v2205
        %v2289 = vsub.f32 1.0, %v2207
        %v2290 = vsub.f32 1.0, %v2209
        %v2291 = vsub.f32 1.0, %v2211
        %v2292 = vsub.f32 1.0, %v2213
        %v2293 = vsub.f32 1.0, %v2215
        %v2294 = vsub.f32 1.0, %v2217
        %v2295 = vsub.f32 1.0, %v2219
        %v2296 = vsub.f32 1.0, %v2221
        %v2297 = vsub.f32 1.0, %v2223
        %v2298 = vsub.f32 1.0, %v2225
        %v2299 = vsub.f32 1.0, %v2227
        %v2300 = vmul.f32 %v2284, %v2268
        %v2301 = vmul.f32 %v2285, %v2269
        %v2302 = vmul.f32 %v2286, %v2270
        %v2303 = vmul.f32 %v2287, %v2271
        %v2304 = vmul.f32 %v2288, %v2272
        %v2305 = vmul.f32 %v2289, %v2273
        %v2306 = vmul.f32 %v2290, %v2274
        %v2307 = vmul.f32 %v2291, %v2275
        %v2308 = vmul.f32 %v2292, %v2276
        %v2309 = vmul.f32 %v2293, %v2277
        %v2310 = vmul.f32 %v2294, %v2278
        %v2311 = vmul.f32 %v2295, %v2279
        %v2312 = vmul.f32 %v2296, %v2280
        %v2313 = vmul.f32 %v2297, %v2281
        %v2314 = vmul.f32 %v2298, %v2282
        %v2315 = vmul.f32 %v2299, %v2283
        %v2316 = vmul.f32 %v2197, 0.0
        %v2317 = vmul.f32 %v2199, 0.0
        %v2318 = vmul.f32 %v2201, 0.0
        %v2319 = vmul.f32 %v2203, 0.0
        %v2320 = vmul.f32 %v2205, 0.0
        %v2321 = vmul.f32 %v2207, 0.0
        %v2322 = vmul.f32 %v2209, 0.0
        %v2323 = vmul.f32 %v2211, 0.0
        %v2324 = vmul.f32 %v2213, 0.0
        %v2325 = vmul.f32 %v2215, 0.0
        %v2326 = vmul.f32 %v2217, 0.0
        %v2327 = vmul.f32 %v2219, 0.0
        %v2328 = vmul.f32 %v2221, 0.0
        %v2329 = vmul.f32 %v2223, 0.0
        %v2330 = vmul.f32 %v2225, 0.0
        %v2331 = vmul.f32 %v2227, 0.0
        %v2332 = vadd.f32 %v2300, %v2316
        %v2333 = vadd.f32 %v2301, %v2317
        %v2334 = vadd.f32 %v2302, %v2318
        %v2335 = vadd.f32 %v2303, %v2319
        %v2336 = vadd.f32 %v2304, %v2320
        %v2337 = vadd.f32 %v2305, %v2321
        %v2338 = vadd.f32 %v2306, %v2322
        %v2339 = vadd.f32 %v2307, %v2323
        %v2340 = vadd.f32 %v2308, %v2324
        %v2341 = vadd.f32 %v2309, %v2325
        %v2342 = vadd.f32 %v2310, %v2326
        %v2343 = vadd.f32 %v2311, %v2327
        %v2344 = vadd.f32 %v2312, %v2328
        %v2345 = vadd.f32 %v2313, %v2329
        %v2346 = vadd.f32 %v2314, %v2330
        %v2347 = vadd.f32 %v2315, %v2331
        %v2348 = vld [vmem:[%s1069] sm:$0xff]
        %v2349 = vld [vmem:[%s1069 + $0x8] sm:$0xff]
        %v2350 = vld [vmem:[%s1069 + $0x10] sm:$0xff]
        %v2351 = vld [vmem:[%s1069 + $0x18] sm:$0xff]
        %v2352 = vld [vmem:[%s1069 + $0x20] sm:$0xff]
        %v2353 = vld [vmem:[%s1069 + $0x28] sm:$0xff]
        %v2354 = vld [vmem:[%s1069 + $0x30] sm:$0xff]
        %v2355 = vld [vmem:[%s1069 + $0x38] sm:$0xff]
        %v2356 = vld [vmem:[%s1069 + $0x40] sm:$0xff]
        %v2357 = vld [vmem:[%s1069 + $0x48] sm:$0xff]
        %v2358 = vld [vmem:[%s1069 + $0x50] sm:$0xff]
        %v2359 = vld [vmem:[%s1069 + $0x58] sm:$0xff]
        %v2360 = vld [vmem:[%s1069 + $0x60] sm:$0xff]
        %v2361 = vld [vmem:[%s1069 + $0x68] sm:$0xff]
        %v2362 = vld [vmem:[%s1069 + $0x70] sm:$0xff]
        %v2363 = vld [vmem:[%s1069 + $0x78] sm:$0xff]
        %v2364 = vld [vmem:[%s1069 + $0x80] sm:$0xff]
        %v2365 = vld [vmem:[%s1069 + $0x88] sm:$0xff]
        %v2366 = vld [vmem:[%s1069 + $0x90] sm:$0xff]
        %v2367 = vld [vmem:[%s1069 + $0x98] sm:$0xff]
        %v2368 = vld [vmem:[%s1069 + $0xa0] sm:$0xff]
        %v2369 = vld [vmem:[%s1069 + $0xa8] sm:$0xff]
        %v2370 = vld [vmem:[%s1069 + $0xb0] sm:$0xff]
        %v2371 = vld [vmem:[%s1069 + $0xb8] sm:$0xff]
        %v2372 = vld [vmem:[%s1069 + $0xc0] sm:$0xff]
        %v2373 = vld [vmem:[%s1069 + $0xc8] sm:$0xff]
        %v2374 = vld [vmem:[%s1069 + $0xd0] sm:$0xff]
        %v2375 = vld [vmem:[%s1069 + $0xd8] sm:$0xff]
        %v2376 = vld [vmem:[%s1069 + $0xe0] sm:$0xff]
        %v2377 = vld [vmem:[%s1069 + $0xe8] sm:$0xff]
        %v2378 = vld [vmem:[%s1069 + $0xf0] sm:$0xff]
        %v2379 = vld [vmem:[%s1069 + $0xf8] sm:$0xff]
        %v2380 = vld [vmem:[%s1069 + $0x100] sm:$0xff]
        %v2381 = vld [vmem:[%s1069 + $0x108] sm:$0xff]
        %v2382 = vld [vmem:[%s1069 + $0x110] sm:$0xff]
        %v2383 = vld [vmem:[%s1069 + $0x118] sm:$0xff]
        %v2384 = vld [vmem:[%s1069 + $0x120] sm:$0xff]
        %v2385 = vld [vmem:[%s1069 + $0x128] sm:$0xff]
        %v2386 = vld [vmem:[%s1069 + $0x130] sm:$0xff]
        %v2387 = vld [vmem:[%s1069 + $0x138] sm:$0xff]
        %v2388 = vld [vmem:[%s1069 + $0x140] sm:$0xff]
        %v2389 = vld [vmem:[%s1069 + $0x148] sm:$0xff]
        %v2390 = vld [vmem:[%s1069 + $0x150] sm:$0xff]
        %v2391 = vld [vmem:[%s1069 + $0x158] sm:$0xff]
        %v2392 = vld [vmem:[%s1069 + $0x160] sm:$0xff]
        %v2393 = vld [vmem:[%s1069 + $0x168] sm:$0xff]
        %v2394 = vld [vmem:[%s1069 + $0x170] sm:$0xff]
        %v2395 = vld [vmem:[%s1069 + $0x178] sm:$0xff]
        %2396 = vmatprep.subr.mxu0 0.0
        %2397 = vmatpush1.msra.mxu0 0.0
        %2398 = vmatprep.subr.mxu0 0.0
        %2399 = vmatpush1.msra.mxu0 0.0
        %2400 = vmatprep.subr.mxu0 0.0
        %2401 = vmatpush1.msra.mxu0 0.0
        %2402 = vmatprep.subr.mxu0 0.0
        %2403 = vmatpush1.msra.mxu0 0.0
        %2404 = vmatprep.subr.mxu0 0.0
        %2405 = vmatpush1.msra.mxu0 0.0
        %2406 = vmatprep.subr.mxu0 0.0
        %2407 = vmatpush1.msra.mxu0 0.0
        %2408 = vmatprep.subr.mxu0 0.0
        %2409 = vmatpush1.msra.mxu0 0.0
        %2410 = vmatprep.subr.mxu0 0.0
        %2411 = vmatpush1.msra.mxu0 0.0
        %2412 = vmatprep.subr.mxu0 0.0
        %2413 = vmatpush1.msra.mxu0 0.0
        %2414 = vmatprep.subr.mxu0 0.0
        %2415 = vmatpush1.msra.mxu0 0.0
        %2416 = vmatprep.subr.mxu0 0.0
        %2417 = vmatpush1.msra.mxu0 0.0
        %2418 = vmatprep.subr.mxu0 0.0
        %2419 = vmatpush1.msra.mxu0 0.0
        %2420 = vmatprep.subr.mxu0 %v2345
        %2421 = vmatpush1.msra.mxu0 %v2344
        %2422 = vmatprep.subr.mxu0 %v2341
        %2423 = vmatpush1.msra.mxu0 %v2340
        %2424 = vmatprep.subr.mxu0 %v2337
        %2425 = vmatpush1.msra.mxu0 %v2336
        %2426 = vmatprep.subr.mxu0 %v2333
        %2427 = vmatpush1.msra.mxu0 %v2332
        %2428 = vmatprep.subr.mxu0 0.0
        %2429 = vmatpush2.msra.mxu0 0.0
        %2430 = vmatprep.subr.mxu0 0.0
        %2431 = vmatpush2.msra.mxu0 0.0
        %2432 = vmatprep.subr.mxu0 0.0
        %2433 = vmatpush2.msra.mxu0 0.0
        %2434 = vmatprep.subr.mxu0 0.0
        %2435 = vmatpush2.msra.mxu0 0.0
        %2436 = vmatprep.subr.mxu0 0.0
        %2437 = vmatpush2.msra.mxu0 0.0
        %2438 = vmatprep.subr.mxu0 0.0
        %2439 = vmatpush2.msra.mxu0 0.0
        %2440 = vmatprep.subr.mxu0 0.0
        %2441 = vmatpush2.msra.mxu0 0.0
        %2442 = vmatprep.subr.mxu0 0.0
        %2443 = vmatpush2.msra.mxu0 0.0
        %2444 = vmatprep.subr.mxu0 0.0
        %2445 = vmatpush2.msra.mxu0 0.0
        %2446 = vmatprep.subr.mxu0 0.0
        %2447 = vmatpush2.msra.mxu0 0.0
        %2448 = vmatprep.subr.mxu0 0.0
        %2449 = vmatpush2.msra.mxu0 0.0
        %2450 = vmatprep.subr.mxu0 0.0
        %2451 = vmatpush2.msra.mxu0 0.0
        %2452 = vmatprep.subr.mxu0 0.0
        %2453 = vmatpush2.msra.mxu0 0.0
        %2454 = vmatprep.subr.mxu0 0.0
        %2455 = vmatpush2.msra.mxu0 0.0
        %2456 = vmatprep.subr.mxu0 0.0
        %2457 = vmatpush2.msra.mxu0 0.0
        %2458 = vmatprep.subr.mxu0 0.0
        %2459 = vmatpush2.msra.mxu0 0.0
        %2460 = vmatprep.mubr.f32.mxu0 0.0
        %2461 = vmatmul.mubr.f32.gmra.mxu0 %v1832
        %v2462 = vpop.f32.mrf.mxu0
        %v2463 = vadd.f32 0.0, %v2462
        %v2464 = vpop.f32.mrf.mxu0
        %v2465 = vadd.f32 0.0, %v2464
        %2466 = vmatprep.mubr.f32.mxu0 0.0
        %2467 = vmatmul.mubr.f32.gmra.mxu0 %v1835
        %v2468 = vpop.f32.mrf.mxu0
        %v2469 = vadd.f32 0.0, %v2468
        %v2470 = vpop.f32.mrf.mxu0
        %v2471 = vadd.f32 0.0, %v2470
        %2472 = vmatprep.mubr.f32.mxu0 0.0
        %2473 = vmatmul.mubr.f32.gmra.mxu0 %v1838
        %v2474 = vpop.f32.mrf.mxu0
        %v2475 = vadd.f32 0.0, %v2474
        %v2476 = vpop.f32.mrf.mxu0
        %v2477 = vadd.f32 0.0, %v2476
        %2478 = vmatprep.mubr.f32.mxu0 0.0
        %2479 = vmatmul.mubr.f32.gmra.mxu0 %v1841
        %v2480 = vpop.f32.mrf.mxu0
        %v2481 = vadd.f32 0.0, %v2480
        %v2482 = vpop.f32.mrf.mxu0
        %v2483 = vadd.f32 0.0, %v2482
        %2484 = vmatprep.mubr.f32.mxu0 0.0
        %2485 = vmatmul.mubr.f32.gmra.mxu0 %v1844
        %v2486 = vpop.f32.mrf.mxu0
        %v2487 = vadd.f32 0.0, %v2486
        %v2488 = vpop.f32.mrf.mxu0
        %v2489 = vadd.f32 0.0, %v2488
        %2490 = vmatprep.mubr.f32.mxu0 0.0
        %2491 = vmatmul.mubr.f32.gmra.mxu0 %v1847
        %v2492 = vpop.f32.mrf.mxu0
        %v2493 = vadd.f32 0.0, %v2492
        %v2494 = vpop.f32.mrf.mxu0
        %v2495 = vadd.f32 0.0, %v2494
        %2496 = vmatprep.mubr.f32.mxu0 0.0
        %2497 = vmatmul.mubr.f32.gmra.mxu0 %v1850
        %v2498 = vpop.f32.mrf.mxu0
        %v2499 = vadd.f32 0.0, %v2498
        %v2500 = vpop.f32.mrf.mxu0
        %v2501 = vadd.f32 0.0, %v2500
        %2502 = vmatprep.mubr.f32.mxu0 0.0
        %2503 = vmatmul.mubr.f32.gmra.mxu0 %v1853
        %v2504 = vpop.f32.mrf.mxu0
        %v2505 = vadd.f32 0.0, %v2504
        %v2506 = vpop.f32.mrf.mxu0
        %v2507 = vadd.f32 0.0, %v2506
        %2508 = vmatprep.mubr.f32.mxu0 0.0
        %2509 = vmatmul.mubr.f32.gmra.mxu0 %v1856
        %v2510 = vpop.f32.mrf.mxu0
        %v2511 = vadd.f32 0.0, %v2510
        %v2512 = vpop.f32.mrf.mxu0
        %v2513 = vadd.f32 0.0, %v2512
        %2514 = vmatprep.mubr.f32.mxu0 0.0
        %2515 = vmatmul.mubr.f32.gmra.mxu0 %v1859
        %v2516 = vpop.f32.mrf.mxu0
        %v2517 = vadd.f32 0.0, %v2516
        %v2518 = vpop.f32.mrf.mxu0
        %v2519 = vadd.f32 0.0, %v2518
        %2520 = vmatprep.mubr.f32.mxu0 0.0
        %2521 = vmatmul.mubr.f32.gmra.mxu0 %v1862
        %v2522 = vpop.f32.mrf.mxu0
        %v2523 = vadd.f32 0.0, %v2522
        %v2524 = vpop.f32.mrf.mxu0
        %v2525 = vadd.f32 0.0, %v2524
        %2526 = vmatprep.mubr.f32.mxu0 0.0
        %2527 = vmatmul.mubr.f32.gmra.mxu0 %v1865
        %v2528 = vpop.f32.mrf.mxu0
        %v2529 = vadd.f32 0.0, %v2528
        %v2530 = vpop.f32.mrf.mxu0
        %v2531 = vadd.f32 0.0, %v2530
        %2532 = vdwg.mxu0
        %2533 = vmatprep.subr.mxu0 0.0
        %2534 = vmatpush1.msra.mxu0 0.0
        %2535 = vmatprep.subr.mxu0 0.0
        %2536 = vmatpush1.msra.mxu0 0.0
        %2537 = vmatprep.subr.mxu0 0.0
        %2538 = vmatpush1.msra.mxu0 0.0
        %2539 = vmatprep.subr.mxu0 0.0
        %2540 = vmatpush1.msra.mxu0 0.0
        %2541 = vmatprep.subr.mxu0 0.0
        %2542 = vmatpush1.msra.mxu0 0.0
        %2543 = vmatprep.subr.mxu0 0.0
        %2544 = vmatpush1.msra.mxu0 0.0
        %2545 = vmatprep.subr.mxu0 0.0
        %2546 = vmatpush1.msra.mxu0 0.0
        %2547 = vmatprep.subr.mxu0 0.0
        %2548 = vmatpush1.msra.mxu0 0.0
        %2549 = vmatprep.subr.mxu0 0.0
        %2550 = vmatpush1.msra.mxu0 0.0
        %2551 = vmatprep.subr.mxu0 0.0
        %2552 = vmatpush1.msra.mxu0 0.0
        %2553 = vmatprep.subr.mxu0 0.0
        %2554 = vmatpush1.msra.mxu0 0.0
        %2555 = vmatprep.subr.mxu0 0.0
        %2556 = vmatpush1.msra.mxu0 0.0
        %2557 = vmatprep.subr.mxu0 %v2347
        %2558 = vmatpush1.msra.mxu0 %v2346
        %2559 = vmatprep.subr.mxu0 %v2343
        %2560 = vmatpush1.msra.mxu0 %v2342
        %2561 = vmatprep.subr.mxu0 %v2339
        %2562 = vmatpush1.msra.mxu0 %v2338
        %2563 = vmatprep.subr.mxu0 %v2335
        %2564 = vmatpush1.msra.mxu0 %v2334
        %2565 = vmatprep.subr.mxu0 0.0
        %2566 = vmatpush2.msra.mxu0 0.0
        %2567 = vmatprep.subr.mxu0 0.0
        %2568 = vmatpush2.msra.mxu0 0.0
        %2569 = vmatprep.subr.mxu0 0.0
        %2570 = vmatpush2.msra.mxu0 0.0
        %2571 = vmatprep.subr.mxu0 0.0
        %2572 = vmatpush2.msra.mxu0 0.0
        %2573 = vmatprep.subr.mxu0 0.0
        %2574 = vmatpush2.msra.mxu0 0.0
        %2575 = vmatprep.subr.mxu0 0.0
        %2576 = vmatpush2.msra.mxu0 0.0
        %2577 = vmatprep.subr.mxu0 0.0
        %2578 = vmatpush2.msra.mxu0 0.0
        %2579 = vmatprep.subr.mxu0 0.0
        %2580 = vmatpush2.msra.mxu0 0.0
        %2581 = vmatprep.subr.mxu0 0.0
        %2582 = vmatpush2.msra.mxu0 0.0
        %2583 = vmatprep.subr.mxu0 0.0
        %2584 = vmatpush2.msra.mxu0 0.0
        %2585 = vmatprep.subr.mxu0 0.0
        %2586 = vmatpush2.msra.mxu0 0.0
        %2587 = vmatprep.subr.mxu0 0.0
        %2588 = vmatpush2.msra.mxu0 0.0
        %2589 = vmatprep.subr.mxu0 0.0
        %2590 = vmatpush2.msra.mxu0 0.0
        %2591 = vmatprep.subr.mxu0 0.0
        %2592 = vmatpush2.msra.mxu0 0.0
        %2593 = vmatprep.subr.mxu0 0.0
        %2594 = vmatpush2.msra.mxu0 0.0
        %2595 = vmatprep.subr.mxu0 0.0
        %2596 = vmatpush2.msra.mxu0 0.0
        %2597 = vmatprep.mubr.f32.mxu0 0.0
        %2598 = vmatmul.mubr.f32.gmra.mxu0 %v1832
        %v2599 = vpop.f32.mrf.mxu0
        %v2600 = vadd.f32 0.0, %v2599
        %v2601 = vpop.f32.mrf.mxu0
        %v2602 = vadd.f32 0.0, %v2601
        %2603 = vmatprep.mubr.f32.mxu0 0.0
        %2604 = vmatmul.mubr.f32.gmra.mxu0 %v1835
        %v2605 = vpop.f32.mrf.mxu0
        %v2606 = vadd.f32 0.0, %v2605
        %v2607 = vpop.f32.mrf.mxu0
        %v2608 = vadd.f32 0.0, %v2607
        %2609 = vmatprep.mubr.f32.mxu0 0.0
        %2610 = vmatmul.mubr.f32.gmra.mxu0 %v1838
        %v2611 = vpop.f32.mrf.mxu0
        %v2612 = vadd.f32 0.0, %v2611
        %v2613 = vpop.f32.mrf.mxu0
        %v2614 = vadd.f32 0.0, %v2613
        %2615 = vmatprep.mubr.f32.mxu0 0.0
        %2616 = vmatmul.mubr.f32.gmra.mxu0 %v1841
        %v2617 = vpop.f32.mrf.mxu0
        %v2618 = vadd.f32 0.0, %v2617
        %v2619 = vpop.f32.mrf.mxu0
        %v2620 = vadd.f32 0.0, %v2619
        %2621 = vmatprep.mubr.f32.mxu0 0.0
        %2622 = vmatmul.mubr.f32.gmra.mxu0 %v1844
        %v2623 = vpop.f32.mrf.mxu0
        %v2624 = vadd.f32 0.0, %v2623
        %v2625 = vpop.f32.mrf.mxu0
        %v2626 = vadd.f32 0.0, %v2625
        %2627 = vmatprep.mubr.f32.mxu0 0.0
        %2628 = vmatmul.mubr.f32.gmra.mxu0 %v1847
        %v2629 = vpop.f32.mrf.mxu0
        %v2630 = vadd.f32 0.0, %v2629
        %v2631 = vpop.f32.mrf.mxu0
        %v2632 = vadd.f32 0.0, %v2631
        %2633 = vmatprep.mubr.f32.mxu0 0.0
        %2634 = vmatmul.mubr.f32.gmra.mxu0 %v1850
        %v2635 = vpop.f32.mrf.mxu0
        %v2636 = vadd.f32 0.0, %v2635
        %v2637 = vpop.f32.mrf.mxu0
        %v2638 = vadd.f32 0.0, %v2637
        %2639 = vmatprep.mubr.f32.mxu0 0.0
        %2640 = vmatmul.mubr.f32.gmra.mxu0 %v1853
        %v2641 = vpop.f32.mrf.mxu0
        %v2642 = vadd.f32 0.0, %v2641
        %v2643 = vpop.f32.mrf.mxu0
        %v2644 = vadd.f32 0.0, %v2643
        %2645 = vmatprep.mubr.f32.mxu0 0.0
        %2646 = vmatmul.mubr.f32.gmra.mxu0 %v1856
        %v2647 = vpop.f32.mrf.mxu0
        %v2648 = vadd.f32 0.0, %v2647
        %v2649 = vpop.f32.mrf.mxu0
        %v2650 = vadd.f32 0.0, %v2649
        %2651 = vmatprep.mubr.f32.mxu0 0.0
        %2652 = vmatmul.mubr.f32.gmra.mxu0 %v1859
        %v2653 = vpop.f32.mrf.mxu0
        %v2654 = vadd.f32 0.0, %v2653
        %v2655 = vpop.f32.mrf.mxu0
        %v2656 = vadd.f32 0.0, %v2655
        %2657 = vmatprep.mubr.f32.mxu0 0.0
        %2658 = vmatmul.mubr.f32.gmra.mxu0 %v1862
        %v2659 = vpop.f32.mrf.mxu0
        %v2660 = vadd.f32 0.0, %v2659
        %v2661 = vpop.f32.mrf.mxu0
        %v2662 = vadd.f32 0.0, %v2661
        %2663 = vmatprep.mubr.f32.mxu0 0.0
        %2664 = vmatmul.mubr.f32.gmra.mxu0 %v1865
        %v2665 = vpop.f32.mrf.mxu0
        %v2666 = vadd.f32 0.0, %v2665
        %v2667 = vpop.f32.mrf.mxu0
        %v2668 = vadd.f32 0.0, %v2667
        %2669 = vdwg.mxu0
        %v2670 = vadd.f32 %v2348, %v2463
        %v2671 = vadd.f32 %v2349, %v2465
        %v2672 = vadd.f32 %v2350, %v2600
        %v2673 = vadd.f32 %v2351, %v2602
        %v2674 = vadd.f32 %v2352, %v2469
        %v2675 = vadd.f32 %v2353, %v2471
        %v2676 = vadd.f32 %v2354, %v2606
        %v2677 = vadd.f32 %v2355, %v2608
        %v2678 = vadd.f32 %v2356, %v2475
        %v2679 = vadd.f32 %v2357, %v2477
        %v2680 = vadd.f32 %v2358, %v2612
        %v2681 = vadd.f32 %v2359, %v2614
        %v2682 = vadd.f32 %v2360, %v2481
        %v2683 = vadd.f32 %v2361, %v2483
        %v2684 = vadd.f32 %v2362, %v2618
        %v2685 = vadd.f32 %v2363, %v2620
        %v2686 = vadd.f32 %v2364, %v2487
        %v2687 = vadd.f32 %v2365, %v2489
        %v2688 = vadd.f32 %v2366, %v2624
        %v2689 = vadd.f32 %v2367, %v2626
        %v2690 = vadd.f32 %v2368, %v2493
        %v2691 = vadd.f32 %v2369, %v2495
        %v2692 = vadd.f32 %v2370, %v2630
        %v2693 = vadd.f32 %v2371, %v2632
        %v2694 = vadd.f32 %v2372, %v2499
        %v2695 = vadd.f32 %v2373, %v2501
        %v2696 = vadd.f32 %v2374, %v2636
        %v2697 = vadd.f32 %v2375, %v2638
        %v2698 = vadd.f32 %v2376, %v2505
        %v2699 = vadd.f32 %v2377, %v2507
        %v2700 = vadd.f32 %v2378, %v2642
        %v2701 = vadd.f32 %v2379, %v2644
        %v2702 = vxor.u32 %v2670, 2147483648
        %v2703 = vxor.u32 %v2671, 2147483648
        %v2704 = vxor.u32 %v2672, 2147483648
        %v2705 = vxor.u32 %v2673, 2147483648
        %v2706 = vxor.u32 %v2674, 2147483648
        %v2707 = vxor.u32 %v2675, 2147483648
        %v2708 = vxor.u32 %v2676, 2147483648
        %v2709 = vxor.u32 %v2677, 2147483648
        %v2710 = vxor.u32 %v2678, 2147483648
        %v2711 = vxor.u32 %v2679, 2147483648
        %v2712 = vxor.u32 %v2680, 2147483648
        %v2713 = vxor.u32 %v2681, 2147483648
        %v2714 = vxor.u32 %v2682, 2147483648
        %v2715 = vxor.u32 %v2683, 2147483648
        %v2716 = vxor.u32 %v2684, 2147483648
        %v2717 = vxor.u32 %v2685, 2147483648
        %v2718 = vxor.u32 %v2686, 2147483648
        %v2719 = vxor.u32 %v2687, 2147483648
        %v2720 = vxor.u32 %v2688, 2147483648
        %v2721 = vxor.u32 %v2689, 2147483648
        %v2722 = vxor.u32 %v2690, 2147483648
        %v2723 = vxor.u32 %v2691, 2147483648
        %v2724 = vxor.u32 %v2692, 2147483648
        %v2725 = vxor.u32 %v2693, 2147483648
        %v2726 = vxor.u32 %v2694, 2147483648
        %v2727 = vxor.u32 %v2695, 2147483648
        %v2728 = vxor.u32 %v2696, 2147483648
        %v2729 = vxor.u32 %v2697, 2147483648
        %v2730 = vxor.u32 %v2698, 2147483648
        %v2731 = vxor.u32 %v2699, 2147483648
        %v2732 = vxor.u32 %v2700, 2147483648
        %v2733 = vxor.u32 %v2701, 2147483648
        %v2734 = vmul.f32 %v2702, 1.442695
        %v2735 = vpow.pop %v2734
        %v2736 = vmul.f32 %v2703, 1.442695
        %v2737 = vpow.pop %v2736
        %v2738 = vmul.f32 %v2704, 1.442695
        %v2739 = vpow.pop %v2738
        %v2740 = vmul.f32 %v2705, 1.442695
        %v2741 = vpow.pop %v2740
        %v2742 = vmul.f32 %v2706, 1.442695
        %v2743 = vpow.pop %v2742
        %v2744 = vmul.f32 %v2707, 1.442695
        %v2745 = vpow.pop %v2744
        %v2746 = vmul.f32 %v2708, 1.442695
        %v2747 = vpow.pop %v2746
        %v2748 = vmul.f32 %v2709, 1.442695
        %v2749 = vpow.pop %v2748
        %v2750 = vmul.f32 %v2710, 1.442695
        %v2751 = vpow.pop %v2750
        %v2752 = vmul.f32 %v2711, 1.442695
        %v2753 = vpow.pop %v2752
        %v2754 = vmul.f32 %v2712, 1.442695
        %v2755 = vpow.pop %v2754
        %v2756 = vmul.f32 %v2713, 1.442695
        %v2757 = vpow.pop %v2756
        %v2758 = vmul.f32 %v2714, 1.442695
        %v2759 = vpow.pop %v2758
        %v2760 = vmul.f32 %v2715, 1.442695
        %v2761 = vpow.pop %v2760
        %v2762 = vmul.f32 %v2716, 1.442695
        %v2763 = vpow.pop %v2762
        %v2764 = vmul.f32 %v2717, 1.442695
        %v2765 = vpow.pop %v2764
        %v2766 = vmul.f32 %v2718, 1.442695
        %v2767 = vpow.pop %v2766
        %v2768 = vmul.f32 %v2719, 1.442695
        %v2769 = vpow.pop %v2768
        %v2770 = vmul.f32 %v2720, 1.442695
        %v2771 = vpow.pop %v2770
        %v2772 = vmul.f32 %v2721, 1.442695
        %v2773 = vpow.pop %v2772
        %v2774 = vmul.f32 %v2722, 1.442695
        %v2775 = vpow.pop %v2774
        %v2776 = vmul.f32 %v2723, 1.442695
        %v2777 = vpow.pop %v2776
        %v2778 = vmul.f32 %v2724, 1.442695
        %v2779 = vpow.pop %v2778
        %v2780 = vmul.f32 %v2725, 1.442695
        %v2781 = vpow.pop %v2780
        %v2782 = vmul.f32 %v2726, 1.442695
        %v2783 = vpow.pop %v2782
        %v2784 = vmul.f32 %v2727, 1.442695
        %v2785 = vpow.pop %v2784
        %v2786 = vmul.f32 %v2728, 1.442695
        %v2787 = vpow.pop %v2786
        %v2788 = vmul.f32 %v2729, 1.442695
        %v2789 = vpow.pop %v2788
        %v2790 = vmul.f32 %v2730, 1.442695
        %v2791 = vpow.pop %v2790
        %v2792 = vmul.f32 %v2731, 1.442695
        %v2793 = vpow.pop %v2792
        %v2794 = vmul.f32 %v2732, 1.442695
        %v2795 = vpow.pop %v2794
        %v2796 = vmul.f32 %v2733, 1.442695
        %v2797 = vpow.pop %v2796
        %v2798 = vadd.f32 %v2735, 1.0
        %v2799 = vadd.f32 %v2737, 1.0
        %v2800 = vadd.f32 %v2739, 1.0
        %v2801 = vadd.f32 %v2741, 1.0
        %v2802 = vadd.f32 %v2743, 1.0
        %v2803 = vadd.f32 %v2745, 1.0
        %v2804 = vadd.f32 %v2747, 1.0
        %v2805 = vadd.f32 %v2749, 1.0
        %v2806 = vadd.f32 %v2751, 1.0
        %v2807 = vadd.f32 %v2753, 1.0
        %v2808 = vadd.f32 %v2755, 1.0
        %v2809 = vadd.f32 %v2757, 1.0
        %v2810 = vadd.f32 %v2759, 1.0
        %v2811 = vadd.f32 %v2761, 1.0
        %v2812 = vadd.f32 %v2763, 1.0
        %v2813 = vadd.f32 %v2765, 1.0
        %v2814 = vadd.f32 %v2767, 1.0
        %v2815 = vadd.f32 %v2769, 1.0
        %v2816 = vadd.f32 %v2771, 1.0
        %v2817 = vadd.f32 %v2773, 1.0
        %v2818 = vadd.f32 %v2775, 1.0
        %v2819 = vadd.f32 %v2777, 1.0
        %v2820 = vadd.f32 %v2779, 1.0
        %v2821 = vadd.f32 %v2781, 1.0
        %v2822 = vadd.f32 %v2783, 1.0
        %v2823 = vadd.f32 %v2785, 1.0
        %v2824 = vadd.f32 %v2787, 1.0
        %v2825 = vadd.f32 %v2789, 1.0
        %v2826 = vadd.f32 %v2791, 1.0
        %v2827 = vadd.f32 %v2793, 1.0
        %v2828 = vadd.f32 %v2795, 1.0
        %v2829 = vadd.f32 %v2797, 1.0
        %v2830 = vrcp.pop %v2798
        %v2831 = vmul.f32 1.0, %v2830
        %v2832 = vrcp.pop %v2799
        %v2833 = vmul.f32 1.0, %v2832
        %v2834 = vrcp.pop %v2800
        %v2835 = vmul.f32 1.0, %v2834
        %v2836 = vrcp.pop %v2801
        %v2837 = vmul.f32 1.0, %v2836
        %v2838 = vrcp.pop %v2802
        %v2839 = vmul.f32 1.0, %v2838
        %v2840 = vrcp.pop %v2803
        %v2841 = vmul.f32 1.0, %v2840
        %v2842 = vrcp.pop %v2804
        %v2843 = vmul.f32 1.0, %v2842
        %v2844 = vrcp.pop %v2805
        %v2845 = vmul.f32 1.0, %v2844
        %v2846 = vrcp.pop %v2806
        %v2847 = vmul.f32 1.0, %v2846
        %v2848 = vrcp.pop %v2807
        %v2849 = vmul.f32 1.0, %v2848
        %v2850 = vrcp.pop %v2808
        %v2851 = vmul.f32 1.0, %v2850
        %v2852 = vrcp.pop %v2809
        %v2853 = vmul.f32 1.0, %v2852
        %v2854 = vrcp.pop %v2810
        %v2855 = vmul.f32 1.0, %v2854
        %v2856 = vrcp.pop %v2811
        %v2857 = vmul.f32 1.0, %v2856
        %v2858 = vrcp.pop %v2812
        %v2859 = vmul.f32 1.0, %v2858
        %v2860 = vrcp.pop %v2813
        %v2861 = vmul.f32 1.0, %v2860
        %v2862 = vrcp.pop %v2814
        %v2863 = vmul.f32 1.0, %v2862
        %v2864 = vrcp.pop %v2815
        %v2865 = vmul.f32 1.0, %v2864
        %v2866 = vrcp.pop %v2816
        %v2867 = vmul.f32 1.0, %v2866
        %v2868 = vrcp.pop %v2817
        %v2869 = vmul.f32 1.0, %v2868
        %v2870 = vrcp.pop %v2818
        %v2871 = vmul.f32 1.0, %v2870
        %v2872 = vrcp.pop %v2819
        %v2873 = vmul.f32 1.0, %v2872
        %v2874 = vrcp.pop %v2820
        %v2875 = vmul.f32 1.0, %v2874
        %v2876 = vrcp.pop %v2821
        %v2877 = vmul.f32 1.0, %v2876
        %v2878 = vrcp.pop %v2822
        %v2879 = vmul.f32 1.0, %v2878
        %v2880 = vrcp.pop %v2823
        %v2881 = vmul.f32 1.0, %v2880
        %v2882 = vrcp.pop %v2824
        %v2883 = vmul.f32 1.0, %v2882
        %v2884 = vrcp.pop %v2825
        %v2885 = vmul.f32 1.0, %v2884
        %v2886 = vrcp.pop %v2826
        %v2887 = vmul.f32 1.0, %v2886
        %v2888 = vrcp.pop %v2827
        %v2889 = vmul.f32 1.0, %v2888
        %v2890 = vrcp.pop %v2828
        %v2891 = vmul.f32 1.0, %v2890
        %v2892 = vrcp.pop %v2829
        %v2893 = vmul.f32 1.0, %v2892
        %v2894 = vadd.f32 %v2511, %v342
        %v2895 = vadd.f32 %v2513, %v342
        %v2896 = vadd.f32 %v2648, %v342
        %v2897 = vadd.f32 %v2650, %v342
        %v2898 = vadd.f32 %v2517, %v347
        %v2899 = vadd.f32 %v2519, %v347
        %v2900 = vadd.f32 %v2654, %v347
        %v2901 = vadd.f32 %v2656, %v347
        %v2902 = vadd.f32 %v2523, %v352
        %v2903 = vadd.f32 %v2525, %v352
        %v2904 = vadd.f32 %v2660, %v352
        %v2905 = vadd.f32 %v2662, %v352
        %v2906 = vadd.f32 %v2529, %v357
        %v2907 = vadd.f32 %v2531, %v357
        %v2908 = vadd.f32 %v2666, %v357
        %v2909 = vadd.f32 %v2668, %v357
        %v2910 = vmul.f32 %v2831, %v2894
        %v2911 = vmul.f32 %v2833, %v2895
        %v2912 = vmul.f32 %v2835, %v2896
        %v2913 = vmul.f32 %v2837, %v2897
        %v2914 = vmul.f32 %v2839, %v2898
        %v2915 = vmul.f32 %v2841, %v2899
        %v2916 = vmul.f32 %v2843, %v2900
        %v2917 = vmul.f32 %v2845, %v2901
        %v2918 = vmul.f32 %v2847, %v2902
        %v2919 = vmul.f32 %v2849, %v2903
        %v2920 = vmul.f32 %v2851, %v2904
        %v2921 = vmul.f32 %v2853, %v2905
        %v2922 = vmul.f32 %v2855, %v2906
        %v2923 = vmul.f32 %v2857, %v2907
        %v2924 = vmul.f32 %v2859, %v2908
        %v2925 = vmul.f32 %v2861, %v2909
        %v2926 = vadd.f32 %v2380, %v2910
        %v2927 = vadd.f32 %v2381, %v2911
        %v2928 = vadd.f32 %v2382, %v2912
        %v2929 = vadd.f32 %v2383, %v2913
        %v2930 = vadd.f32 %v2384, %v2914
        %v2931 = vadd.f32 %v2385, %v2915
        %v2932 = vadd.f32 %v2386, %v2916
        %v2933 = vadd.f32 %v2387, %v2917
        %v2934 = vadd.f32 %v2388, %v2918
        %v2935 = vadd.f32 %v2389, %v2919
        %v2936 = vadd.f32 %v2390, %v2920
        %v2937 = vadd.f32 %v2391, %v2921
        %v2938 = vadd.f32 %v2392, %v2922
        %v2939 = vadd.f32 %v2393, %v2923
        %v2940 = vadd.f32 %v2394, %v2924
        %v2941 = vadd.f32 %v2395, %v2925
        %v2942 = vtanh.pop %v2926
        %v2943 = vtanh.pop %v2927
        %v2944 = vtanh.pop %v2928
        %v2945 = vtanh.pop %v2929
        %v2946 = vtanh.pop %v2930
        %v2947 = vtanh.pop %v2931
        %v2948 = vtanh.pop %v2932
        %v2949 = vtanh.pop %v2933
        %v2950 = vtanh.pop %v2934
        %v2951 = vtanh.pop %v2935
        %v2952 = vtanh.pop %v2936
        %v2953 = vtanh.pop %v2937
        %v2954 = vtanh.pop %v2938
        %v2955 = vtanh.pop %v2939
        %v2956 = vtanh.pop %v2940
        %v2957 = vtanh.pop %v2941
        %v2958 = vsub.f32 1.0, %v2863
        %v2959 = vsub.f32 1.0, %v2865
        %v2960 = vsub.f32 1.0, %v2867
        %v2961 = vsub.f32 1.0, %v2869
        %v2962 = vsub.f32 1.0, %v2871
        %v2963 = vsub.f32 1.0, %v2873
        %v2964 = vsub.f32 1.0, %v2875
        %v2965 = vsub.f32 1.0, %v2877
        %v2966 = vsub.f32 1.0, %v2879
        %v2967 = vsub.f32 1.0, %v2881
        %v2968 = vsub.f32 1.0, %v2883
        %v2969 = vsub.f32 1.0, %v2885
        %v2970 = vsub.f32 1.0, %v2887
        %v2971 = vsub.f32 1.0, %v2889
        %v2972 = vsub.f32 1.0, %v2891
        %v2973 = vsub.f32 1.0, %v2893
        %v2974 = vmul.f32 %v2958, %v2942
        %v2975 = vmul.f32 %v2959, %v2943
        %v2976 = vmul.f32 %v2960, %v2944
        %v2977 = vmul.f32 %v2961, %v2945
        %v2978 = vmul.f32 %v2962, %v2946
        %v2979 = vmul.f32 %v2963, %v2947
        %v2980 = vmul.f32 %v2964, %v2948
        %v2981 = vmul.f32 %v2965, %v2949
        %v2982 = vmul.f32 %v2966, %v2950
        %v2983 = vmul.f32 %v2967, %v2951
        %v2984 = vmul.f32 %v2968, %v2952
        %v2985 = vmul.f32 %v2969, %v2953
        %v2986 = vmul.f32 %v2970, %v2954
        %v2987 = vmul.f32 %v2971, %v2955
        %v2988 = vmul.f32 %v2972, %v2956
        %v2989 = vmul.f32 %v2973, %v2957
        %v2990 = vmul.f32 %v2863, %v2332
        %v2991 = vmul.f32 %v2865, %v2333
        %v2992 = vmul.f32 %v2867, %v2334
        %v2993 = vmul.f32 %v2869, %v2335
        %v2994 = vmul.f32 %v2871, %v2336
        %v2995 = vmul.f32 %v2873, %v2337
        %v2996 = vmul.f32 %v2875, %v2338
        %v2997 = vmul.f32 %v2877, %v2339
        %v2998 = vmul.f32 %v2879, %v2340
        %v2999 = vmul.f32 %v2881, %v2341
        %v3000 = vmul.f32 %v2883, %v2342
        %v3001 = vmul.f32 %v2885, %v2343
        %v3002 = vmul.f32 %v2887, %v2344
        %v3003 = vmul.f32 %v2889, %v2345
        %v3004 = vmul.f32 %v2891, %v2346
        %v3005 = vmul.f32 %v2893, %v2347
        %v3006 = vadd.f32 %v2974, %v2990
        %v3007 = vadd.f32 %v2975, %v2991
        %v3008 = vadd.f32 %v2976, %v2992
        %v3009 = vadd.f32 %v2977, %v2993
        %v3010 = vadd.f32 %v2978, %v2994
        %v3011 = vadd.f32 %v2979, %v2995
        %v3012 = vadd.f32 %v2980, %v2996
        %v3013 = vadd.f32 %v2981, %v2997
        %v3014 = vadd.f32 %v2982, %v2998
        %v3015 = vadd.f32 %v2983, %v2999
        %v3016 = vadd.f32 %v2984, %v3000
        %v3017 = vadd.f32 %v2985, %v3001
        %v3018 = vadd.f32 %v2986, %v3002
        %v3019 = vadd.f32 %v2987, %v3003
        %v3020 = vadd.f32 %v2988, %v3004
        %v3021 = vadd.f32 %v2989, %v3005
        %v3022 = vld [vmem:[%s1401] sm:$0xff]
        %v3023 = vld [vmem:[%s1401 + $0x8] sm:$0xff]
        %v3024 = vld [vmem:[%s1401 + $0x10] sm:$0xff]
        %v3025 = vld [vmem:[%s1401 + $0x18] sm:$0xff]
        %v3026 = vld [vmem:[%s1401 + $0x20] sm:$0xff]
        %v3027 = vld [vmem:[%s1401 + $0x28] sm:$0xff]
        %v3028 = vld [vmem:[%s1401 + $0x30] sm:$0xff]
        %v3029 = vld [vmem:[%s1401 + $0x38] sm:$0xff]
        %v3030 = vld [vmem:[%s1401 + $0x40] sm:$0xff]
        %v3031 = vld [vmem:[%s1401 + $0x48] sm:$0xff]
        %v3032 = vld [vmem:[%s1401 + $0x50] sm:$0xff]
        %v3033 = vld [vmem:[%s1401 + $0x58] sm:$0xff]
        %v3034 = vld [vmem:[%s1401 + $0x60] sm:$0xff]
        %v3035 = vld [vmem:[%s1401 + $0x68] sm:$0xff]
        %v3036 = vld [vmem:[%s1401 + $0x70] sm:$0xff]
        %v3037 = vld [vmem:[%s1401 + $0x78] sm:$0xff]
        %v3038 = vld [vmem:[%s1401 + $0x80] sm:$0xff]
        %v3039 = vld [vmem:[%s1401 + $0x88] sm:$0xff]
        %v3040 = vld [vmem:[%s1401 + $0x90] sm:$0xff]
        %v3041 = vld [vmem:[%s1401 + $0x98] sm:$0xff]
        %v3042 = vld [vmem:[%s1401 + $0xa0] sm:$0xff]
        %v3043 = vld [vmem:[%s1401 + $0xa8] sm:$0xff]
        %v3044 = vld [vmem:[%s1401 + $0xb0] sm:$0xff]
        %v3045 = vld [vmem:[%s1401 + $0xb8] sm:$0xff]
        %v3046 = vld [vmem:[%s1401 + $0xc0] sm:$0xff]
        %v3047 = vld [vmem:[%s1401 + $0xc8] sm:$0xff]
        %v3048 = vld [vmem:[%s1401 + $0xd0] sm:$0xff]
        %v3049 = vld [vmem:[%s1401 + $0xd8] sm:$0xff]
        %v3050 = vld [vmem:[%s1401 + $0xe0] sm:$0xff]
        %v3051 = vld [vmem:[%s1401 + $0xe8] sm:$0xff]
        %v3052 = vld [vmem:[%s1401 + $0xf0] sm:$0xff]
        %v3053 = vld [vmem:[%s1401 + $0xf8] sm:$0xff]
        %v3054 = vld [vmem:[%s1401 + $0x100] sm:$0xff]
        %v3055 = vld [vmem:[%s1401 + $0x108] sm:$0xff]
        %v3056 = vld [vmem:[%s1401 + $0x110] sm:$0xff]
        %v3057 = vld [vmem:[%s1401 + $0x118] sm:$0xff]
        %v3058 = vld [vmem:[%s1401 + $0x120] sm:$0xff]
        %v3059 = vld [vmem:[%s1401 + $0x128] sm:$0xff]
        %v3060 = vld [vmem:[%s1401 + $0x130] sm:$0xff]
        %v3061 = vld [vmem:[%s1401 + $0x138] sm:$0xff]
        %v3062 = vld [vmem:[%s1401 + $0x140] sm:$0xff]
        %v3063 = vld [vmem:[%s1401 + $0x148] sm:$0xff]
        %v3064 = vld [vmem:[%s1401 + $0x150] sm:$0xff]
        %v3065 = vld [vmem:[%s1401 + $0x158] sm:$0xff]
        %v3066 = vld [vmem:[%s1401 + $0x160] sm:$0xff]
        %v3067 = vld [vmem:[%s1401 + $0x168] sm:$0xff]
        %v3068 = vld [vmem:[%s1401 + $0x170] sm:$0xff]
        %v3069 = vld [vmem:[%s1401 + $0x178] sm:$0xff]
        %3070 = vmatprep.subr.mxu0 0.0
        %3071 = vmatpush1.msra.mxu0 0.0
        %3072 = vmatprep.subr.mxu0 0.0
        %3073 = vmatpush1.msra.mxu0 0.0
        %3074 = vmatprep.subr.mxu0 0.0
        %3075 = vmatpush1.msra.mxu0 0.0
        %3076 = vmatprep.subr.mxu0 0.0
        %3077 = vmatpush1.msra.mxu0 0.0
        %3078 = vmatprep.subr.mxu0 0.0
        %3079 = vmatpush1.msra.mxu0 0.0
        %3080 = vmatprep.subr.mxu0 0.0
        %3081 = vmatpush1.msra.mxu0 0.0
        %3082 = vmatprep.subr.mxu0 0.0
        %3083 = vmatpush1.msra.mxu0 0.0
        %3084 = vmatprep.subr.mxu0 0.0
        %3085 = vmatpush1.msra.mxu0 0.0
        %3086 = vmatprep.subr.mxu0 0.0
        %3087 = vmatpush1.msra.mxu0 0.0
        %3088 = vmatprep.subr.mxu0 0.0
        %3089 = vmatpush1.msra.mxu0 0.0
        %3090 = vmatprep.subr.mxu0 0.0
        %3091 = vmatpush1.msra.mxu0 0.0
        %3092 = vmatprep.subr.mxu0 0.0
        %3093 = vmatpush1.msra.mxu0 0.0
        %3094 = vmatprep.subr.mxu0 %v3019
        %3095 = vmatpush1.msra.mxu0 %v3018
        %3096 = vmatprep.subr.mxu0 %v3015
        %3097 = vmatpush1.msra.mxu0 %v3014
        %3098 = vmatprep.subr.mxu0 %v3011
        %3099 = vmatpush1.msra.mxu0 %v3010
        %3100 = vmatprep.subr.mxu0 %v3007
        %3101 = vmatpush1.msra.mxu0 %v3006
        %3102 = vmatprep.subr.mxu0 0.0
        %3103 = vmatpush2.msra.mxu0 0.0
        %3104 = vmatprep.subr.mxu0 0.0
        %3105 = vmatpush2.msra.mxu0 0.0
        %3106 = vmatprep.subr.mxu0 0.0
        %3107 = vmatpush2.msra.mxu0 0.0
        %3108 = vmatprep.subr.mxu0 0.0
        %3109 = vmatpush2.msra.mxu0 0.0
        %3110 = vmatprep.subr.mxu0 0.0
        %3111 = vmatpush2.msra.mxu0 0.0
        %3112 = vmatprep.subr.mxu0 0.0
        %3113 = vmatpush2.msra.mxu0 0.0
        %3114 = vmatprep.subr.mxu0 0.0
        %3115 = vmatpush2.msra.mxu0 0.0
        %3116 = vmatprep.subr.mxu0 0.0
        %3117 = vmatpush2.msra.mxu0 0.0
        %3118 = vmatprep.subr.mxu0 0.0
        %3119 = vmatpush2.msra.mxu0 0.0
        %3120 = vmatprep.subr.mxu0 0.0
        %3121 = vmatpush2.msra.mxu0 0.0
        %3122 = vmatprep.subr.mxu0 0.0
        %3123 = vmatpush2.msra.mxu0 0.0
        %3124 = vmatprep.subr.mxu0 0.0
        %3125 = vmatpush2.msra.mxu0 0.0
        %3126 = vmatprep.subr.mxu0 0.0
        %3127 = vmatpush2.msra.mxu0 0.0
        %3128 = vmatprep.subr.mxu0 0.0
        %3129 = vmatpush2.msra.mxu0 0.0
        %3130 = vmatprep.subr.mxu0 0.0
        %3131 = vmatpush2.msra.mxu0 0.0
        %3132 = vmatprep.subr.mxu0 0.0
        %3133 = vmatpush2.msra.mxu0 0.0
        %3134 = vmatprep.mubr.f32.mxu0 0.0
        %3135 = vmatmul.mubr.f32.gmra.mxu0 %v1832
        %v3136 = vpop.f32.mrf.mxu0
        %v3137 = vadd.f32 0.0, %v3136
        %v3138 = vpop.f32.mrf.mxu0
        %v3139 = vadd.f32 0.0, %v3138
        %3140 = vmatprep.mubr.f32.mxu0 0.0
        %3141 = vmatmul.mubr.f32.gmra.mxu0 %v1835
        %v3142 = vpop.f32.mrf.mxu0
        %v3143 = vadd.f32 0.0, %v3142
        %v3144 = vpop.f32.mrf.mxu0
        %v3145 = vadd.f32 0.0, %v3144
        %3146 = vmatprep.mubr.f32.mxu0 0.0
        %3147 = vmatmul.mubr.f32.gmra.mxu0 %v1838
        %v3148 = vpop.f32.mrf.mxu0
        %v3149 = vadd.f32 0.0, %v3148
        %v3150 = vpop.f32.mrf.mxu0
        %v3151 = vadd.f32 0.0, %v3150
        %3152 = vmatprep.mubr.f32.mxu0 0.0
        %3153 = vmatmul.mubr.f32.gmra.mxu0 %v1841
        %v3154 = vpop.f32.mrf.mxu0
        %v3155 = vadd.f32 0.0, %v3154
        %v3156 = vpop.f32.mrf.mxu0
        %v3157 = vadd.f32 0.0, %v3156
        %3158 = vmatprep.mubr.f32.mxu0 0.0
        %3159 = vmatmul.mubr.f32.gmra.mxu0 %v1844
        %v3160 = vpop.f32.mrf.mxu0
        %v3161 = vadd.f32 0.0, %v3160
        %v3162 = vpop.f32.mrf.mxu0
        %v3163 = vadd.f32 0.0, %v3162
        %3164 = vmatprep.mubr.f32.mxu0 0.0
        %3165 = vmatmul.mubr.f32.gmra.mxu0 %v1847
        %v3166 = vpop.f32.mrf.mxu0
        %v3167 = vadd.f32 0.0, %v3166
        %v3168 = vpop.f32.mrf.mxu0
        %v3169 = vadd.f32 0.0, %v3168
        %3170 = vmatprep.mubr.f32.mxu0 0.0
        %3171 = vmatmul.mubr.f32.gmra.mxu0 %v1850
        %v3172 = vpop.f32.mrf.mxu0
        %v3173 = vadd.f32 0.0, %v3172
        %v3174 = vpop.f32.mrf.mxu0
        %v3175 = vadd.f32 0.0, %v3174
        %3176 = vmatprep.mubr.f32.mxu0 0.0
        %3177 = vmatmul.mubr.f32.gmra.mxu0 %v1853
        %v3178 = vpop.f32.mrf.mxu0
        %v3179 = vadd.f32 0.0, %v3178
        %v3180 = vpop.f32.mrf.mxu0
        %v3181 = vadd.f32 0.0, %v3180
        %3182 = vmatprep.mubr.f32.mxu0 0.0
        %3183 = vmatmul.mubr.f32.gmra.mxu0 %v1856
        %v3184 = vpop.f32.mrf.mxu0
        %v3185 = vadd.f32 0.0, %v3184
        %v3186 = vpop.f32.mrf.mxu0
        %v3187 = vadd.f32 0.0, %v3186
        %3188 = vmatprep.mubr.f32.mxu0 0.0
        %3189 = vmatmul.mubr.f32.gmra.mxu0 %v1859
        %v3190 = vpop.f32.mrf.mxu0
        %v3191 = vadd.f32 0.0, %v3190
        %v3192 = vpop.f32.mrf.mxu0
        %v3193 = vadd.f32 0.0, %v3192
        %3194 = vmatprep.mubr.f32.mxu0 0.0
        %3195 = vmatmul.mubr.f32.gmra.mxu0 %v1862
        %v3196 = vpop.f32.mrf.mxu0
        %v3197 = vadd.f32 0.0, %v3196
        %v3198 = vpop.f32.mrf.mxu0
        %v3199 = vadd.f32 0.0, %v3198
        %3200 = vmatprep.mubr.f32.mxu0 0.0
        %3201 = vmatmul.mubr.f32.gmra.mxu0 %v1865
        %v3202 = vpop.f32.mrf.mxu0
        %v3203 = vadd.f32 0.0, %v3202
        %v3204 = vpop.f32.mrf.mxu0
        %v3205 = vadd.f32 0.0, %v3204
        %3206 = vdwg.mxu0
        %3207 = vmatprep.subr.mxu0 0.0
        %3208 = vmatpush1.msra.mxu0 0.0
        %3209 = vmatprep.subr.mxu0 0.0
        %3210 = vmatpush1.msra.mxu0 0.0
        %3211 = vmatprep.subr.mxu0 0.0
        %3212 = vmatpush1.msra.mxu0 0.0
        %3213 = vmatprep.subr.mxu0 0.0
        %3214 = vmatpush1.msra.mxu0 0.0
        %3215 = vmatprep.subr.mxu0 0.0
        %3216 = vmatpush1.msra.mxu0 0.0
        %3217 = vmatprep.subr.mxu0 0.0
        %3218 = vmatpush1.msra.mxu0 0.0
        %3219 = vmatprep.subr.mxu0 0.0
        %3220 = vmatpush1.msra.mxu0 0.0
        %3221 = vmatprep.subr.mxu0 0.0
        %3222 = vmatpush1.msra.mxu0 0.0
        %3223 = vmatprep.subr.mxu0 0.0
        %3224 = vmatpush1.msra.mxu0 0.0
        %3225 = vmatprep.subr.mxu0 0.0
        %3226 = vmatpush1.msra.mxu0 0.0
        %3227 = vmatprep.subr.mxu0 0.0
        %3228 = vmatpush1.msra.mxu0 0.0
        %3229 = vmatprep.subr.mxu0 0.0
        %3230 = vmatpush1.msra.mxu0 0.0
        %3231 = vmatprep.subr.mxu0 %v3021
        %3232 = vmatpush1.msra.mxu0 %v3020
        %3233 = vmatprep.subr.mxu0 %v3017
        %3234 = vmatpush1.msra.mxu0 %v3016
        %3235 = vmatprep.subr.mxu0 %v3013
        %3236 = vmatpush1.msra.mxu0 %v3012
        %3237 = vmatprep.subr.mxu0 %v3009
        %3238 = vmatpush1.msra.mxu0 %v3008
        %3239 = vmatprep.subr.mxu0 0.0
        %3240 = vmatpush2.msra.mxu0 0.0
        %3241 = vmatprep.subr.mxu0 0.0
        %3242 = vmatpush2.msra.mxu0 0.0
        %3243 = vmatprep.subr.mxu0 0.0
        %3244 = vmatpush2.msra.mxu0 0.0
        %3245 = vmatprep.subr.mxu0 0.0
        %3246 = vmatpush2.msra.mxu0 0.0
        %3247 = vmatprep.subr.mxu0 0.0
        %3248 = vmatpush2.msra.mxu0 0.0
        %3249 = vmatprep.subr.mxu0 0.0
        %3250 = vmatpush2.msra.mxu0 0.0
        %3251 = vmatprep.subr.mxu0 0.0
        %3252 = vmatpush2.msra.mxu0 0.0
        %3253 = vmatprep.subr.mxu0 0.0
        %3254 = vmatpush2.msra.mxu0 0.0
        %3255 = vmatprep.subr.mxu0 0.0
        %3256 = vmatpush2.msra.mxu0 0.0
        %3257 = vmatprep.subr.mxu0 0.0
        %3258 = vmatpush2.msra.mxu0 0.0
        %3259 = vmatprep.subr.mxu0 0.0
        %3260 = vmatpush2.msra.mxu0 0.0
        %3261 = vmatprep.subr.mxu0 0.0
        %3262 = vmatpush2.msra.mxu0 0.0
        %3263 = vmatprep.subr.mxu0 0.0
        %3264 = vmatpush2.msra.mxu0 0.0
        %3265 = vmatprep.subr.mxu0 0.0
        %3266 = vmatpush2.msra.mxu0 0.0
        %3267 = vmatprep.subr.mxu0 0.0
        %3268 = vmatpush2.msra.mxu0 0.0
        %3269 = vmatprep.subr.mxu0 0.0
        %3270 = vmatpush2.msra.mxu0 0.0
        %3271 = vmatprep.mubr.f32.mxu0 0.0
        %3272 = vmatmul.mubr.f32.gmra.mxu0 %v1832
        %v3273 = vpop.f32.mrf.mxu0
        %v3274 = vadd.f32 0.0, %v3273
        %v3275 = vpop.f32.mrf.mxu0
        %v3276 = vadd.f32 0.0, %v3275
        %3277 = vmatprep.mubr.f32.mxu0 0.0
        %3278 = vmatmul.mubr.f32.gmra.mxu0 %v1835
        %v3279 = vpop.f32.mrf.mxu0
        %v3280 = vadd.f32 0.0, %v3279
        %v3281 = vpop.f32.mrf.mxu0
        %v3282 = vadd.f32 0.0, %v3281
        %3283 = vmatprep.mubr.f32.mxu0 0.0
        %3284 = vmatmul.mubr.f32.gmra.mxu0 %v1838
        %v3285 = vpop.f32.mrf.mxu0
        %v3286 = vadd.f32 0.0, %v3285
        %v3287 = vpop.f32.mrf.mxu0
        %v3288 = vadd.f32 0.0, %v3287
        %3289 = vmatprep.mubr.f32.mxu0 0.0
        %3290 = vmatmul.mubr.f32.gmra.mxu0 %v1841
        %v3291 = vpop.f32.mrf.mxu0
        %v3292 = vadd.f32 0.0, %v3291
        %v3293 = vpop.f32.mrf.mxu0
        %v3294 = vadd.f32 0.0, %v3293
        %3295 = vmatprep.mubr.f32.mxu0 0.0
        %3296 = vmatmul.mubr.f32.gmra.mxu0 %v1844
        %v3297 = vpop.f32.mrf.mxu0
        %v3298 = vadd.f32 0.0, %v3297
        %v3299 = vpop.f32.mrf.mxu0
        %v3300 = vadd.f32 0.0, %v3299
        %3301 = vmatprep.mubr.f32.mxu0 0.0
        %3302 = vmatmul.mubr.f32.gmra.mxu0 %v1847
        %v3303 = vpop.f32.mrf.mxu0
        %v3304 = vadd.f32 0.0, %v3303
        %v3305 = vpop.f32.mrf.mxu0
        %v3306 = vadd.f32 0.0, %v3305
        %3307 = vmatprep.mubr.f32.mxu0 0.0
        %3308 = vmatmul.mubr.f32.gmra.mxu0 %v1850
        %v3309 = vpop.f32.mrf.mxu0
        %v3310 = vadd.f32 0.0, %v3309
        %v3311 = vpop.f32.mrf.mxu0
        %v3312 = vadd.f32 0.0, %v3311
        %3313 = vmatprep.mubr.f32.mxu0 0.0
        %3314 = vmatmul.mubr.f32.gmra.mxu0 %v1853
        %v3315 = vpop.f32.mrf.mxu0
        %v3316 = vadd.f32 0.0, %v3315
        %v3317 = vpop.f32.mrf.mxu0
        %v3318 = vadd.f32 0.0, %v3317
        %3319 = vmatprep.mubr.f32.mxu0 0.0
        %3320 = vmatmul.mubr.f32.gmra.mxu0 %v1856
        %v3321 = vpop.f32.mrf.mxu0
        %v3322 = vadd.f32 0.0, %v3321
        %v3323 = vpop.f32.mrf.mxu0
        %v3324 = vadd.f32 0.0, %v3323
        %3325 = vmatprep.mubr.f32.mxu0 0.0
        %3326 = vmatmul.mubr.f32.gmra.mxu0 %v1859
        %v3327 = vpop.f32.mrf.mxu0
        %v3328 = vadd.f32 0.0, %v3327
        %v3329 = vpop.f32.mrf.mxu0
        %v3330 = vadd.f32 0.0, %v3329
        %3331 = vmatprep.mubr.f32.mxu0 0.0
        %3332 = vmatmul.mubr.f32.gmra.mxu0 %v1862
        %v3333 = vpop.f32.mrf.mxu0
        %v3334 = vadd.f32 0.0, %v3333
        %v3335 = vpop.f32.mrf.mxu0
        %v3336 = vadd.f32 0.0, %v3335
        %3337 = vmatprep.mubr.f32.mxu0 0.0
        %3338 = vmatmul.mubr.f32.gmra.mxu0 %v1865
        %v3339 = vpop.f32.mrf.mxu0
        %v3340 = vadd.f32 0.0, %v3339
        %v3341 = vpop.f32.mrf.mxu0
        %v3342 = vadd.f32 0.0, %v3341
        %3343 = vdwg.mxu0
        %v3344 = vadd.f32 %v3022, %v3137
        %v3345 = vadd.f32 %v3023, %v3139
        %v3346 = vadd.f32 %v3024, %v3274
        %v3347 = vadd.f32 %v3025, %v3276
        %v3348 = vadd.f32 %v3026, %v3143
        %v3349 = vadd.f32 %v3027, %v3145
        %v3350 = vadd.f32 %v3028, %v3280
        %v3351 = vadd.f32 %v3029, %v3282
        %v3352 = vadd.f32 %v3030, %v3149
        %v3353 = vadd.f32 %v3031, %v3151
        %v3354 = vadd.f32 %v3032, %v3286
        %v3355 = vadd.f32 %v3033, %v3288
        %v3356 = vadd.f32 %v3034, %v3155
        %v3357 = vadd.f32 %v3035, %v3157
        %v3358 = vadd.f32 %v3036, %v3292
        %v3359 = vadd.f32 %v3037, %v3294
        %v3360 = vadd.f32 %v3038, %v3161
        %v3361 = vadd.f32 %v3039, %v3163
        %v3362 = vadd.f32 %v3040, %v3298
        %v3363 = vadd.f32 %v3041, %v3300
        %v3364 = vadd.f32 %v3042, %v3167
        %v3365 = vadd.f32 %v3043, %v3169
        %v3366 = vadd.f32 %v3044, %v3304
        %v3367 = vadd.f32 %v3045, %v3306
        %v3368 = vadd.f32 %v3046, %v3173
        %v3369 = vadd.f32 %v3047, %v3175
        %v3370 = vadd.f32 %v3048, %v3310
        %v3371 = vadd.f32 %v3049, %v3312
        %v3372 = vadd.f32 %v3050, %v3179
        %v3373 = vadd.f32 %v3051, %v3181
        %v3374 = vadd.f32 %v3052, %v3316
        %v3375 = vadd.f32 %v3053, %v3318
        %v3376 = vxor.u32 %v3344, 2147483648
        %v3377 = vxor.u32 %v3345, 2147483648
        %v3378 = vxor.u32 %v3346, 2147483648
        %v3379 = vxor.u32 %v3347, 2147483648
        %v3380 = vxor.u32 %v3348, 2147483648
        %v3381 = vxor.u32 %v3349, 2147483648
        %v3382 = vxor.u32 %v3350, 2147483648
        %v3383 = vxor.u32 %v3351, 2147483648
        %v3384 = vxor.u32 %v3352, 2147483648
        %v3385 = vxor.u32 %v3353, 2147483648
        %v3386 = vxor.u32 %v3354, 2147483648
        %v3387 = vxor.u32 %v3355, 2147483648
        %v3388 = vxor.u32 %v3356, 2147483648
        %v3389 = vxor.u32 %v3357, 2147483648
        %v3390 = vxor.u32 %v3358, 2147483648
        %v3391 = vxor.u32 %v3359, 2147483648
        %v3392 = vxor.u32 %v3360, 2147483648
        %v3393 = vxor.u32 %v3361, 2147483648
        %v3394 = vxor.u32 %v3362, 2147483648
        %v3395 = vxor.u32 %v3363, 2147483648
        %v3396 = vxor.u32 %v3364, 2147483648
        %v3397 = vxor.u32 %v3365, 2147483648
        %v3398 = vxor.u32 %v3366, 2147483648
        %v3399 = vxor.u32 %v3367, 2147483648
        %v3400 = vxor.u32 %v3368, 2147483648
        %v3401 = vxor.u32 %v3369, 2147483648
        %v3402 = vxor.u32 %v3370, 2147483648
        %v3403 = vxor.u32 %v3371, 2147483648
        %v3404 = vxor.u32 %v3372, 2147483648
        %v3405 = vxor.u32 %v3373, 2147483648
        %v3406 = vxor.u32 %v3374, 2147483648
        %v3407 = vxor.u32 %v3375, 2147483648
        %v3408 = vmul.f32 %v3376, 1.442695
        %v3409 = vpow.pop %v3408
        %v3410 = vmul.f32 %v3377, 1.442695
        %v3411 = vpow.pop %v3410
        %v3412 = vmul.f32 %v3378, 1.442695
        %v3413 = vpow.pop %v3412
        %v3414 = vmul.f32 %v3379, 1.442695
        %v3415 = vpow.pop %v3414
        %v3416 = vmul.f32 %v3380, 1.442695
        %v3417 = vpow.pop %v3416
        %v3418 = vmul.f32 %v3381, 1.442695
        %v3419 = vpow.pop %v3418
        %v3420 = vmul.f32 %v3382, 1.442695
        %v3421 = vpow.pop %v3420
        %v3422 = vmul.f32 %v3383, 1.442695
        %v3423 = vpow.pop %v3422
        %v3424 = vmul.f32 %v3384, 1.442695
        %v3425 = vpow.pop %v3424
        %v3426 = vmul.f32 %v3385, 1.442695
        %v3427 = vpow.pop %v3426
        %v3428 = vmul.f32 %v3386, 1.442695
        %v3429 = vpow.pop %v3428
        %v3430 = vmul.f32 %v3387, 1.442695
        %v3431 = vpow.pop %v3430
        %v3432 = vmul.f32 %v3388, 1.442695
        %v3433 = vpow.pop %v3432
        %v3434 = vmul.f32 %v3389, 1.442695
        %v3435 = vpow.pop %v3434
        %v3436 = vmul.f32 %v3390, 1.442695
        %v3437 = vpow.pop %v3436
        %v3438 = vmul.f32 %v3391, 1.442695
        %v3439 = vpow.pop %v3438
        %v3440 = vmul.f32 %v3392, 1.442695
        %v3441 = vpow.pop %v3440
        %v3442 = vmul.f32 %v3393, 1.442695
        %v3443 = vpow.pop %v3442
        %v3444 = vmul.f32 %v3394, 1.442695
        %v3445 = vpow.pop %v3444
        %v3446 = vmul.f32 %v3395, 1.442695
        %v3447 = vpow.pop %v3446
        %v3448 = vmul.f32 %v3396, 1.442695
        %v3449 = vpow.pop %v3448
        %v3450 = vmul.f32 %v3397, 1.442695
        %v3451 = vpow.pop %v3450
        %v3452 = vmul.f32 %v3398, 1.442695
        %v3453 = vpow.pop %v3452
        %v3454 = vmul.f32 %v3399, 1.442695
        %v3455 = vpow.pop %v3454
        %v3456 = vmul.f32 %v3400, 1.442695
        %v3457 = vpow.pop %v3456
        %v3458 = vmul.f32 %v3401, 1.442695
        %v3459 = vpow.pop %v3458
        %v3460 = vmul.f32 %v3402, 1.442695
        %v3461 = vpow.pop %v3460
        %v3462 = vmul.f32 %v3403, 1.442695
        %v3463 = vpow.pop %v3462
        %v3464 = vmul.f32 %v3404, 1.442695
        %v3465 = vpow.pop %v3464
        %v3466 = vmul.f32 %v3405, 1.442695
        %v3467 = vpow.pop %v3466
        %v3468 = vmul.f32 %v3406, 1.442695
        %v3469 = vpow.pop %v3468
        %v3470 = vmul.f32 %v3407, 1.442695
        %v3471 = vpow.pop %v3470
        %v3472 = vadd.f32 %v3409, 1.0
        %v3473 = vadd.f32 %v3411, 1.0
        %v3474 = vadd.f32 %v3413, 1.0
        %v3475 = vadd.f32 %v3415, 1.0
        %v3476 = vadd.f32 %v3417, 1.0
        %v3477 = vadd.f32 %v3419, 1.0
        %v3478 = vadd.f32 %v3421, 1.0
        %v3479 = vadd.f32 %v3423, 1.0
        %v3480 = vadd.f32 %v3425, 1.0
        %v3481 = vadd.f32 %v3427, 1.0
        %v3482 = vadd.f32 %v3429, 1.0
        %v3483 = vadd.f32 %v3431, 1.0
        %v3484 = vadd.f32 %v3433, 1.0
        %v3485 = vadd.f32 %v3435, 1.0
        %v3486 = vadd.f32 %v3437, 1.0
        %v3487 = vadd.f32 %v3439, 1.0
        %v3488 = vadd.f32 %v3441, 1.0
        %v3489 = vadd.f32 %v3443, 1.0
        %v3490 = vadd.f32 %v3445, 1.0
        %v3491 = vadd.f32 %v3447, 1.0
        %v3492 = vadd.f32 %v3449, 1.0
        %v3493 = vadd.f32 %v3451, 1.0
        %v3494 = vadd.f32 %v3453, 1.0
        %v3495 = vadd.f32 %v3455, 1.0
        %v3496 = vadd.f32 %v3457, 1.0
        %v3497 = vadd.f32 %v3459, 1.0
        %v3498 = vadd.f32 %v3461, 1.0
        %v3499 = vadd.f32 %v3463, 1.0
        %v3500 = vadd.f32 %v3465, 1.0
        %v3501 = vadd.f32 %v3467, 1.0
        %v3502 = vadd.f32 %v3469, 1.0
        %v3503 = vadd.f32 %v3471, 1.0
        %v3504 = vrcp.pop %v3472
        %v3505 = vmul.f32 1.0, %v3504
        %v3506 = vrcp.pop %v3473
        %v3507 = vmul.f32 1.0, %v3506
        %v3508 = vrcp.pop %v3474
        %v3509 = vmul.f32 1.0, %v3508
        %v3510 = vrcp.pop %v3475
        %v3511 = vmul.f32 1.0, %v3510
        %v3512 = vrcp.pop %v3476
        %v3513 = vmul.f32 1.0, %v3512
        %v3514 = vrcp.pop %v3477
        %v3515 = vmul.f32 1.0, %v3514
        %v3516 = vrcp.pop %v3478
        %v3517 = vmul.f32 1.0, %v3516
        %v3518 = vrcp.pop %v3479
        %v3519 = vmul.f32 1.0, %v3518
        %v3520 = vrcp.pop %v3480
        %v3521 = vmul.f32 1.0, %v3520
        %v3522 = vrcp.pop %v3481
        %v3523 = vmul.f32 1.0, %v3522
        %v3524 = vrcp.pop %v3482
        %v3525 = vmul.f32 1.0, %v3524
        %v3526 = vrcp.pop %v3483
        %v3527 = vmul.f32 1.0, %v3526
        %v3528 = vrcp.pop %v3484
        %v3529 = vmul.f32 1.0, %v3528
        %v3530 = vrcp.pop %v3485
        %v3531 = vmul.f32 1.0, %v3530
        %v3532 = vrcp.pop %v3486
        %v3533 = vmul.f32 1.0, %v3532
        %v3534 = vrcp.pop %v3487
        %v3535 = vmul.f32 1.0, %v3534
        %v3536 = vrcp.pop %v3488
        %v3537 = vmul.f32 1.0, %v3536
        %v3538 = vrcp.pop %v3489
        %v3539 = vmul.f32 1.0, %v3538
        %v3540 = vrcp.pop %v3490
        %v3541 = vmul.f32 1.0, %v3540
        %v3542 = vrcp.pop %v3491
        %v3543 = vmul.f32 1.0, %v3542
        %v3544 = vrcp.pop %v3492
        %v3545 = vmul.f32 1.0, %v3544
        %v3546 = vrcp.pop %v3493
        %v3547 = vmul.f32 1.0, %v3546
        %v3548 = vrcp.pop %v3494
        %v3549 = vmul.f32 1.0, %v3548
        %v3550 = vrcp.pop %v3495
        %v3551 = vmul.f32 1.0, %v3550
        %v3552 = vrcp.pop %v3496
        %v3553 = vmul.f32 1.0, %v3552
        %v3554 = vrcp.pop %v3497
        %v3555 = vmul.f32 1.0, %v3554
        %v3556 = vrcp.pop %v3498
        %v3557 = vmul.f32 1.0, %v3556
        %v3558 = vrcp.pop %v3499
        %v3559 = vmul.f32 1.0, %v3558
        %v3560 = vrcp.pop %v3500
        %v3561 = vmul.f32 1.0, %v3560
        %v3562 = vrcp.pop %v3501
        %v3563 = vmul.f32 1.0, %v3562
        %v3564 = vrcp.pop %v3502
        %v3565 = vmul.f32 1.0, %v3564
        %v3566 = vrcp.pop %v3503
        %v3567 = vmul.f32 1.0, %v3566
        %v3568 = vadd.f32 %v3185, %v342
        %v3569 = vadd.f32 %v3187, %v342
        %v3570 = vadd.f32 %v3322, %v342
        %v3571 = vadd.f32 %v3324, %v342
        %v3572 = vadd.f32 %v3191, %v347
        %v3573 = vadd.f32 %v3193, %v347
        %v3574 = vadd.f32 %v3328, %v347
        %v3575 = vadd.f32 %v3330, %v347
        %v3576 = vadd.f32 %v3197, %v352
        %v3577 = vadd.f32 %v3199, %v352
        %v3578 = vadd.f32 %v3334, %v352
        %v3579 = vadd.f32 %v3336, %v352
        %v3580 = vadd.f32 %v3203, %v357
        %v3581 = vadd.f32 %v3205, %v357
        %v3582 = vadd.f32 %v3340, %v357
        %v3583 = vadd.f32 %v3342, %v357
        %v3584 = vmul.f32 %v3505, %v3568
        %v3585 = vmul.f32 %v3507, %v3569
        %v3586 = vmul.f32 %v3509, %v3570
        %v3587 = vmul.f32 %v3511, %v3571
        %v3588 = vmul.f32 %v3513, %v3572
        %v3589 = vmul.f32 %v3515, %v3573
        %v3590 = vmul.f32 %v3517, %v3574
        %v3591 = vmul.f32 %v3519, %v3575
        %v3592 = vmul.f32 %v3521, %v3576
        %v3593 = vmul.f32 %v3523, %v3577
        %v3594 = vmul.f32 %v3525, %v3578
        %v3595 = vmul.f32 %v3527, %v3579
        %v3596 = vmul.f32 %v3529, %v3580
        %v3597 = vmul.f32 %v3531, %v3581
        %v3598 = vmul.f32 %v3533, %v3582
        %v3599 = vmul.f32 %v3535, %v3583
        %v3600 = vadd.f32 %v3054, %v3584
        %v3601 = vadd.f32 %v3055, %v3585
        %v3602 = vadd.f32 %v3056, %v3586
        %v3603 = vadd.f32 %v3057, %v3587
        %v3604 = vadd.f32 %v3058, %v3588
        %v3605 = vadd.f32 %v3059, %v3589
        %v3606 = vadd.f32 %v3060, %v3590
        %v3607 = vadd.f32 %v3061, %v3591
        %v3608 = vadd.f32 %v3062, %v3592
        %v3609 = vadd.f32 %v3063, %v3593
        %v3610 = vadd.f32 %v3064, %v3594
        %v3611 = vadd.f32 %v3065, %v3595
        %v3612 = vadd.f32 %v3066, %v3596
        %v3613 = vadd.f32 %v3067, %v3597
        %v3614 = vadd.f32 %v3068, %v3598
        %v3615 = vadd.f32 %v3069, %v3599
        %v3616 = vtanh.pop %v3600
        %v3617 = vtanh.pop %v3601
        %v3618 = vtanh.pop %v3602
        %v3619 = vtanh.pop %v3603
        %v3620 = vtanh.pop %v3604
        %v3621 = vtanh.pop %v3605
        %v3622 = vtanh.pop %v3606
        %v3623 = vtanh.pop %v3607
        %v3624 = vtanh.pop %v3608
        %v3625 = vtanh.pop %v3609
        %v3626 = vtanh.pop %v3610
        %v3627 = vtanh.pop %v3611
        %v3628 = vtanh.pop %v3612
        %v3629 = vtanh.pop %v3613
        %v3630 = vtanh.pop %v3614
        %v3631 = vtanh.pop %v3615
        %v3632 = vsub.f32 1.0, %v3537
        %v3633 = vsub.f32 1.0, %v3539
        %v3634 = vsub.f32 1.0, %v3541
        %v3635 = vsub.f32 1.0, %v3543
        %v3636 = vsub.f32 1.0, %v3545
        %v3637 = vsub.f32 1.0, %v3547
        %v3638 = vsub.f32 1.0, %v3549
        %v3639 = vsub.f32 1.0, %v3551
        %v3640 = vsub.f32 1.0, %v3553
        %v3641 = vsub.f32 1.0, %v3555
        %v3642 = vsub.f32 1.0, %v3557
        %v3643 = vsub.f32 1.0, %v3559
        %v3644 = vsub.f32 1.0, %v3561
        %v3645 = vsub.f32 1.0, %v3563
        %v3646 = vsub.f32 1.0, %v3565
        %v3647 = vsub.f32 1.0, %v3567
        %v3648 = vmul.f32 %v3632, %v3616
        %v3649 = vmul.f32 %v3633, %v3617
        %v3650 = vmul.f32 %v3634, %v3618
        %v3651 = vmul.f32 %v3635, %v3619
        %v3652 = vmul.f32 %v3636, %v3620
        %v3653 = vmul.f32 %v3637, %v3621
        %v3654 = vmul.f32 %v3638, %v3622
        %v3655 = vmul.f32 %v3639, %v3623
        %v3656 = vmul.f32 %v3640, %v3624
        %v3657 = vmul.f32 %v3641, %v3625
        %v3658 = vmul.f32 %v3642, %v3626
        %v3659 = vmul.f32 %v3643, %v3627
        %v3660 = vmul.f32 %v3644, %v3628
        %v3661 = vmul.f32 %v3645, %v3629
        %v3662 = vmul.f32 %v3646, %v3630
        %v3663 = vmul.f32 %v3647, %v3631
        %v3664 = vmul.f32 %v3537, %v3006
        %v3665 = vmul.f32 %v3539, %v3007
        %v3666 = vmul.f32 %v3541, %v3008
        %v3667 = vmul.f32 %v3543, %v3009
        %v3668 = vmul.f32 %v3545, %v3010
        %v3669 = vmul.f32 %v3547, %v3011
        %v3670 = vmul.f32 %v3549, %v3012
        %v3671 = vmul.f32 %v3551, %v3013
        %v3672 = vmul.f32 %v3553, %v3014
        %v3673 = vmul.f32 %v3555, %v3015
        %v3674 = vmul.f32 %v3557, %v3016
        %v3675 = vmul.f32 %v3559, %v3017
        %v3676 = vmul.f32 %v3561, %v3018
        %v3677 = vmul.f32 %v3563, %v3019
        %v3678 = vmul.f32 %v3565, %v3020
        %v3679 = vmul.f32 %v3567, %v3021
        %v3680 = vadd.f32 %v3648, %v3664
        %v3681 = vadd.f32 %v3649, %v3665
        %v3682 = vadd.f32 %v3650, %v3666
        %v3683 = vadd.f32 %v3651, %v3667
        %v3684 = vadd.f32 %v3652, %v3668
        %v3685 = vadd.f32 %v3653, %v3669
        %v3686 = vadd.f32 %v3654, %v3670
        %v3687 = vadd.f32 %v3655, %v3671
        %v3688 = vadd.f32 %v3656, %v3672
        %v3689 = vadd.f32 %v3657, %v3673
        %v3690 = vadd.f32 %v3658, %v3674
        %v3691 = vadd.f32 %v3659, %v3675
        %v3692 = vadd.f32 %v3660, %v3676
        %v3693 = vadd.f32 %v3661, %v3677
        %v3694 = vadd.f32 %v3662, %v3678
        %v3695 = vadd.f32 %v3663, %v3679
        %v3696 = vld [vmem:[%s1733] sm:$0xff]
        %v3697 = vld [vmem:[%s1733 + $0x8] sm:$0xff]
        %v3698 = vld [vmem:[%s1733 + $0x10] sm:$0xff]
        %v3699 = vld [vmem:[%s1733 + $0x18] sm:$0xff]
        %v3700 = vld [vmem:[%s1733 + $0x20] sm:$0xff]
        %v3701 = vld [vmem:[%s1733 + $0x28] sm:$0xff]
        %v3702 = vld [vmem:[%s1733 + $0x30] sm:$0xff]
        %v3703 = vld [vmem:[%s1733 + $0x38] sm:$0xff]
        %v3704 = vld [vmem:[%s1733 + $0x40] sm:$0xff]
        %v3705 = vld [vmem:[%s1733 + $0x48] sm:$0xff]
        %v3706 = vld [vmem:[%s1733 + $0x50] sm:$0xff]
        %v3707 = vld [vmem:[%s1733 + $0x58] sm:$0xff]
        %v3708 = vld [vmem:[%s1733 + $0x60] sm:$0xff]
        %v3709 = vld [vmem:[%s1733 + $0x68] sm:$0xff]
        %v3710 = vld [vmem:[%s1733 + $0x70] sm:$0xff]
        %v3711 = vld [vmem:[%s1733 + $0x78] sm:$0xff]
        %v3712 = vld [vmem:[%s1733 + $0x80] sm:$0xff]
        %v3713 = vld [vmem:[%s1733 + $0x88] sm:$0xff]
        %v3714 = vld [vmem:[%s1733 + $0x90] sm:$0xff]
        %v3715 = vld [vmem:[%s1733 + $0x98] sm:$0xff]
        %v3716 = vld [vmem:[%s1733 + $0xa0] sm:$0xff]
        %v3717 = vld [vmem:[%s1733 + $0xa8] sm:$0xff]
        %v3718 = vld [vmem:[%s1733 + $0xb0] sm:$0xff]
        %v3719 = vld [vmem:[%s1733 + $0xb8] sm:$0xff]
        %v3720 = vld [vmem:[%s1733 + $0xc0] sm:$0xff]
        %v3721 = vld [vmem:[%s1733 + $0xc8] sm:$0xff]
        %v3722 = vld [vmem:[%s1733 + $0xd0] sm:$0xff]
        %v3723 = vld [vmem:[%s1733 + $0xd8] sm:$0xff]
        %v3724 = vld [vmem:[%s1733 + $0xe0] sm:$0xff]
        %v3725 = vld [vmem:[%s1733 + $0xe8] sm:$0xff]
        %v3726 = vld [vmem:[%s1733 + $0xf0] sm:$0xff]
        %v3727 = vld [vmem:[%s1733 + $0xf8] sm:$0xff]
        %v3728 = vld [vmem:[%s1733 + $0x100] sm:$0xff]
        %v3729 = vld [vmem:[%s1733 + $0x108] sm:$0xff]
        %v3730 = vld [vmem:[%s1733 + $0x110] sm:$0xff]
        %v3731 = vld [vmem:[%s1733 + $0x118] sm:$0xff]
        %v3732 = vld [vmem:[%s1733 + $0x120] sm:$0xff]
        %v3733 = vld [vmem:[%s1733 + $0x128] sm:$0xff]
        %v3734 = vld [vmem:[%s1733 + $0x130] sm:$0xff]
        %v3735 = vld [vmem:[%s1733 + $0x138] sm:$0xff]
        %v3736 = vld [vmem:[%s1733 + $0x140] sm:$0xff]
        %v3737 = vld [vmem:[%s1733 + $0x148] sm:$0xff]
        %v3738 = vld [vmem:[%s1733 + $0x150] sm:$0xff]
        %v3739 = vld [vmem:[%s1733 + $0x158] sm:$0xff]
        %v3740 = vld [vmem:[%s1733 + $0x160] sm:$0xff]
        %v3741 = vld [vmem:[%s1733 + $0x168] sm:$0xff]
        %v3742 = vld [vmem:[%s1733 + $0x170] sm:$0xff]
        %v3743 = vld [vmem:[%s1733 + $0x178] sm:$0xff]
        %3744 = vmatprep.subr.mxu0 0.0
        %3745 = vmatpush1.msra.mxu0 0.0
        %3746 = vmatprep.subr.mxu0 0.0
        %3747 = vmatpush1.msra.mxu0 0.0
        %3748 = vmatprep.subr.mxu0 0.0
        %3749 = vmatpush1.msra.mxu0 0.0
        %3750 = vmatprep.subr.mxu0 0.0
        %3751 = vmatpush1.msra.mxu0 0.0
        %3752 = vmatprep.subr.mxu0 0.0
        %3753 = vmatpush1.msra.mxu0 0.0
        %3754 = vmatprep.subr.mxu0 0.0
        %3755 = vmatpush1.msra.mxu0 0.0
        %3756 = vmatprep.subr.mxu0 0.0
        %3757 = vmatpush1.msra.mxu0 0.0
        %3758 = vmatprep.subr.mxu0 0.0
        %3759 = vmatpush1.msra.mxu0 0.0
        %3760 = vmatprep.subr.mxu0 0.0
        %3761 = vmatpush1.msra.mxu0 0.0
        %3762 = vmatprep.subr.mxu0 0.0
        %3763 = vmatpush1.msra.mxu0 0.0
        %3764 = vmatprep.subr.mxu0 0.0
        %3765 = vmatpush1.msra.mxu0 0.0
        %3766 = vmatprep.subr.mxu0 0.0
        %3767 = vmatpush1.msra.mxu0 0.0
        %3768 = vmatprep.subr.mxu0 %v3693
        %3769 = vmatpush1.msra.mxu0 %v3692
        %3770 = vmatprep.subr.mxu0 %v3689
        %3771 = vmatpush1.msra.mxu0 %v3688
        %3772 = vmatprep.subr.mxu0 %v3685
        %3773 = vmatpush1.msra.mxu0 %v3684
        %3774 = vmatprep.subr.mxu0 %v3681
        %3775 = vmatpush1.msra.mxu0 %v3680
        %3776 = vmatprep.subr.mxu0 0.0
        %3777 = vmatpush2.msra.mxu0 0.0
        %3778 = vmatprep.subr.mxu0 0.0
        %3779 = vmatpush2.msra.mxu0 0.0
        %3780 = vmatprep.subr.mxu0 0.0
        %3781 = vmatpush2.msra.mxu0 0.0
        %3782 = vmatprep.subr.mxu0 0.0
        %3783 = vmatpush2.msra.mxu0 0.0
        %3784 = vmatprep.subr.mxu0 0.0
        %3785 = vmatpush2.msra.mxu0 0.0
        %3786 = vmatprep.subr.mxu0 0.0
        %3787 = vmatpush2.msra.mxu0 0.0
        %3788 = vmatprep.subr.mxu0 0.0
        %3789 = vmatpush2.msra.mxu0 0.0
        %3790 = vmatprep.subr.mxu0 0.0
        %3791 = vmatpush2.msra.mxu0 0.0
        %3792 = vmatprep.subr.mxu0 0.0
        %3793 = vmatpush2.msra.mxu0 0.0
        %3794 = vmatprep.subr.mxu0 0.0
        %3795 = vmatpush2.msra.mxu0 0.0
        %3796 = vmatprep.subr.mxu0 0.0
        %3797 = vmatpush2.msra.mxu0 0.0
        %3798 = vmatprep.subr.mxu0 0.0
        %3799 = vmatpush2.msra.mxu0 0.0
        %3800 = vmatprep.subr.mxu0 0.0
        %3801 = vmatpush2.msra.mxu0 0.0
        %3802 = vmatprep.subr.mxu0 0.0
        %3803 = vmatpush2.msra.mxu0 0.0
        %3804 = vmatprep.subr.mxu0 0.0
        %3805 = vmatpush2.msra.mxu0 0.0
        %3806 = vmatprep.subr.mxu0 0.0
        %3807 = vmatpush2.msra.mxu0 0.0
        %3808 = vmatprep.mubr.f32.mxu0 0.0
        %3809 = vmatmul.mubr.f32.gmra.mxu0 %v1832
        %v3810 = vpop.f32.mrf.mxu0
        %v3811 = vadd.f32 0.0, %v3810
        %v3812 = vpop.f32.mrf.mxu0
        %v3813 = vadd.f32 0.0, %v3812
        %3814 = vmatprep.mubr.f32.mxu0 0.0
        %3815 = vmatmul.mubr.f32.gmra.mxu0 %v1835
        %v3816 = vpop.f32.mrf.mxu0
        %v3817 = vadd.f32 0.0, %v3816
        %v3818 = vpop.f32.mrf.mxu0
        %v3819 = vadd.f32 0.0, %v3818
        %3820 = vmatprep.mubr.f32.mxu0 0.0
        %3821 = vmatmul.mubr.f32.gmra.mxu0 %v1838
        %v3822 = vpop.f32.mrf.mxu0
        %v3823 = vadd.f32 0.0, %v3822
        %v3824 = vpop.f32.mrf.mxu0
        %v3825 = vadd.f32 0.0, %v3824
        %3826 = vmatprep.mubr.f32.mxu0 0.0
        %3827 = vmatmul.mubr.f32.gmra.mxu0 %v1841
        %v3828 = vpop.f32.mrf.mxu0
        %v3829 = vadd.f32 0.0, %v3828
        %v3830 = vpop.f32.mrf.mxu0
        %v3831 = vadd.f32 0.0, %v3830
        %3832 = vmatprep.mubr.f32.mxu0 0.0
        %3833 = vmatmul.mubr.f32.gmra.mxu0 %v1844
        %v3834 = vpop.f32.mrf.mxu0
        %v3835 = vadd.f32 0.0, %v3834
        %v3836 = vpop.f32.mrf.mxu0
        %v3837 = vadd.f32 0.0, %v3836
        %3838 = vmatprep.mubr.f32.mxu0 0.0
        %3839 = vmatmul.mubr.f32.gmra.mxu0 %v1847
        %v3840 = vpop.f32.mrf.mxu0
        %v3841 = vadd.f32 0.0, %v3840
        %v3842 = vpop.f32.mrf.mxu0
        %v3843 = vadd.f32 0.0, %v3842
        %3844 = vmatprep.mubr.f32.mxu0 0.0
        %3845 = vmatmul.mubr.f32.gmra.mxu0 %v1850
        %v3846 = vpop.f32.mrf.mxu0
        %v3847 = vadd.f32 0.0, %v3846
        %v3848 = vpop.f32.mrf.mxu0
        %v3849 = vadd.f32 0.0, %v3848
        %3850 = vmatprep.mubr.f32.mxu0 0.0
        %3851 = vmatmul.mubr.f32.gmra.mxu0 %v1853
        %v3852 = vpop.f32.mrf.mxu0
        %v3853 = vadd.f32 0.0, %v3852
        %v3854 = vpop.f32.mrf.mxu0
        %v3855 = vadd.f32 0.0, %v3854
        %3856 = vmatprep.mubr.f32.mxu0 0.0
        %3857 = vmatmul.mubr.f32.gmra.mxu0 %v1856
        %v3858 = vpop.f32.mrf.mxu0
        %v3859 = vadd.f32 0.0, %v3858
        %v3860 = vpop.f32.mrf.mxu0
        %v3861 = vadd.f32 0.0, %v3860
        %3862 = vmatprep.mubr.f32.mxu0 0.0
        %3863 = vmatmul.mubr.f32.gmra.mxu0 %v1859
        %v3864 = vpop.f32.mrf.mxu0
        %v3865 = vadd.f32 0.0, %v3864
        %v3866 = vpop.f32.mrf.mxu0
        %v3867 = vadd.f32 0.0, %v3866
        %3868 = vmatprep.mubr.f32.mxu0 0.0
        %3869 = vmatmul.mubr.f32.gmra.mxu0 %v1862
        %v3870 = vpop.f32.mrf.mxu0
        %v3871 = vadd.f32 0.0, %v3870
        %v3872 = vpop.f32.mrf.mxu0
        %v3873 = vadd.f32 0.0, %v3872
        %3874 = vmatprep.mubr.f32.mxu0 0.0
        %3875 = vmatmul.mubr.f32.gmra.mxu0 %v1865
        %v3876 = vpop.f32.mrf.mxu0
        %v3877 = vadd.f32 0.0, %v3876
        %v3878 = vpop.f32.mrf.mxu0
        %v3879 = vadd.f32 0.0, %v3878
        %3880 = vdwg.mxu0
        %3881 = vmatprep.subr.mxu0 0.0
        %3882 = vmatpush1.msra.mxu0 0.0
        %3883 = vmatprep.subr.mxu0 0.0
        %3884 = vmatpush1.msra.mxu0 0.0
        %3885 = vmatprep.subr.mxu0 0.0
        %3886 = vmatpush1.msra.mxu0 0.0
        %3887 = vmatprep.subr.mxu0 0.0
        %3888 = vmatpush1.msra.mxu0 0.0
        %3889 = vmatprep.subr.mxu0 0.0
        %3890 = vmatpush1.msra.mxu0 0.0
        %3891 = vmatprep.subr.mxu0 0.0
        %3892 = vmatpush1.msra.mxu0 0.0
        %3893 = vmatprep.subr.mxu0 0.0
        %3894 = vmatpush1.msra.mxu0 0.0
        %3895 = vmatprep.subr.mxu0 0.0
        %3896 = vmatpush1.msra.mxu0 0.0
        %3897 = vmatprep.subr.mxu0 0.0
        %3898 = vmatpush1.msra.mxu0 0.0
        %3899 = vmatprep.subr.mxu0 0.0
        %3900 = vmatpush1.msra.mxu0 0.0
        %3901 = vmatprep.subr.mxu0 0.0
        %3902 = vmatpush1.msra.mxu0 0.0
        %3903 = vmatprep.subr.mxu0 0.0
        %3904 = vmatpush1.msra.mxu0 0.0
        %3905 = vmatprep.subr.mxu0 %v3695
        %3906 = vmatpush1.msra.mxu0 %v3694
        %3907 = vmatprep.subr.mxu0 %v3691
        %3908 = vmatpush1.msra.mxu0 %v3690
        %3909 = vmatprep.subr.mxu0 %v3687
        %3910 = vmatpush1.msra.mxu0 %v3686
        %3911 = vmatprep.subr.mxu0 %v3683
        %3912 = vmatpush1.msra.mxu0 %v3682
        %3913 = vmatprep.subr.mxu0 0.0
        %3914 = vmatpush2.msra.mxu0 0.0
        %3915 = vmatprep.subr.mxu0 0.0
        %3916 = vmatpush2.msra.mxu0 0.0
        %3917 = vmatprep.subr.mxu0 0.0
        %3918 = vmatpush2.msra.mxu0 0.0
        %3919 = vmatprep.subr.mxu0 0.0
        %3920 = vmatpush2.msra.mxu0 0.0
        %3921 = vmatprep.subr.mxu0 0.0
        %3922 = vmatpush2.msra.mxu0 0.0
        %3923 = vmatprep.subr.mxu0 0.0
        %3924 = vmatpush2.msra.mxu0 0.0
        %3925 = vmatprep.subr.mxu0 0.0
        %3926 = vmatpush2.msra.mxu0 0.0
        %3927 = vmatprep.subr.mxu0 0.0
        %3928 = vmatpush2.msra.mxu0 0.0
        %3929 = vmatprep.subr.mxu0 0.0
        %3930 = vmatpush2.msra.mxu0 0.0
        %3931 = vmatprep.subr.mxu0 0.0
        %3932 = vmatpush2.msra.mxu0 0.0
        %3933 = vmatprep.subr.mxu0 0.0
        %3934 = vmatpush2.msra.mxu0 0.0
        %3935 = vmatprep.subr.mxu0 0.0
        %3936 = vmatpush2.msra.mxu0 0.0
        %3937 = vmatprep.subr.mxu0 0.0
        %3938 = vmatpush2.msra.mxu0 0.0
        %3939 = vmatprep.subr.mxu0 0.0
        %3940 = vmatpush2.msra.mxu0 0.0
        %3941 = vmatprep.subr.mxu0 0.0
        %3942 = vmatpush2.msra.mxu0 0.0
        %3943 = vmatprep.subr.mxu0 0.0
        %3944 = vmatpush2.msra.mxu0 0.0
        %3945 = vmatprep.mubr.f32.mxu0 0.0
        %3946 = vmatmul.mubr.f32.gmra.mxu0 %v1832
        %v3947 = vpop.f32.mrf.mxu0
        %v3948 = vadd.f32 0.0, %v3947
        %v3949 = vpop.f32.mrf.mxu0
        %v3950 = vadd.f32 0.0, %v3949
        %3951 = vmatprep.mubr.f32.mxu0 0.0
        %3952 = vmatmul.mubr.f32.gmra.mxu0 %v1835
        %v3953 = vpop.f32.mrf.mxu0
        %v3954 = vadd.f32 0.0, %v3953
        %v3955 = vpop.f32.mrf.mxu0
        %v3956 = vadd.f32 0.0, %v3955
        %3957 = vmatprep.mubr.f32.mxu0 0.0
        %3958 = vmatmul.mubr.f32.gmra.mxu0 %v1838
        %v3959 = vpop.f32.mrf.mxu0
        %v3960 = vadd.f32 0.0, %v3959
        %v3961 = vpop.f32.mrf.mxu0
        %v3962 = vadd.f32 0.0, %v3961
        %3963 = vmatprep.mubr.f32.mxu0 0.0
        %3964 = vmatmul.mubr.f32.gmra.mxu0 %v1841
        %v3965 = vpop.f32.mrf.mxu0
        %v3966 = vadd.f32 0.0, %v3965
        %v3967 = vpop.f32.mrf.mxu0
        %v3968 = vadd.f32 0.0, %v3967
        %3969 = vmatprep.mubr.f32.mxu0 0.0
        %3970 = vmatmul.mubr.f32.gmra.mxu0 %v1844
        %v3971 = vpop.f32.mrf.mxu0
        %v3972 = vadd.f32 0.0, %v3971
        %v3973 = vpop.f32.mrf.mxu0
        %v3974 = vadd.f32 0.0, %v3973
        %3975 = vmatprep.mubr.f32.mxu0 0.0
        %3976 = vmatmul.mubr.f32.gmra.mxu0 %v1847
        %v3977 = vpop.f32.mrf.mxu0
        %v3978 = vadd.f32 0.0, %v3977
        %v3979 = vpop.f32.mrf.mxu0
        %v3980 = vadd.f32 0.0, %v3979
        %3981 = vmatprep.mubr.f32.mxu0 0.0
        %3982 = vmatmul.mubr.f32.gmra.mxu0 %v1850
        %v3983 = vpop.f32.mrf.mxu0
        %v3984 = vadd.f32 0.0, %v3983
        %v3985 = vpop.f32.mrf.mxu0
        %v3986 = vadd.f32 0.0, %v3985
        %3987 = vmatprep.mubr.f32.mxu0 0.0
        %3988 = vmatmul.mubr.f32.gmra.mxu0 %v1853
        %v3989 = vpop.f32.mrf.mxu0
        %v3990 = vadd.f32 0.0, %v3989
        %v3991 = vpop.f32.mrf.mxu0
        %v3992 = vadd.f32 0.0, %v3991
        %3993 = vmatprep.mubr.f32.mxu0 0.0
        %3994 = vmatmul.mubr.f32.gmra.mxu0 %v1856
        %v3995 = vpop.f32.mrf.mxu0
        %v3996 = vadd.f32 0.0, %v3995
        %v3997 = vpop.f32.mrf.mxu0
        %v3998 = vadd.f32 0.0, %v3997
        %3999 = vmatprep.mubr.f32.mxu0 0.0
        %4000 = vmatmul.mubr.f32.gmra.mxu0 %v1859
        %v4001 = vpop.f32.mrf.mxu0
        %v4002 = vadd.f32 0.0, %v4001
        %v4003 = vpop.f32.mrf.mxu0
        %v4004 = vadd.f32 0.0, %v4003
        %4005 = vmatprep.mubr.f32.mxu0 0.0
        %4006 = vmatmul.mubr.f32.gmra.mxu0 %v1862
        %v4007 = vpop.f32.mrf.mxu0
        %v4008 = vadd.f32 0.0, %v4007
        %v4009 = vpop.f32.mrf.mxu0
        %v4010 = vadd.f32 0.0, %v4009
        %4011 = vmatprep.mubr.f32.mxu0 0.0
        %4012 = vmatmul.mubr.f32.gmra.mxu0 %v1865
        %v4013 = vpop.f32.mrf.mxu0
        %v4014 = vadd.f32 0.0, %v4013
        %v4015 = vpop.f32.mrf.mxu0
        %v4016 = vadd.f32 0.0, %v4015
        %4017 = vdwg.mxu0
        %v4018 = vadd.f32 %v3696, %v3811
        %v4019 = vadd.f32 %v3697, %v3813
        %v4020 = vadd.f32 %v3698, %v3948
        %v4021 = vadd.f32 %v3699, %v3950
        %v4022 = vadd.f32 %v3700, %v3817
        %v4023 = vadd.f32 %v3701, %v3819
        %v4024 = vadd.f32 %v3702, %v3954
        %v4025 = vadd.f32 %v3703, %v3956
        %v4026 = vadd.f32 %v3704, %v3823
        %v4027 = vadd.f32 %v3705, %v3825
        %v4028 = vadd.f32 %v3706, %v3960
        %v4029 = vadd.f32 %v3707, %v3962
        %v4030 = vadd.f32 %v3708, %v3829
        %v4031 = vadd.f32 %v3709, %v3831
        %v4032 = vadd.f32 %v3710, %v3966
        %v4033 = vadd.f32 %v3711, %v3968
        %v4034 = vadd.f32 %v3712, %v3835
        %v4035 = vadd.f32 %v3713, %v3837
        %v4036 = vadd.f32 %v3714, %v3972
        %v4037 = vadd.f32 %v3715, %v3974
        %v4038 = vadd.f32 %v3716, %v3841
        %v4039 = vadd.f32 %v3717, %v3843
        %v4040 = vadd.f32 %v3718, %v3978
        %v4041 = vadd.f32 %v3719, %v3980
        %v4042 = vadd.f32 %v3720, %v3847
        %v4043 = vadd.f32 %v3721, %v3849
        %v4044 = vadd.f32 %v3722, %v3984
        %v4045 = vadd.f32 %v3723, %v3986
        %v4046 = vadd.f32 %v3724, %v3853
        %v4047 = vadd.f32 %v3725, %v3855
        %v4048 = vadd.f32 %v3726, %v3990
        %v4049 = vadd.f32 %v3727, %v3992
        %v4050 = vxor.u32 %v4018, 2147483648
        %v4051 = vxor.u32 %v4019, 2147483648
        %v4052 = vxor.u32 %v4020, 2147483648
        %v4053 = vxor.u32 %v4021, 2147483648
        %v4054 = vxor.u32 %v4022, 2147483648
        %v4055 = vxor.u32 %v4023, 2147483648
        %v4056 = vxor.u32 %v4024, 2147483648
        %v4057 = vxor.u32 %v4025, 2147483648
        %v4058 = vxor.u32 %v4026, 2147483648
        %v4059 = vxor.u32 %v4027, 2147483648
        %v4060 = vxor.u32 %v4028, 2147483648
        %v4061 = vxor.u32 %v4029, 2147483648
        %v4062 = vxor.u32 %v4030, 2147483648
        %v4063 = vxor.u32 %v4031, 2147483648
        %v4064 = vxor.u32 %v4032, 2147483648
        %v4065 = vxor.u32 %v4033, 2147483648
        %v4066 = vxor.u32 %v4034, 2147483648
        %v4067 = vxor.u32 %v4035, 2147483648
        %v4068 = vxor.u32 %v4036, 2147483648
        %v4069 = vxor.u32 %v4037, 2147483648
        %v4070 = vxor.u32 %v4038, 2147483648
        %v4071 = vxor.u32 %v4039, 2147483648
        %v4072 = vxor.u32 %v4040, 2147483648
        %v4073 = vxor.u32 %v4041, 2147483648
        %v4074 = vxor.u32 %v4042, 2147483648
        %v4075 = vxor.u32 %v4043, 2147483648
        %v4076 = vxor.u32 %v4044, 2147483648
        %v4077 = vxor.u32 %v4045, 2147483648
        %v4078 = vxor.u32 %v4046, 2147483648
        %v4079 = vxor.u32 %v4047, 2147483648
        %v4080 = vxor.u32 %v4048, 2147483648
        %v4081 = vxor.u32 %v4049, 2147483648
        %v4082 = vmul.f32 %v4050, 1.442695
        %v4083 = vpow.pop %v4082
        %v4084 = vmul.f32 %v4051, 1.442695
        %v4085 = vpow.pop %v4084
        %v4086 = vmul.f32 %v4052, 1.442695
        %v4087 = vpow.pop %v4086
        %v4088 = vmul.f32 %v4053, 1.442695
        %v4089 = vpow.pop %v4088
        %v4090 = vmul.f32 %v4054, 1.442695
        %v4091 = vpow.pop %v4090
        %v4092 = vmul.f32 %v4055, 1.442695
        %v4093 = vpow.pop %v4092
        %v4094 = vmul.f32 %v4056, 1.442695
        %v4095 = vpow.pop %v4094
        %v4096 = vmul.f32 %v4057, 1.442695
        %v4097 = vpow.pop %v4096
        %v4098 = vmul.f32 %v4058, 1.442695
        %v4099 = vpow.pop %v4098
        %v4100 = vmul.f32 %v4059, 1.442695
        %v4101 = vpow.pop %v4100
        %v4102 = vmul.f32 %v4060, 1.442695
        %v4103 = vpow.pop %v4102
        %v4104 = vmul.f32 %v4061, 1.442695
        %v4105 = vpow.pop %v4104
        %v4106 = vmul.f32 %v4062, 1.442695
        %v4107 = vpow.pop %v4106
        %v4108 = vmul.f32 %v4063, 1.442695
        %v4109 = vpow.pop %v4108
        %v4110 = vmul.f32 %v4064, 1.442695
        %v4111 = vpow.pop %v4110
        %v4112 = vmul.f32 %v4065, 1.442695
        %v4113 = vpow.pop %v4112
        %v4114 = vmul.f32 %v4066, 1.442695
        %v4115 = vpow.pop %v4114
        %v4116 = vmul.f32 %v4067, 1.442695
        %v4117 = vpow.pop %v4116
        %v4118 = vmul.f32 %v4068, 1.442695
        %v4119 = vpow.pop %v4118
        %v4120 = vmul.f32 %v4069, 1.442695
        %v4121 = vpow.pop %v4120
        %v4122 = vmul.f32 %v4070, 1.442695
        %v4123 = vpow.pop %v4122
        %v4124 = vmul.f32 %v4071, 1.442695
        %v4125 = vpow.pop %v4124
        %v4126 = vmul.f32 %v4072, 1.442695
        %v4127 = vpow.pop %v4126
        %v4128 = vmul.f32 %v4073, 1.442695
        %v4129 = vpow.pop %v4128
        %v4130 = vmul.f32 %v4074, 1.442695
        %v4131 = vpow.pop %v4130
        %v4132 = vmul.f32 %v4075, 1.442695
        %v4133 = vpow.pop %v4132
        %v4134 = vmul.f32 %v4076, 1.442695
        %v4135 = vpow.pop %v4134
        %v4136 = vmul.f32 %v4077, 1.442695
        %v4137 = vpow.pop %v4136
        %v4138 = vmul.f32 %v4078, 1.442695
        %v4139 = vpow.pop %v4138
        %v4140 = vmul.f32 %v4079, 1.442695
        %v4141 = vpow.pop %v4140
        %v4142 = vmul.f32 %v4080, 1.442695
        %v4143 = vpow.pop %v4142
        %v4144 = vmul.f32 %v4081, 1.442695
        %v4145 = vpow.pop %v4144
        %v4146 = vadd.f32 %v4083, 1.0
        %v4147 = vadd.f32 %v4085, 1.0
        %v4148 = vadd.f32 %v4087, 1.0
        %v4149 = vadd.f32 %v4089, 1.0
        %v4150 = vadd.f32 %v4091, 1.0
        %v4151 = vadd.f32 %v4093, 1.0
        %v4152 = vadd.f32 %v4095, 1.0
        %v4153 = vadd.f32 %v4097, 1.0
        %v4154 = vadd.f32 %v4099, 1.0
        %v4155 = vadd.f32 %v4101, 1.0
        %v4156 = vadd.f32 %v4103, 1.0
        %v4157 = vadd.f32 %v4105, 1.0
        %v4158 = vadd.f32 %v4107, 1.0
        %v4159 = vadd.f32 %v4109, 1.0
        %v4160 = vadd.f32 %v4111, 1.0
        %v4161 = vadd.f32 %v4113, 1.0
        %v4162 = vadd.f32 %v4115, 1.0
        %v4163 = vadd.f32 %v4117, 1.0
        %v4164 = vadd.f32 %v4119, 1.0
        %v4165 = vadd.f32 %v4121, 1.0
        %v4166 = vadd.f32 %v4123, 1.0
        %v4167 = vadd.f32 %v4125, 1.0
        %v4168 = vadd.f32 %v4127, 1.0
        %v4169 = vadd.f32 %v4129, 1.0
        %v4170 = vadd.f32 %v4131, 1.0
        %v4171 = vadd.f32 %v4133, 1.0
        %v4172 = vadd.f32 %v4135, 1.0
        %v4173 = vadd.f32 %v4137, 1.0
        %v4174 = vadd.f32 %v4139, 1.0
        %v4175 = vadd.f32 %v4141, 1.0
        %v4176 = vadd.f32 %v4143, 1.0
        %v4177 = vadd.f32 %v4145, 1.0
        %v4178 = vrcp.pop %v4146
        %v4179 = vmul.f32 1.0, %v4178
        %v4180 = vrcp.pop %v4147
        %v4181 = vmul.f32 1.0, %v4180
        %v4182 = vrcp.pop %v4148
        %v4183 = vmul.f32 1.0, %v4182
        %v4184 = vrcp.pop %v4149
        %v4185 = vmul.f32 1.0, %v4184
        %v4186 = vrcp.pop %v4150
        %v4187 = vmul.f32 1.0, %v4186
        %v4188 = vrcp.pop %v4151
        %v4189 = vmul.f32 1.0, %v4188
        %v4190 = vrcp.pop %v4152
        %v4191 = vmul.f32 1.0, %v4190
        %v4192 = vrcp.pop %v4153
        %v4193 = vmul.f32 1.0, %v4192
        %v4194 = vrcp.pop %v4154
        %v4195 = vmul.f32 1.0, %v4194
        %v4196 = vrcp.pop %v4155
        %v4197 = vmul.f32 1.0, %v4196
        %v4198 = vrcp.pop %v4156
        %v4199 = vmul.f32 1.0, %v4198
        %v4200 = vrcp.pop %v4157
        %v4201 = vmul.f32 1.0, %v4200
        %v4202 = vrcp.pop %v4158
        %v4203 = vmul.f32 1.0, %v4202
        %v4204 = vrcp.pop %v4159
        %v4205 = vmul.f32 1.0, %v4204
        %v4206 = vrcp.pop %v4160
        %v4207 = vmul.f32 1.0, %v4206
        %v4208 = vrcp.pop %v4161
        %v4209 = vmul.f32 1.0, %v4208
        %v4210 = vrcp.pop %v4162
        %v4211 = vmul.f32 1.0, %v4210
        %v4212 = vrcp.pop %v4163
        %v4213 = vmul.f32 1.0, %v4212
        %v4214 = vrcp.pop %v4164
        %v4215 = vmul.f32 1.0, %v4214
        %v4216 = vrcp.pop %v4165
        %v4217 = vmul.f32 1.0, %v4216
        %v4218 = vrcp.pop %v4166
        %v4219 = vmul.f32 1.0, %v4218
        %v4220 = vrcp.pop %v4167
        %v4221 = vmul.f32 1.0, %v4220
        %v4222 = vrcp.pop %v4168
        %v4223 = vmul.f32 1.0, %v4222
        %v4224 = vrcp.pop %v4169
        %v4225 = vmul.f32 1.0, %v4224
        %v4226 = vrcp.pop %v4170
        %v4227 = vmul.f32 1.0, %v4226
        %v4228 = vrcp.pop %v4171
        %v4229 = vmul.f32 1.0, %v4228
        %v4230 = vrcp.pop %v4172
        %v4231 = vmul.f32 1.0, %v4230
        %v4232 = vrcp.pop %v4173
        %v4233 = vmul.f32 1.0, %v4232
        %v4234 = vrcp.pop %v4174
        %v4235 = vmul.f32 1.0, %v4234
        %v4236 = vrcp.pop %v4175
        %v4237 = vmul.f32 1.0, %v4236
        %v4238 = vrcp.pop %v4176
        %v4239 = vmul.f32 1.0, %v4238
        %v4240 = vrcp.pop %v4177
        %v4241 = vmul.f32 1.0, %v4240
        %v4242 = vadd.f32 %v3859, %v342
        %v4243 = vadd.f32 %v3861, %v342
        %v4244 = vadd.f32 %v3996, %v342
        %v4245 = vadd.f32 %v3998, %v342
        %v4246 = vadd.f32 %v3865, %v347
        %v4247 = vadd.f32 %v3867, %v347
        %v4248 = vadd.f32 %v4002, %v347
        %v4249 = vadd.f32 %v4004, %v347
        %v4250 = vadd.f32 %v3871, %v352
        %v4251 = vadd.f32 %v3873, %v352
        %v4252 = vadd.f32 %v4008, %v352
        %v4253 = vadd.f32 %v4010, %v352
        %v4254 = vadd.f32 %v3877, %v357
        %v4255 = vadd.f32 %v3879, %v357
        %v4256 = vadd.f32 %v4014, %v357
        %v4257 = vadd.f32 %v4016, %v357
        %v4258 = vmul.f32 %v4179, %v4242
        %v4259 = vmul.f32 %v4181, %v4243
        %v4260 = vmul.f32 %v4183, %v4244
        %v4261 = vmul.f32 %v4185, %v4245
        %v4262 = vmul.f32 %v4187, %v4246
        %v4263 = vmul.f32 %v4189, %v4247
        %v4264 = vmul.f32 %v4191, %v4248
        %v4265 = vmul.f32 %v4193, %v4249
        %v4266 = vmul.f32 %v4195, %v4250
        %v4267 = vmul.f32 %v4197, %v4251
        %v4268 = vmul.f32 %v4199, %v4252
        %v4269 = vmul.f32 %v4201, %v4253
        %v4270 = vmul.f32 %v4203, %v4254
        %v4271 = vmul.f32 %v4205, %v4255
        %v4272 = vmul.f32 %v4207, %v4256
        %v4273 = vmul.f32 %v4209, %v4257
        %v4274 = vadd.f32 %v3728, %v4258
        %v4275 = vadd.f32 %v3729, %v4259
        %v4276 = vadd.f32 %v3730, %v4260
        %v4277 = vadd.f32 %v3731, %v4261
        %v4278 = vadd.f32 %v3732, %v4262
        %v4279 = vadd.f32 %v3733, %v4263
        %v4280 = vadd.f32 %v3734, %v4264
        %v4281 = vadd.f32 %v3735, %v4265
        %v4282 = vadd.f32 %v3736, %v4266
        %v4283 = vadd.f32 %v3737, %v4267
        %v4284 = vadd.f32 %v3738, %v4268
        %v4285 = vadd.f32 %v3739, %v4269
        %v4286 = vadd.f32 %v3740, %v4270
        %v4287 = vadd.f32 %v3741, %v4271
        %v4288 = vadd.f32 %v3742, %v4272
        %v4289 = vadd.f32 %v3743, %v4273
        %v4290 = vtanh.pop %v4274
        %v4291 = vtanh.pop %v4275
        %v4292 = vtanh.pop %v4276
        %v4293 = vtanh.pop %v4277
        %v4294 = vtanh.pop %v4278
        %v4295 = vtanh.pop %v4279
        %v4296 = vtanh.pop %v4280
        %v4297 = vtanh.pop %v4281
        %v4298 = vtanh.pop %v4282
        %v4299 = vtanh.pop %v4283
        %v4300 = vtanh.pop %v4284
        %v4301 = vtanh.pop %v4285
        %v4302 = vtanh.pop %v4286
        %v4303 = vtanh.pop %v4287
        %v4304 = vtanh.pop %v4288
        %v4305 = vtanh.pop %v4289
        %v4306 = vsub.f32 1.0, %v4211
        %v4307 = vsub.f32 1.0, %v4213
        %v4308 = vsub.f32 1.0, %v4215
        %v4309 = vsub.f32 1.0, %v4217
        %v4310 = vsub.f32 1.0, %v4219
        %v4311 = vsub.f32 1.0, %v4221
        %v4312 = vsub.f32 1.0, %v4223
        %v4313 = vsub.f32 1.0, %v4225
        %v4314 = vsub.f32 1.0, %v4227
        %v4315 = vsub.f32 1.0, %v4229
        %v4316 = vsub.f32 1.0, %v4231
        %v4317 = vsub.f32 1.0, %v4233
        %v4318 = vsub.f32 1.0, %v4235
        %v4319 = vsub.f32 1.0, %v4237
        %v4320 = vsub.f32 1.0, %v4239
        %v4321 = vsub.f32 1.0, %v4241
        %v4322 = vmul.f32 %v4306, %v4290
        %v4323 = vmul.f32 %v4307, %v4291
        %v4324 = vmul.f32 %v4308, %v4292
        %v4325 = vmul.f32 %v4309, %v4293
        %v4326 = vmul.f32 %v4310, %v4294
        %v4327 = vmul.f32 %v4311, %v4295
        %v4328 = vmul.f32 %v4312, %v4296
        %v4329 = vmul.f32 %v4313, %v4297
        %v4330 = vmul.f32 %v4314, %v4298
        %v4331 = vmul.f32 %v4315, %v4299
        %v4332 = vmul.f32 %v4316, %v4300
        %v4333 = vmul.f32 %v4317, %v4301
        %v4334 = vmul.f32 %v4318, %v4302
        %v4335 = vmul.f32 %v4319, %v4303
        %v4336 = vmul.f32 %v4320, %v4304
        %v4337 = vmul.f32 %v4321, %v4305
        %v4338 = vmul.f32 %v4211, %v3680
        %v4339 = vmul.f32 %v4213, %v3681
        %v4340 = vmul.f32 %v4215, %v3682
        %v4341 = vmul.f32 %v4217, %v3683
        %v4342 = vmul.f32 %v4219, %v3684
        %v4343 = vmul.f32 %v4221, %v3685
        %v4344 = vmul.f32 %v4223, %v3686
        %v4345 = vmul.f32 %v4225, %v3687
        %v4346 = vmul.f32 %v4227, %v3688
        %v4347 = vmul.f32 %v4229, %v3689
        %v4348 = vmul.f32 %v4231, %v3690
        %v4349 = vmul.f32 %v4233, %v3691
        %v4350 = vmul.f32 %v4235, %v3692
        %v4351 = vmul.f32 %v4237, %v3693
        %v4352 = vmul.f32 %v4239, %v3694
        %v4353 = vmul.f32 %v4241, %v3695
        %v4354 = vadd.f32 %v4322, %v4338
        %v4355 = vadd.f32 %v4323, %v4339
        %v4356 = vadd.f32 %v4324, %v4340
        %v4357 = vadd.f32 %v4325, %v4341
        %v4358 = vadd.f32 %v4326, %v4342
        %v4359 = vadd.f32 %v4327, %v4343
        %v4360 = vadd.f32 %v4328, %v4344
        %v4361 = vadd.f32 %v4329, %v4345
        %v4362 = vadd.f32 %v4330, %v4346
        %v4363 = vadd.f32 %v4331, %v4347
        %v4364 = vadd.f32 %v4332, %v4348
        %v4365 = vadd.f32 %v4333, %v4349
        %v4366 = vadd.f32 %v4334, %v4350
        %v4367 = vadd.f32 %v4335, %v4351
        %v4368 = vadd.f32 %v4336, %v4352
        %v4369 = vadd.f32 %v4337, %v4353
        %v4370 = vld [vmem:[%s5] sm:$0xff]
        %v4371 = vld [vmem:[%s6] sm:$0xff]
        %4373 = vset.pattern.permute.xlu0 0
        %4374 = vperm.xlu0 %4373, %v4371
        %v4375 = vpop.permute.xlu0 %4374
        %v4378 = vsel %vm1830, %v4370, 0
        %4380 = vmatprep.subr.mxu0 0.0
        %4381 = vmatpush1.msra.mxu0 0.0
        %4382 = vmatprep.subr.mxu0 0.0
        %4383 = vmatpush1.msra.mxu0 0.0
        %4384 = vmatprep.subr.mxu0 0.0
        %4385 = vmatpush1.msra.mxu0 0.0
        %4386 = vmatprep.subr.mxu0 0.0
        %4387 = vmatpush1.msra.mxu0 0.0
        %4388 = vmatprep.subr.mxu0 0.0
        %4389 = vmatpush1.msra.mxu0 0.0
        %4390 = vmatprep.subr.mxu0 0.0
        %4391 = vmatpush1.msra.mxu0 0.0
        %4392 = vmatprep.subr.mxu0 0.0
        %4393 = vmatpush1.msra.mxu0 0.0
        %4394 = vmatprep.subr.mxu0 0.0
        %4395 = vmatpush1.msra.mxu0 0.0
        %4396 = vmatprep.subr.mxu0 0.0
        %4397 = vmatpush1.msra.mxu0 0.0
        %4398 = vmatprep.subr.mxu0 0.0
        %4399 = vmatpush1.msra.mxu0 0.0
        %4400 = vmatprep.subr.mxu0 0.0
        %4401 = vmatpush1.msra.mxu0 0.0
        %4402 = vmatprep.subr.mxu0 0.0
        %4403 = vmatpush1.msra.mxu0 0.0
        %4404 = vmatprep.subr.mxu0 %v4367
        %4405 = vmatpush1.msra.mxu0 %v4366
        %4406 = vmatprep.subr.mxu0 %v4363
        %4407 = vmatpush1.msra.mxu0 %v4362
        %4408 = vmatprep.subr.mxu0 %v4359
        %4409 = vmatpush1.msra.mxu0 %v4358
        %4410 = vmatprep.subr.mxu0 %v4355
        %4411 = vmatpush1.msra.mxu0 %v4354
        %4412 = vmatprep.subr.mxu0 0.0
        %4413 = vmatpush2.msra.mxu0 0.0
        %4414 = vmatprep.subr.mxu0 0.0
        %4415 = vmatpush2.msra.mxu0 0.0
        %4416 = vmatprep.subr.mxu0 0.0
        %4417 = vmatpush2.msra.mxu0 0.0
        %4418 = vmatprep.subr.mxu0 0.0
        %4419 = vmatpush2.msra.mxu0 0.0
        %4420 = vmatprep.subr.mxu0 0.0
        %4421 = vmatpush2.msra.mxu0 0.0
        %4422 = vmatprep.subr.mxu0 0.0
        %4423 = vmatpush2.msra.mxu0 0.0
        %4424 = vmatprep.subr.mxu0 0.0
        %4425 = vmatpush2.msra.mxu0 0.0
        %4426 = vmatprep.subr.mxu0 0.0
        %4427 = vmatpush2.msra.mxu0 0.0
        %4428 = vmatprep.subr.mxu0 0.0
        %4429 = vmatpush2.msra.mxu0 0.0
        %4430 = vmatprep.subr.mxu0 0.0
        %4431 = vmatpush2.msra.mxu0 0.0
        %4432 = vmatprep.subr.mxu0 0.0
        %4433 = vmatpush2.msra.mxu0 0.0
        %4434 = vmatprep.subr.mxu0 0.0
        %4435 = vmatpush2.msra.mxu0 0.0
        %4436 = vmatprep.subr.mxu0 0.0
        %4437 = vmatpush2.msra.mxu0 0.0
        %4438 = vmatprep.subr.mxu0 0.0
        %4439 = vmatpush2.msra.mxu0 0.0
        %4440 = vmatprep.subr.mxu0 0.0
        %4441 = vmatpush2.msra.mxu0 0.0
        %4442 = vmatprep.subr.mxu0 0.0
        %4443 = vmatpush2.msra.mxu0 0.0
        %4444 = vmatprep.mubr.f32.mxu0 0.0
        %4445 = vmatmul.mubr.f32.gmra.mxu0 %v4378
        %v4446 = vpop.f32.mrf.mxu0
        %v4447 = vadd.f32 %v4375, %v4446
        %v4448 = vpop.f32.mrf.mxu0
        %v4449 = vadd.f32 %v4375, %v4448
        %4450 = vdwg.mxu0
        %4451 = vmatprep.subr.mxu0 0.0
        %4452 = vmatpush1.msra.mxu0 0.0
        %4453 = vmatprep.subr.mxu0 0.0
        %4454 = vmatpush1.msra.mxu0 0.0
        %4455 = vmatprep.subr.mxu0 0.0
        %4456 = vmatpush1.msra.mxu0 0.0
        %4457 = vmatprep.subr.mxu0 0.0
        %4458 = vmatpush1.msra.mxu0 0.0
        %4459 = vmatprep.subr.mxu0 0.0
        %4460 = vmatpush1.msra.mxu0 0.0
        %4461 = vmatprep.subr.mxu0 0.0
        %4462 = vmatpush1.msra.mxu0 0.0
        %4463 = vmatprep.subr.mxu0 0.0
        %4464 = vmatpush1.msra.mxu0 0.0
        %4465 = vmatprep.subr.mxu0 0.0
        %4466 = vmatpush1.msra.mxu0 0.0
        %4467 = vmatprep.subr.mxu0 0.0
        %4468 = vmatpush1.msra.mxu0 0.0
        %4469 = vmatprep.subr.mxu0 0.0
        %4470 = vmatpush1.msra.mxu0 0.0
        %4471 = vmatprep.subr.mxu0 0.0
        %4472 = vmatpush1.msra.mxu0 0.0
        %4473 = vmatprep.subr.mxu0 0.0
        %4474 = vmatpush1.msra.mxu0 0.0
        %4475 = vmatprep.subr.mxu0 %v4369
        %4476 = vmatpush1.msra.mxu0 %v4368
        %4477 = vmatprep.subr.mxu0 %v4365
        %4478 = vmatpush1.msra.mxu0 %v4364
        %4479 = vmatprep.subr.mxu0 %v4361
        %4480 = vmatpush1.msra.mxu0 %v4360
        %4481 = vmatprep.subr.mxu0 %v4357
        %4482 = vmatpush1.msra.mxu0 %v4356
        %4483 = vmatprep.subr.mxu0 0.0
        %4484 = vmatpush2.msra.mxu0 0.0
        %4485 = vmatprep.subr.mxu0 0.0
        %4486 = vmatpush2.msra.mxu0 0.0
        %4487 = vmatprep.subr.mxu0 0.0
        %4488 = vmatpush2.msra.mxu0 0.0
        %4489 = vmatprep.subr.mxu0 0.0
        %4490 = vmatpush2.msra.mxu0 0.0
        %4491 = vmatprep.subr.mxu0 0.0
        %4492 = vmatpush2.msra.mxu0 0.0
        %4493 = vmatprep.subr.mxu0 0.0
        %4494 = vmatpush2.msra.mxu0 0.0
        %4495 = vmatprep.subr.mxu0 0.0
        %4496 = vmatpush2.msra.mxu0 0.0
        %4497 = vmatprep.subr.mxu0 0.0
        %4498 = vmatpush2.msra.mxu0 0.0
        %4499 = vmatprep.subr.mxu0 0.0
        %4500 = vmatpush2.msra.mxu0 0.0
        %4501 = vmatprep.subr.mxu0 0.0
        %4502 = vmatpush2.msra.mxu0 0.0
        %4503 = vmatprep.subr.mxu0 0.0
        %4504 = vmatpush2.msra.mxu0 0.0
        %4505 = vmatprep.subr.mxu0 0.0
        %4506 = vmatpush2.msra.mxu0 0.0
        %4507 = vmatprep.subr.mxu0 0.0
        %4508 = vmatpush2.msra.mxu0 0.0
        %4509 = vmatprep.subr.mxu0 0.0
        %4510 = vmatpush2.msra.mxu0 0.0
        %4511 = vmatprep.subr.mxu0 0.0
        %4512 = vmatpush2.msra.mxu0 0.0
        %4513 = vmatprep.subr.mxu0 0.0
        %4514 = vmatpush2.msra.mxu0 0.0
        %4515 = vmatprep.mubr.f32.mxu0 0.0
        %4516 = vmatmul.mubr.f32.gmra.mxu0 %v4378
        %v4517 = vpop.f32.mrf.mxu0
        %v4518 = vadd.f32 %v4375, %v4517
        %v4519 = vpop.f32.mrf.mxu0
        %v4520 = vadd.f32 %v4375, %v4519
        %4521 = vdwg.mxu0
        %4522 = vst [vmem:[%s296] sm:$0xff] %v4447
        %4523 = vst [vmem:[%s296 + $0x8] sm:$0xff] %v4449
        %4524 = vst [vmem:[%s296 + $0x10] sm:$0xff] %v4518
        %4525 = vst [vmem:[%s296 + $0x18] sm:$0xff] %v4520
        %s4526 = sand.u32 %s184, 1
        %s4527 = scalar_lea.sflag [#allocation5], %s4526
        %s4528 = sand.u32 %s184, 1
        %s4529 = smul.addr %s4528, 32
        %s4530 = scalar_lea.vmem [#allocation6], %s4529
        // Predicated region
        $region53: #{tpu_custom_call.1} parent=47 // pred_check
          %p4531 = pneg %p194
        $region54: #{tpu_custom_call.1} parent=47 // pred_check_branch
          %4533 = sbr.rel (%p4531) target = $region56
        $region55: #{tpu_custom_call.1} parent=47 // pred_region
          %s4534 = smul.u32 4, %s24
          %s4536 = ssub.s32 512, 512
          %4537 = vsyncadd %s4527, %s4536
          %s4538 = smul.addr %s4534, 128
          %s4539 = scalar_lea.hbm %s7, %s4538
          %s4541 = sshll.u32 %s4530, 4
          %s4542 = int_to_ptr.vmem [resolvable:$true] %s4541
          %4544 = dma.vmem_to_hbm [thread:$0]  %s4542, 512, %s4539, %s4527
        $region56: #{tpu_custom_call.1} parent=47 // pred_fallthru
          _
      $region48: #{tpu_custom_call.1} parent=5 // pred_fallthru
        _
      %p4545 = scmp.le.s32.totalorder 2, %s19
      // Predicated region
      $region57: #{tpu_custom_call.1} parent=5 // pred_check
        %p4546 = pneg %p4545
      $region58: #{tpu_custom_call.1} parent=5 // pred_check_branch
        %4548 = sbr.rel (%p4546) target = $region60
      $region59: #{tpu_custom_call.1} parent=5 // pred_region
        %s4549 = ssub.s32 %s19, 2
        // Predicated region
        $region61: #{tpu_custom_call.1} parent=59 // pred_check
          %p4550 = pneg %p200
        $region62: #{tpu_custom_call.1} parent=59 // pred_check_branch
          %4552 = sbr.rel (%p4550) target = $region64
        $region63: #{tpu_custom_call.1} parent=59 // pred_region
          %s4553 = sand.u32 %s185, 1
          %s4554 = scalar_lea.sflag [#allocation5], %s4553
          %s4555 = sand.u32 %s185, 1
          %s4556 = smul.addr %s4555, 32
          %s4557 = scalar_lea.vmem [#allocation6], %s4556
          %4558 = dma.done %s4554, 512
        $region64: #{tpu_custom_call.1} parent=59 // pred_fallthru
          _
      $region60: #{tpu_custom_call.1} parent=5 // pred_fallthru
        _
    $region6: #{tpu_custom_call.1} parent=1 // loop_footer
      %s23 = sadd.s32 1, %s19
    $region7: #{tpu_custom_call.1} parent=1 // loop_footer_branch
      %18 = sbr.rel target = $region3
    $region8: #{tpu_custom_call.1} parent=1 // loop_exit
      _
    %4559 = vsyncpa [#allocation4], 1
    %s4560 = scalar_lea.sflag [#allocation4], 1
    %4561 = vsyncpa %s4560, 1
    %4562 = vsyncpa [#allocation5], 1
    %s4563 = scalar_lea.sflag [#allocation5], 1
    %4564 = vsyncpa %s4563, 1

</llo_original>
